<compile_context>
chip_gen: v7x
topology: tpu7x:2x2x1
jax: 0.10.0
libtpu: 0.0.40
codegen_flags: <defaults>
</compile_context>

<pallas_src>
import functools

import numpy as np
import jax
import jax.numpy as jnp
from jax.experimental import pallas as pl
from jax.experimental.pallas import tpu as pltpu


# conv1 and conv10 have no ReLU (matches the torch module's forward()).
_RELU_FLAGS = (False,) + (True,) * 8 + (False,)


def _fused_view_embedder_kernel(x_ref, *refs, num_layers, relu_flags):
    """Fused forward for one image.

    x_ref : (1, H0, W0*C0)  image in lane-dense row layout (H, W*C), f32.
    refs  : w1, b1, ..., wL, bL, o_ref
            w_i : (kh_i, Win_i*Cin_i, OW_i*Cout_i)  row-Toeplitz weights
            b_i : (1, OW_i*Cout_i)                  bias tiled per column
    o_ref : (1, 1, output_dim).
    """
    o_ref = refs[-1]
    wb = refs[:-1]
    x = x_ref[0]                                   # (H, W*C)
    for li in range(num_layers):
        a_ref = wb[2 * li]
        b_ref = wb[2 * li + 1]
        kh = a_ref.shape[0]
        oh = x.shape[0] - kh + 1
        # Bias folded into the first tap: no separate zero-init / bias pass.
        acc = jnp.dot(x[0:oh, :], a_ref[0],
                      preferred_element_type=jnp.float32) + b_ref[...]
        for ky in range(1, kh):
            acc = acc + jnp.dot(x[ky:ky + oh, :], a_ref[ky],
                                preferred_element_type=jnp.float32)
        if relu_flags[li]:
            acc = jnp.maximum(acc, 0.0)
        x = acc                                    # (OH, OW*Cout) = next input
    o_ref[...] = x.reshape(o_ref.shape).astype(o_ref.dtype)


def _toeplitz_weight(w_hwio, w_in):
    """HWIO (kh,kw,cin,cout) -> (kh, w_in*cin, ow*cout) row-Toeplitz matrices.

    A[ky, x*cin + c, ox*cout + co] = W[ky, x-ox, c, co] if 0 <= x-ox < kw else 0
    so that out_row[oy] = sum_ky x_row[oy+ky] @ A[ky] reproduces the valid conv
    directly in the lane-dense (H, W*C) activation layout.  Host-side, one-time.
    """
    w = np.asarray(w_hwio)
    kh, kw, cin, cout = w.shape
    ow = w_in - kw + 1
    a = np.zeros((kh, w_in, cin, ow, cout), dtype=w.dtype)
    for ox in range(ow):
        a[:, ox:ox + kw, :, ox, :] = w
    return jnp.asarray(a.reshape(kh, w_in * cin, ow * cout))


def prepare_params(params, *, w0=20):
    """Turn per-layer HWIO weights/biases into the fused kernel's operand list."""
    prepared = []
    w_in = w0
    for (w_hwio, b) in params:
        kh, kw, cin, cout = w_hwio.shape
        ow = w_in - kw + 1
        a = _toeplitz_weight(w_hwio, w_in)                   # (kh, w_in*cin, ow*cout)
        b_row = jnp.tile(jnp.asarray(b), ow).reshape(1, ow * cout)
        prepared.append((a, b_row))
        w_in = ow
    return prepared


def view_embedder_forward(x_nchw, prepared_params, output_dim):
    """Pallas implementation of ViewEmbedder.forward.

    x_nchw: anything reshapeable to (-1, 3, 20, 20) (PyTorch NCHW semantics).
    prepared_params: output of prepare_params(init_params(...)).
    Returns (batch, output_dim) float32.
    """
    x = x_nchw.reshape(-1, 3, 20, 20)              # NCHW, like torch .view
    x = jnp.transpose(x, (0, 2, 3, 1))             # NHWC
    batch = x.shape[0]
    x_rows = x.reshape(batch, 20, 20 * 3)          # lane-dense (H, W*C) rows

    flat_wb = []
    for (a, b_row) in prepared_params:
        flat_wb.extend((a, b_row))

    def const_spec(arr):
        nd = arr.ndim
        # Full-array block, constant block index -> loaded to VMEM once,
        # never re-DMA'd across grid steps.
        return pl.BlockSpec(arr.shape, lambda n, _nd=nd: (0,) * _nd)

    in_specs = [pl.BlockSpec((1,) + x_rows.shape[1:], lambda n: (n, 0, 0))]
    in_specs += [const_spec(a) for a in flat_wb]

    kernel = functools.partial(
        _fused_view_embedder_kernel,
        num_layers=len(prepared_params),
        relu_flags=_RELU_FLAGS,
    )

    out = pl.pallas_call(
        kernel,
        grid=(batch,),
        out_shape=jax.ShapeDtypeStruct((batch, 1, output_dim), jnp.float32),
        in_specs=in_specs,
        out_specs=pl.BlockSpec((1, 1, output_dim), lambda n: (n, 0, 0)),
        compiler_params=pltpu.CompilerParams(
            dimension_semantics=("parallel",),      # v7x: shard batch over 2 TCs
            vmem_limit_bytes=32 * 1024 * 1024,
        ),
    )(x_rows, *flat_wb)
    return out.reshape(batch, output_dim)


def init_params(output_dim, key):
    """Deterministic synthetic init (PyTorch-default-style uniform fan-in)."""
    # (kh, kw, cin, cout) per layer, matching the torch module.
    layer_defs = [
        (3, 3, 3, 8),
        (3, 3, 8, 8),
        (3, 3, 8, 16),
        (3, 3, 16, 16),
        (3, 3, 16, 16),
        (3, 3, 16, 32),
        (3, 3, 32, 64),
        (3, 3, 64, 64),
        (3, 3, 64, max(64, output_dim)),
        (2, 2, max(64, output_dim), output_dim),
    ]
    params = []
    for (kh, kw, cin, cout) in layer_defs:
        key, kw_key, kb_key = jax.random.split(key, 3)
        bound = 1.0 / jnp.sqrt(jnp.float32(cin * kh * kw))
        w = jax.random.uniform(kw_key, (kh, kw, cin, cout), jnp.float32,
                               minval=-bound, maxval=bound)
        b = jax.random.uniform(kb_key, (cout,), jnp.float32,
                               minval=-bound, maxval=bound)
        params.append((w, b))
    return params


def _reference_forward(x_nchw, params, output_dim):
    """Pure-JAX reference (lax conv) used to sanity-check the Pallas kernel."""
    x = x_nchw.reshape(-1, 3, 20, 20)
    x = jnp.transpose(x, (0, 2, 3, 1))
    for (w, b), relu in zip(params, _RELU_FLAGS):
        x = jax.lax.conv_general_dilated(
            x, w, window_strides=(1, 1), padding="VALID",
            dimension_numbers=("NHWC", "HWIO", "NHWC")) + b
        if relu:
            x = jnp.maximum(x, 0.0)
    return x.reshape(-1, output_dim)


if __name__ == "__main__":
    output_dim = 32
    batch = 2

    key = jax.random.PRNGKey(0)
    key, xkey = jax.random.split(key)
    x = jax.random.normal(xkey, (batch, 3, 20, 20), jnp.float32)   # NCHW input

    params = init_params(output_dim, key)
    prepared = prepare_params(params)                              # one-time host prep

    out = view_embedder_forward(x, prepared, output_dim)
    out = jax.block_until_ready(out)
    assert out.shape == (batch, output_dim), out.shape

    ref = jax.block_until_ready(_reference_forward(x, params, output_dim))
    assert jnp.allclose(out, ref, atol=1e-4, rtol=1e-4), (
        float(jnp.max(jnp.abs(out - ref))))

    print("KERNEL_OK")
</pallas_src>

<mosaic_0001>
module attributes {stable_mosaic.version = 11 : i64} {
  func.func @_fused_view_embedder_kernel(%arg0: i32, %arg1: memref<1x20x60xf32, #tpu.memory_space<vmem>>, %arg2: memref<3x60x144xf32, #tpu.memory_space<vmem>>, %arg3: memref<1x144xf32, #tpu.memory_space<vmem>>, %arg4: memref<3x144x128xf32, #tpu.memory_space<vmem>>, %arg5: memref<1x128xf32, #tpu.memory_space<vmem>>, %arg6: memref<3x128x224xf32, #tpu.memory_space<vmem>>, %arg7: memref<1x224xf32, #tpu.memory_space<vmem>>, %arg8: memref<3x224x192xf32, #tpu.memory_space<vmem>>, %arg9: memref<1x192xf32, #tpu.memory_space<vmem>>, %arg10: memref<3x192x160xf32, #tpu.memory_space<vmem>>, %arg11: memref<1x160xf32, #tpu.memory_space<vmem>>, %arg12: memref<3x160x256xf32, #tpu.memory_space<vmem>>, %arg13: memref<1x256xf32, #tpu.memory_space<vmem>>, %arg14: memref<3x256x384xf32, #tpu.memory_space<vmem>>, %arg15: memref<1x384xf32, #tpu.memory_space<vmem>>, %arg16: memref<3x384x256xf32, #tpu.memory_space<vmem>>, %arg17: memref<1x256xf32, #tpu.memory_space<vmem>>, %arg18: memref<3x256x128xf32, #tpu.memory_space<vmem>>, %arg19: memref<1x128xf32, #tpu.memory_space<vmem>>, %arg20: memref<2x128x32xf32, #tpu.memory_space<vmem>>, %arg21: memref<1x32xf32, #tpu.memory_space<vmem>>, %arg22: memref<1x1x32xf32, #tpu.memory_space<vmem>>) attributes {dimension_semantics = [#tpu.dimension_semantics<parallel>], iteration_bounds = array<i64: 2>, scalar_prefetch = 0 : i64, scratch_operands = 0 : i64, tpu.core_type = #tpu.core_type<tc>, window_params = [{transform_indices = @transform_0, window_bounds = array<i64: 1, 20, 60>}, {pipeline_mode = #tpu.pipeline_mode<synchronous>, transform_indices = @transform_1, window_bounds = array<i64: 3, 60, 144>}, {pipeline_mode = #tpu.pipeline_mode<synchronous>, transform_indices = @transform_2, window_bounds = array<i64: 1, 144>}, {pipeline_mode = #tpu.pipeline_mode<synchronous>, transform_indices = @transform_3, window_bounds = array<i64: 3, 144, 128>}, {pipeline_mode = #tpu.pipeline_mode<synchronous>, transform_indices = @transform_4, window_bounds = array<i64: 1, 128>}, {pipeline_mode = #tpu.pipeline_mode<synchronous>, transform_indices = @transform_5, window_bounds = array<i64: 3, 128, 224>}, {pipeline_mode = #tpu.pipeline_mode<synchronous>, transform_indices = @transform_6, window_bounds = array<i64: 1, 224>}, {pipeline_mode = #tpu.pipeline_mode<synchronous>, transform_indices = @transform_7, window_bounds = array<i64: 3, 224, 192>}, {pipeline_mode = #tpu.pipeline_mode<synchronous>, transform_indices = @transform_8, window_bounds = array<i64: 1, 192>}, {pipeline_mode = #tpu.pipeline_mode<synchronous>, transform_indices = @transform_9, window_bounds = array<i64: 3, 192, 160>}, {pipeline_mode = #tpu.pipeline_mode<synchronous>, transform_indices = @transform_10, window_bounds = array<i64: 1, 160>}, {pipeline_mode = #tpu.pipeline_mode<synchronous>, transform_indices = @transform_11, window_bounds = array<i64: 3, 160, 256>}, {pipeline_mode = #tpu.pipeline_mode<synchronous>, transform_indices = @transform_12, window_bounds = array<i64: 1, 256>}, {pipeline_mode = #tpu.pipeline_mode<synchronous>, transform_indices = @transform_13, window_bounds = array<i64: 3, 256, 384>}, {pipeline_mode = #tpu.pipeline_mode<synchronous>, transform_indices = @transform_14, window_bounds = array<i64: 1, 384>}, {pipeline_mode = #tpu.pipeline_mode<synchronous>, transform_indices = @transform_15, window_bounds = array<i64: 3, 384, 256>}, {pipeline_mode = #tpu.pipeline_mode<synchronous>, transform_indices = @transform_16, window_bounds = array<i64: 1, 256>}, {pipeline_mode = #tpu.pipeline_mode<synchronous>, transform_indices = @transform_17, window_bounds = array<i64: 3, 256, 128>}, {pipeline_mode = #tpu.pipeline_mode<synchronous>, transform_indices = @transform_18, window_bounds = array<i64: 1, 128>}, {pipeline_mode = #tpu.pipeline_mode<synchronous>, transform_indices = @transform_19, window_bounds = array<i64: 2, 128, 32>}, {pipeline_mode = #tpu.pipeline_mode<synchronous>, transform_indices = @transform_20, window_bounds = array<i64: 1, 32>}, {transform_indices = @transform_21, window_bounds = array<i64: 1, 1, 32>}]} {
    %c0 = arith.constant 0 : index
    %c0_0 = arith.constant 0 : index
    %c0_1 = arith.constant 0 : index
    %0 = vector.load %arg1[%c0, %c0_0, %c0_1] : memref<1x20x60xf32, #tpu.memory_space<vmem>>, vector<1x20x60xf32>
    %1 = vector.shape_cast %0 : vector<1x20x60xf32> to vector<20x60xf32>
    %2 = vector.extract_strided_slice %1 {offsets = [0, 0], sizes = [18, 60], strides = [1, 1]} : vector<20x60xf32> to vector<18x60xf32>
    %c0_2 = arith.constant 0 : index
    %c0_3 = arith.constant 0 : index
    %c0_4 = arith.constant 0 : index
    %3 = vector.load %arg2[%c0_2, %c0_3, %c0_4] : memref<3x60x144xf32, #tpu.memory_space<vmem>>, vector<1x60x144xf32>
    %4 = vector.shape_cast %3 : vector<1x60x144xf32> to vector<60x144xf32>
    %cst = arith.constant dense<0.000000e+00> : vector<18x144xf32>
    %5 = tpu.matmul %2, %4, %cst {dimension_numbers = #tpu.dot_dimension_numbers<[1], [0], [0], [1], [0, 0, 1, 1], [], []>} : vector<18x60xf32>, vector<60x144xf32>, vector<18x144xf32> -> vector<18x144xf32>
    %c0_5 = arith.constant 0 : index
    %c0_6 = arith.constant 0 : index
    %6 = vector.load %arg3[%c0_5, %c0_6] : memref<1x144xf32, #tpu.memory_space<vmem>>, vector<1x144xf32>
    %7 = vector.broadcast %6 : vector<1x144xf32> to vector<18x144xf32>
    %8 = arith.addf %5, %7 : vector<18x144xf32>
    %9 = vector.extract_strided_slice %1 {offsets = [1, 0], sizes = [18, 60], strides = [1, 1]} : vector<20x60xf32> to vector<18x60xf32>
    %c1 = arith.constant 1 : index
    %c0_7 = arith.constant 0 : index
    %c0_8 = arith.constant 0 : index
    %10 = vector.load %arg2[%c1, %c0_7, %c0_8] : memref<3x60x144xf32, #tpu.memory_space<vmem>>, vector<1x60x144xf32>
    %11 = vector.shape_cast %10 : vector<1x60x144xf32> to vector<60x144xf32>
    %cst_9 = arith.constant dense<0.000000e+00> : vector<18x144xf32>
    %12 = tpu.matmul %9, %11, %cst_9 {dimension_numbers = #tpu.dot_dimension_numbers<[1], [0], [0], [1], [0, 0, 1, 1], [], []>} : vector<18x60xf32>, vector<60x144xf32>, vector<18x144xf32> -> vector<18x144xf32>
    %13 = arith.addf %8, %12 : vector<18x144xf32>
    %14 = vector.extract_strided_slice %1 {offsets = [2, 0], sizes = [18, 60], strides = [1, 1]} : vector<20x60xf32> to vector<18x60xf32>
    %c2 = arith.constant 2 : index
    %c0_10 = arith.constant 0 : index
    %c0_11 = arith.constant 0 : index
    %15 = vector.load %arg2[%c2, %c0_10, %c0_11] : memref<3x60x144xf32, #tpu.memory_space<vmem>>, vector<1x60x144xf32>
    %16 = vector.shape_cast %15 : vector<1x60x144xf32> to vector<60x144xf32>
    %cst_12 = arith.constant dense<0.000000e+00> : vector<18x144xf32>
    %17 = tpu.matmul %14, %16, %cst_12 {dimension_numbers = #tpu.dot_dimension_numbers<[1], [0], [0], [1], [0, 0, 1, 1], [], []>} : vector<18x60xf32>, vector<60x144xf32>, vector<18x144xf32> -> vector<18x144xf32>
    %18 = arith.addf %13, %17 : vector<18x144xf32>
    %19 = vector.extract_strided_slice %18 {offsets = [0, 0], sizes = [16, 144], strides = [1, 1]} : vector<18x144xf32> to vector<16x144xf32>
    %c0_13 = arith.constant 0 : index
    %c0_14 = arith.constant 0 : index
    %c0_15 = arith.constant 0 : index
    %20 = vector.load %arg4[%c0_13, %c0_14, %c0_15] : memref<3x144x128xf32, #tpu.memory_space<vmem>>, vector<1x144x128xf32>
    %21 = vector.shape_cast %20 : vector<1x144x128xf32> to vector<144x128xf32>
    %cst_16 = arith.constant dense<0.000000e+00> : vector<16x128xf32>
    %22 = tpu.matmul %19, %21, %cst_16 {dimension_numbers = #tpu.dot_dimension_numbers<[1], [0], [0], [1], [0, 0, 1, 1], [], []>} : vector<16x144xf32>, vector<144x128xf32>, vector<16x128xf32> -> vector<16x128xf32>
    %c0_17 = arith.constant 0 : index
    %c0_18 = arith.constant 0 : index
    %23 = vector.load %arg5[%c0_17, %c0_18] : memref<1x128xf32, #tpu.memory_space<vmem>>, vector<1x128xf32>
    %24 = vector.broadcast %23 : vector<1x128xf32> to vector<16x128xf32>
    %25 = arith.addf %22, %24 : vector<16x128xf32>
    %26 = vector.extract_strided_slice %18 {offsets = [1, 0], sizes = [16, 144], strides = [1, 1]} : vector<18x144xf32> to vector<16x144xf32>
    %c1_19 = arith.constant 1 : index
    %c0_20 = arith.constant 0 : index
    %c0_21 = arith.constant 0 : index
    %27 = vector.load %arg4[%c1_19, %c0_20, %c0_21] : memref<3x144x128xf32, #tpu.memory_space<vmem>>, vector<1x144x128xf32>
    %28 = vector.shape_cast %27 : vector<1x144x128xf32> to vector<144x128xf32>
    %cst_22 = arith.constant dense<0.000000e+00> : vector<16x128xf32>
    %29 = tpu.matmul %26, %28, %cst_22 {dimension_numbers = #tpu.dot_dimension_numbers<[1], [0], [0], [1], [0, 0, 1, 1], [], []>} : vector<16x144xf32>, vector<144x128xf32>, vector<16x128xf32> -> vector<16x128xf32>
    %30 = arith.addf %25, %29 : vector<16x128xf32>
    %31 = vector.extract_strided_slice %18 {offsets = [2, 0], sizes = [16, 144], strides = [1, 1]} : vector<18x144xf32> to vector<16x144xf32>
    %c2_23 = arith.constant 2 : index
    %c0_24 = arith.constant 0 : index
    %c0_25 = arith.constant 0 : index
    %32 = vector.load %arg4[%c2_23, %c0_24, %c0_25] : memref<3x144x128xf32, #tpu.memory_space<vmem>>, vector<1x144x128xf32>
    %33 = vector.shape_cast %32 : vector<1x144x128xf32> to vector<144x128xf32>
    %cst_26 = arith.constant dense<0.000000e+00> : vector<16x128xf32>
    %34 = tpu.matmul %31, %33, %cst_26 {dimension_numbers = #tpu.dot_dimension_numbers<[1], [0], [0], [1], [0, 0, 1, 1], [], []>} : vector<16x144xf32>, vector<144x128xf32>, vector<16x128xf32> -> vector<16x128xf32>
    %35 = arith.addf %30, %34 : vector<16x128xf32>
    %cst_27 = arith.constant 0.000000e+00 : f32
    %36 = vector.broadcast %cst_27 : f32 to vector<16x128xf32>
    %37 = arith.maximumf %35, %36 : vector<16x128xf32>
    %38 = vector.extract_strided_slice %37 {offsets = [0, 0], sizes = [14, 128], strides = [1, 1]} : vector<16x128xf32> to vector<14x128xf32>
    %c0_28 = arith.constant 0 : index
    %c0_29 = arith.constant 0 : index
    %c0_30 = arith.constant 0 : index
    %39 = vector.load %arg6[%c0_28, %c0_29, %c0_30] : memref<3x128x224xf32, #tpu.memory_space<vmem>>, vector<1x128x224xf32>
    %40 = vector.shape_cast %39 : vector<1x128x224xf32> to vector<128x224xf32>
    %cst_31 = arith.constant dense<0.000000e+00> : vector<14x224xf32>
    %41 = tpu.matmul %38, %40, %cst_31 {dimension_numbers = #tpu.dot_dimension_numbers<[1], [0], [0], [1], [0, 0, 1, 1], [], []>} : vector<14x128xf32>, vector<128x224xf32>, vector<14x224xf32> -> vector<14x224xf32>
    %c0_32 = arith.constant 0 : index
    %c0_33 = arith.constant 0 : index
    %42 = vector.load %arg7[%c0_32, %c0_33] : memref<1x224xf32, #tpu.memory_space<vmem>>, vector<1x224xf32>
    %43 = vector.broadcast %42 : vector<1x224xf32> to vector<14x224xf32>
    %44 = arith.addf %41, %43 : vector<14x224xf32>
    %45 = vector.extract_strided_slice %37 {offsets = [1, 0], sizes = [14, 128], strides = [1, 1]} : vector<16x128xf32> to vector<14x128xf32>
    %c1_34 = arith.constant 1 : index
    %c0_35 = arith.constant 0 : index
    %c0_36 = arith.constant 0 : index
    %46 = vector.load %arg6[%c1_34, %c0_35, %c0_36] : memref<3x128x224xf32, #tpu.memory_space<vmem>>, vector<1x128x224xf32>
    %47 = vector.shape_cast %46 : vector<1x128x224xf32> to vector<128x224xf32>
    %cst_37 = arith.constant dense<0.000000e+00> : vector<14x224xf32>
    %48 = tpu.matmul %45, %47, %cst_37 {dimension_numbers = #tpu.dot_dimension_numbers<[1], [0], [0], [1], [0, 0, 1, 1], [], []>} : vector<14x128xf32>, vector<128x224xf32>, vector<14x224xf32> -> vector<14x224xf32>
    %49 = arith.addf %44, %48 : vector<14x224xf32>
    %50 = vector.extract_strided_slice %37 {offsets = [2, 0], sizes = [14, 128], strides = [1, 1]} : vector<16x128xf32> to vector<14x128xf32>
    %c2_38 = arith.constant 2 : index
    %c0_39 = arith.constant 0 : index
    %c0_40 = arith.constant 0 : index
    %51 = vector.load %arg6[%c2_38, %c0_39, %c0_40] : memref<3x128x224xf32, #tpu.memory_space<vmem>>, vector<1x128x224xf32>
    %52 = vector.shape_cast %51 : vector<1x128x224xf32> to vector<128x224xf32>
    %cst_41 = arith.constant dense<0.000000e+00> : vector<14x224xf32>
    %53 = tpu.matmul %50, %52, %cst_41 {dimension_numbers = #tpu.dot_dimension_numbers<[1], [0], [0], [1], [0, 0, 1, 1], [], []>} : vector<14x128xf32>, vector<128x224xf32>, vector<14x224xf32> -> vector<14x224xf32>
    %54 = arith.addf %49, %53 : vector<14x224xf32>
    %cst_42 = arith.constant 0.000000e+00 : f32
    %55 = vector.broadcast %cst_42 : f32 to vector<14x224xf32>
    %56 = arith.maximumf %54, %55 : vector<14x224xf32>
    %57 = vector.extract_strided_slice %56 {offsets = [0, 0], sizes = [12, 224], strides = [1, 1]} : vector<14x224xf32> to vector<12x224xf32>
    %c0_43 = arith.constant 0 : index
    %c0_44 = arith.constant 0 : index
    %c0_45 = arith.constant 0 : index
    %58 = vector.load %arg8[%c0_43, %c0_44, %c0_45] : memref<3x224x192xf32, #tpu.memory_space<vmem>>, vector<1x224x192xf32>
    %59 = vector.shape_cast %58 : vector<1x224x192xf32> to vector<224x192xf32>
    %cst_46 = arith.constant dense<0.000000e+00> : vector<12x192xf32>
    %60 = tpu.matmul %57, %59, %cst_46 {dimension_numbers = #tpu.dot_dimension_numbers<[1], [0], [0], [1], [0, 0, 1, 1], [], []>} : vector<12x224xf32>, vector<224x192xf32>, vector<12x192xf32> -> vector<12x192xf32>
    %c0_47 = arith.constant 0 : index
    %c0_48 = arith.constant 0 : index
    %61 = vector.load %arg9[%c0_47, %c0_48] : memref<1x192xf32, #tpu.memory_space<vmem>>, vector<1x192xf32>
    %62 = vector.broadcast %61 : vector<1x192xf32> to vector<12x192xf32>
    %63 = arith.addf %60, %62 : vector<12x192xf32>
    %64 = vector.extract_strided_slice %56 {offsets = [1, 0], sizes = [12, 224], strides = [1, 1]} : vector<14x224xf32> to vector<12x224xf32>
    %c1_49 = arith.constant 1 : index
    %c0_50 = arith.constant 0 : index
    %c0_51 = arith.constant 0 : index
    %65 = vector.load %arg8[%c1_49, %c0_50, %c0_51] : memref<3x224x192xf32, #tpu.memory_space<vmem>>, vector<1x224x192xf32>
    %66 = vector.shape_cast %65 : vector<1x224x192xf32> to vector<224x192xf32>
    %cst_52 = arith.constant dense<0.000000e+00> : vector<12x192xf32>
    %67 = tpu.matmul %64, %66, %cst_52 {dimension_numbers = #tpu.dot_dimension_numbers<[1], [0], [0], [1], [0, 0, 1, 1], [], []>} : vector<12x224xf32>, vector<224x192xf32>, vector<12x192xf32> -> vector<12x192xf32>
    %68 = arith.addf %63, %67 : vector<12x192xf32>
    %69 = vector.extract_strided_slice %56 {offsets = [2, 0], sizes = [12, 224], strides = [1, 1]} : vector<14x224xf32> to vector<12x224xf32>
    %c2_53 = arith.constant 2 : index
    %c0_54 = arith.constant 0 : index
    %c0_55 = arith.constant 0 : index
    %70 = vector.load %arg8[%c2_53, %c0_54, %c0_55] : memref<3x224x192xf32, #tpu.memory_space<vmem>>, vector<1x224x192xf32>
    %71 = vector.shape_cast %70 : vector<1x224x192xf32> to vector<224x192xf32>
    %cst_56 = arith.constant dense<0.000000e+00> : vector<12x192xf32>
    %72 = tpu.matmul %69, %71, %cst_56 {dimension_numbers = #tpu.dot_dimension_numbers<[1], [0], [0], [1], [0, 0, 1, 1], [], []>} : vector<12x224xf32>, vector<224x192xf32>, vector<12x192xf32> -> vector<12x192xf32>
    %73 = arith.addf %68, %72 : vector<12x192xf32>
    %cst_57 = arith.constant 0.000000e+00 : f32
    %74 = vector.broadcast %cst_57 : f32 to vector<12x192xf32>
    %75 = arith.maximumf %73, %74 : vector<12x192xf32>
    %76 = vector.extract_strided_slice %75 {offsets = [0, 0], sizes = [10, 192], strides = [1, 1]} : vector<12x192xf32> to vector<10x192xf32>
    %c0_58 = arith.constant 0 : index
    %c0_59 = arith.constant 0 : index
    %c0_60 = arith.constant 0 : index
    %77 = vector.load %arg10[%c0_58, %c0_59, %c0_60] : memref<3x192x160xf32, #tpu.memory_space<vmem>>, vector<1x192x160xf32>
    %78 = vector.shape_cast %77 : vector<1x192x160xf32> to vector<192x160xf32>
    %cst_61 = arith.constant dense<0.000000e+00> : vector<10x160xf32>
    %79 = tpu.matmul %76, %78, %cst_61 {dimension_numbers = #tpu.dot_dimension_numbers<[1], [0], [0], [1], [0, 0, 1, 1], [], []>} : vector<10x192xf32>, vector<192x160xf32>, vector<10x160xf32> -> vector<10x160xf32>
    %c0_62 = arith.constant 0 : index
    %c0_63 = arith.constant 0 : index
    %80 = vector.load %arg11[%c0_62, %c0_63] : memref<1x160xf32, #tpu.memory_space<vmem>>, vector<1x160xf32>
    %81 = vector.broadcast %80 : vector<1x160xf32> to vector<10x160xf32>
    %82 = arith.addf %79, %81 : vector<10x160xf32>
    %83 = vector.extract_strided_slice %75 {offsets = [1, 0], sizes = [10, 192], strides = [1, 1]} : vector<12x192xf32> to vector<10x192xf32>
    %c1_64 = arith.constant 1 : index
    %c0_65 = arith.constant 0 : index
    %c0_66 = arith.constant 0 : index
    %84 = vector.load %arg10[%c1_64, %c0_65, %c0_66] : memref<3x192x160xf32, #tpu.memory_space<vmem>>, vector<1x192x160xf32>
    %85 = vector.shape_cast %84 : vector<1x192x160xf32> to vector<192x160xf32>
    %cst_67 = arith.constant dense<0.000000e+00> : vector<10x160xf32>
    %86 = tpu.matmul %83, %85, %cst_67 {dimension_numbers = #tpu.dot_dimension_numbers<[1], [0], [0], [1], [0, 0, 1, 1], [], []>} : vector<10x192xf32>, vector<192x160xf32>, vector<10x160xf32> -> vector<10x160xf32>
    %87 = arith.addf %82, %86 : vector<10x160xf32>
    %88 = vector.extract_strided_slice %75 {offsets = [2, 0], sizes = [10, 192], strides = [1, 1]} : vector<12x192xf32> to vector<10x192xf32>
    %c2_68 = arith.constant 2 : index
    %c0_69 = arith.constant 0 : index
    %c0_70 = arith.constant 0 : index
    %89 = vector.load %arg10[%c2_68, %c0_69, %c0_70] : memref<3x192x160xf32, #tpu.memory_space<vmem>>, vector<1x192x160xf32>
    %90 = vector.shape_cast %89 : vector<1x192x160xf32> to vector<192x160xf32>
    %cst_71 = arith.constant dense<0.000000e+00> : vector<10x160xf32>
    %91 = tpu.matmul %88, %90, %cst_71 {dimension_numbers = #tpu.dot_dimension_numbers<[1], [0], [0], [1], [0, 0, 1, 1], [], []>} : vector<10x192xf32>, vector<192x160xf32>, vector<10x160xf32> -> vector<10x160xf32>
    %92 = arith.addf %87, %91 : vector<10x160xf32>
    %cst_72 = arith.constant 0.000000e+00 : f32
    %93 = vector.broadcast %cst_72 : f32 to vector<10x160xf32>
    %94 = arith.maximumf %92, %93 : vector<10x160xf32>
    %95 = vector.extract_strided_slice %94 {offsets = [0, 0], sizes = [8, 160], strides = [1, 1]} : vector<10x160xf32> to vector<8x160xf32>
    %c0_73 = arith.constant 0 : index
    %c0_74 = arith.constant 0 : index
    %c0_75 = arith.constant 0 : index
    %96 = vector.load %arg12[%c0_73, %c0_74, %c0_75] : memref<3x160x256xf32, #tpu.memory_space<vmem>>, vector<1x160x256xf32>
    %97 = vector.shape_cast %96 : vector<1x160x256xf32> to vector<160x256xf32>
    %cst_76 = arith.constant dense<0.000000e+00> : vector<8x256xf32>
    %98 = tpu.matmul %95, %97, %cst_76 {dimension_numbers = #tpu.dot_dimension_numbers<[1], [0], [0], [1], [0, 0, 1, 1], [], []>} : vector<8x160xf32>, vector<160x256xf32>, vector<8x256xf32> -> vector<8x256xf32>
    %c0_77 = arith.constant 0 : index
    %c0_78 = arith.constant 0 : index
    %99 = vector.load %arg13[%c0_77, %c0_78] : memref<1x256xf32, #tpu.memory_space<vmem>>, vector<1x256xf32>
    %100 = vector.broadcast %99 : vector<1x256xf32> to vector<8x256xf32>
    %101 = arith.addf %98, %100 : vector<8x256xf32>
    %102 = vector.extract_strided_slice %94 {offsets = [1, 0], sizes = [8, 160], strides = [1, 1]} : vector<10x160xf32> to vector<8x160xf32>
    %c1_79 = arith.constant 1 : index
    %c0_80 = arith.constant 0 : index
    %c0_81 = arith.constant 0 : index
    %103 = vector.load %arg12[%c1_79, %c0_80, %c0_81] : memref<3x160x256xf32, #tpu.memory_space<vmem>>, vector<1x160x256xf32>
    %104 = vector.shape_cast %103 : vector<1x160x256xf32> to vector<160x256xf32>
    %cst_82 = arith.constant dense<0.000000e+00> : vector<8x256xf32>
    %105 = tpu.matmul %102, %104, %cst_82 {dimension_numbers = #tpu.dot_dimension_numbers<[1], [0], [0], [1], [0, 0, 1, 1], [], []>} : vector<8x160xf32>, vector<160x256xf32>, vector<8x256xf32> -> vector<8x256xf32>
    %106 = arith.addf %101, %105 : vector<8x256xf32>
    %107 = vector.extract_strided_slice %94 {offsets = [2, 0], sizes = [8, 160], strides = [1, 1]} : vector<10x160xf32> to vector<8x160xf32>
    %c2_83 = arith.constant 2 : index
    %c0_84 = arith.constant 0 : index
    %c0_85 = arith.constant 0 : index
    %108 = vector.load %arg12[%c2_83, %c0_84, %c0_85] : memref<3x160x256xf32, #tpu.memory_space<vmem>>, vector<1x160x256xf32>
    %109 = vector.shape_cast %108 : vector<1x160x256xf32> to vector<160x256xf32>
    %cst_86 = arith.constant dense<0.000000e+00> : vector<8x256xf32>
    %110 = tpu.matmul %107, %109, %cst_86 {dimension_numbers = #tpu.dot_dimension_numbers<[1], [0], [0], [1], [0, 0, 1, 1], [], []>} : vector<8x160xf32>, vector<160x256xf32>, vector<8x256xf32> -> vector<8x256xf32>
    %111 = arith.addf %106, %110 : vector<8x256xf32>
    %cst_87 = arith.constant 0.000000e+00 : f32
    %112 = vector.broadcast %cst_87 : f32 to vector<8x256xf32>
    %113 = arith.maximumf %111, %112 : vector<8x256xf32>
    %114 = vector.extract_strided_slice %113 {offsets = [0, 0], sizes = [6, 256], strides = [1, 1]} : vector<8x256xf32> to vector<6x256xf32>
    %c0_88 = arith.constant 0 : index
    %c0_89 = arith.constant 0 : index
    %c0_90 = arith.constant 0 : index
    %115 = vector.load %arg14[%c0_88, %c0_89, %c0_90] : memref<3x256x384xf32, #tpu.memory_space<vmem>>, vector<1x256x384xf32>
    %116 = vector.shape_cast %115 : vector<1x256x384xf32> to vector<256x384xf32>
    %cst_91 = arith.constant dense<0.000000e+00> : vector<6x384xf32>
    %117 = tpu.matmul %114, %116, %cst_91 {dimension_numbers = #tpu.dot_dimension_numbers<[1], [0], [0], [1], [0, 0, 1, 1], [], []>} : vector<6x256xf32>, vector<256x384xf32>, vector<6x384xf32> -> vector<6x384xf32>
    %c0_92 = arith.constant 0 : index
    %c0_93 = arith.constant 0 : index
    %118 = vector.load %arg15[%c0_92, %c0_93] : memref<1x384xf32, #tpu.memory_space<vmem>>, vector<1x384xf32>
    %119 = vector.broadcast %118 : vector<1x384xf32> to vector<6x384xf32>
    %120 = arith.addf %117, %119 : vector<6x384xf32>
    %121 = vector.extract_strided_slice %113 {offsets = [1, 0], sizes = [6, 256], strides = [1, 1]} : vector<8x256xf32> to vector<6x256xf32>
    %c1_94 = arith.constant 1 : index
    %c0_95 = arith.constant 0 : index
    %c0_96 = arith.constant 0 : index
    %122 = vector.load %arg14[%c1_94, %c0_95, %c0_96] : memref<3x256x384xf32, #tpu.memory_space<vmem>>, vector<1x256x384xf32>
    %123 = vector.shape_cast %122 : vector<1x256x384xf32> to vector<256x384xf32>
    %cst_97 = arith.constant dense<0.000000e+00> : vector<6x384xf32>
    %124 = tpu.matmul %121, %123, %cst_97 {dimension_numbers = #tpu.dot_dimension_numbers<[1], [0], [0], [1], [0, 0, 1, 1], [], []>} : vector<6x256xf32>, vector<256x384xf32>, vector<6x384xf32> -> vector<6x384xf32>
    %125 = arith.addf %120, %124 : vector<6x384xf32>
    %126 = vector.extract_strided_slice %113 {offsets = [2, 0], sizes = [6, 256], strides = [1, 1]} : vector<8x256xf32> to vector<6x256xf32>
    %c2_98 = arith.constant 2 : index
    %c0_99 = arith.constant 0 : index
    %c0_100 = arith.constant 0 : index
    %127 = vector.load %arg14[%c2_98, %c0_99, %c0_100] : memref<3x256x384xf32, #tpu.memory_space<vmem>>, vector<1x256x384xf32>
    %128 = vector.shape_cast %127 : vector<1x256x384xf32> to vector<256x384xf32>
    %cst_101 = arith.constant dense<0.000000e+00> : vector<6x384xf32>
    %129 = tpu.matmul %126, %128, %cst_101 {dimension_numbers = #tpu.dot_dimension_numbers<[1], [0], [0], [1], [0, 0, 1, 1], [], []>} : vector<6x256xf32>, vector<256x384xf32>, vector<6x384xf32> -> vector<6x384xf32>
    %130 = arith.addf %125, %129 : vector<6x384xf32>
    %cst_102 = arith.constant 0.000000e+00 : f32
    %131 = vector.broadcast %cst_102 : f32 to vector<6x384xf32>
    %132 = arith.maximumf %130, %131 : vector<6x384xf32>
    %133 = vector.extract_strided_slice %132 {offsets = [0, 0], sizes = [4, 384], strides = [1, 1]} : vector<6x384xf32> to vector<4x384xf32>
    %c0_103 = arith.constant 0 : index
    %c0_104 = arith.constant 0 : index
    %c0_105 = arith.constant 0 : index
    %134 = vector.load %arg16[%c0_103, %c0_104, %c0_105] : memref<3x384x256xf32, #tpu.memory_space<vmem>>, vector<1x384x256xf32>
    %135 = vector.shape_cast %134 : vector<1x384x256xf32> to vector<384x256xf32>
    %cst_106 = arith.constant dense<0.000000e+00> : vector<4x256xf32>
    %136 = tpu.matmul %133, %135, %cst_106 {dimension_numbers = #tpu.dot_dimension_numbers<[1], [0], [0], [1], [0, 0, 1, 1], [], []>} : vector<4x384xf32>, vector<384x256xf32>, vector<4x256xf32> -> vector<4x256xf32>
    %c0_107 = arith.constant 0 : index
    %c0_108 = arith.constant 0 : index
    %137 = vector.load %arg17[%c0_107, %c0_108] : memref<1x256xf32, #tpu.memory_space<vmem>>, vector<1x256xf32>
    %138 = vector.broadcast %137 : vector<1x256xf32> to vector<4x256xf32>
    %139 = arith.addf %136, %138 : vector<4x256xf32>
    %140 = vector.extract_strided_slice %132 {offsets = [1, 0], sizes = [4, 384], strides = [1, 1]} : vector<6x384xf32> to vector<4x384xf32>
    %c1_109 = arith.constant 1 : index
    %c0_110 = arith.constant 0 : index
    %c0_111 = arith.constant 0 : index
    %141 = vector.load %arg16[%c1_109, %c0_110, %c0_111] : memref<3x384x256xf32, #tpu.memory_space<vmem>>, vector<1x384x256xf32>
    %142 = vector.shape_cast %141 : vector<1x384x256xf32> to vector<384x256xf32>
    %cst_112 = arith.constant dense<0.000000e+00> : vector<4x256xf32>
    %143 = tpu.matmul %140, %142, %cst_112 {dimension_numbers = #tpu.dot_dimension_numbers<[1], [0], [0], [1], [0, 0, 1, 1], [], []>} : vector<4x384xf32>, vector<384x256xf32>, vector<4x256xf32> -> vector<4x256xf32>
    %144 = arith.addf %139, %143 : vector<4x256xf32>
    %145 = vector.extract_strided_slice %132 {offsets = [2, 0], sizes = [4, 384], strides = [1, 1]} : vector<6x384xf32> to vector<4x384xf32>
    %c2_113 = arith.constant 2 : index
    %c0_114 = arith.constant 0 : index
    %c0_115 = arith.constant 0 : index
    %146 = vector.load %arg16[%c2_113, %c0_114, %c0_115] : memref<3x384x256xf32, #tpu.memory_space<vmem>>, vector<1x384x256xf32>
    %147 = vector.shape_cast %146 : vector<1x384x256xf32> to vector<384x256xf32>
    %cst_116 = arith.constant dense<0.000000e+00> : vector<4x256xf32>
    %148 = tpu.matmul %145, %147, %cst_116 {dimension_numbers = #tpu.dot_dimension_numbers<[1], [0], [0], [1], [0, 0, 1, 1], [], []>} : vector<4x384xf32>, vector<384x256xf32>, vector<4x256xf32> -> vector<4x256xf32>
    %149 = arith.addf %144, %148 : vector<4x256xf32>
    %cst_117 = arith.constant 0.000000e+00 : f32
    %150 = vector.broadcast %cst_117 : f32 to vector<4x256xf32>
    %151 = arith.maximumf %149, %150 : vector<4x256xf32>
    %152 = vector.extract_strided_slice %151 {offsets = [0, 0], sizes = [2, 256], strides = [1, 1]} : vector<4x256xf32> to vector<2x256xf32>
    %c0_118 = arith.constant 0 : index
    %c0_119 = arith.constant 0 : index
    %c0_120 = arith.constant 0 : index
    %153 = vector.load %arg18[%c0_118, %c0_119, %c0_120] : memref<3x256x128xf32, #tpu.memory_space<vmem>>, vector<1x256x128xf32>
    %154 = vector.shape_cast %153 : vector<1x256x128xf32> to vector<256x128xf32>
    %cst_121 = arith.constant dense<0.000000e+00> : vector<2x128xf32>
    %155 = tpu.matmul %152, %154, %cst_121 {dimension_numbers = #tpu.dot_dimension_numbers<[1], [0], [0], [1], [0, 0, 1, 1], [], []>} : vector<2x256xf32>, vector<256x128xf32>, vector<2x128xf32> -> vector<2x128xf32>
    %c0_122 = arith.constant 0 : index
    %c0_123 = arith.constant 0 : index
    %156 = vector.load %arg19[%c0_122, %c0_123] : memref<1x128xf32, #tpu.memory_space<vmem>>, vector<1x128xf32>
    %157 = vector.broadcast %156 : vector<1x128xf32> to vector<2x128xf32>
    %158 = arith.addf %155, %157 : vector<2x128xf32>
    %159 = vector.extract_strided_slice %151 {offsets = [1, 0], sizes = [2, 256], strides = [1, 1]} : vector<4x256xf32> to vector<2x256xf32>
    %c1_124 = arith.constant 1 : index
    %c0_125 = arith.constant 0 : index
    %c0_126 = arith.constant 0 : index
    %160 = vector.load %arg18[%c1_124, %c0_125, %c0_126] : memref<3x256x128xf32, #tpu.memory_space<vmem>>, vector<1x256x128xf32>
    %161 = vector.shape_cast %160 : vector<1x256x128xf32> to vector<256x128xf32>
    %cst_127 = arith.constant dense<0.000000e+00> : vector<2x128xf32>
    %162 = tpu.matmul %159, %161, %cst_127 {dimension_numbers = #tpu.dot_dimension_numbers<[1], [0], [0], [1], [0, 0, 1, 1], [], []>} : vector<2x256xf32>, vector<256x128xf32>, vector<2x128xf32> -> vector<2x128xf32>
    %163 = arith.addf %158, %162 : vector<2x128xf32>
    %164 = vector.extract_strided_slice %151 {offsets = [2, 0], sizes = [2, 256], strides = [1, 1]} : vector<4x256xf32> to vector<2x256xf32>
    %c2_128 = arith.constant 2 : index
    %c0_129 = arith.constant 0 : index
    %c0_130 = arith.constant 0 : index
    %165 = vector.load %arg18[%c2_128, %c0_129, %c0_130] : memref<3x256x128xf32, #tpu.memory_space<vmem>>, vector<1x256x128xf32>
    %166 = vector.shape_cast %165 : vector<1x256x128xf32> to vector<256x128xf32>
    %cst_131 = arith.constant dense<0.000000e+00> : vector<2x128xf32>
    %167 = tpu.matmul %164, %166, %cst_131 {dimension_numbers = #tpu.dot_dimension_numbers<[1], [0], [0], [1], [0, 0, 1, 1], [], []>} : vector<2x256xf32>, vector<256x128xf32>, vector<2x128xf32> -> vector<2x128xf32>
    %168 = arith.addf %163, %167 : vector<2x128xf32>
    %cst_132 = arith.constant 0.000000e+00 : f32
    %169 = vector.broadcast %cst_132 : f32 to vector<2x128xf32>
    %170 = arith.maximumf %168, %169 : vector<2x128xf32>
    %171 = vector.extract_strided_slice %170 {offsets = [0, 0], sizes = [1, 128], strides = [1, 1]} : vector<2x128xf32> to vector<1x128xf32>
    %c0_133 = arith.constant 0 : index
    %c0_134 = arith.constant 0 : index
    %c0_135 = arith.constant 0 : index
    %172 = vector.load %arg20[%c0_133, %c0_134, %c0_135] : memref<2x128x32xf32, #tpu.memory_space<vmem>>, vector<1x128x32xf32>
    %173 = vector.shape_cast %172 : vector<1x128x32xf32> to vector<128x32xf32>
    %cst_136 = arith.constant dense<0.000000e+00> : vector<1x32xf32>
    %174 = tpu.matmul %171, %173, %cst_136 {dimension_numbers = #tpu.dot_dimension_numbers<[1], [0], [0], [1], [0, 0, 1, 1], [], []>} : vector<1x128xf32>, vector<128x32xf32>, vector<1x32xf32> -> vector<1x32xf32>
    %c0_137 = arith.constant 0 : index
    %c0_138 = arith.constant 0 : index
    %175 = vector.load %arg21[%c0_137, %c0_138] : memref<1x32xf32, #tpu.memory_space<vmem>>, vector<1x32xf32>
    %176 = arith.addf %174, %175 : vector<1x32xf32>
    %177 = vector.extract_strided_slice %170 {offsets = [1, 0], sizes = [1, 128], strides = [1, 1]} : vector<2x128xf32> to vector<1x128xf32>
    %c1_139 = arith.constant 1 : index
    %c0_140 = arith.constant 0 : index
    %c0_141 = arith.constant 0 : index
    %178 = vector.load %arg20[%c1_139, %c0_140, %c0_141] : memref<2x128x32xf32, #tpu.memory_space<vmem>>, vector<1x128x32xf32>
    %179 = vector.shape_cast %178 : vector<1x128x32xf32> to vector<128x32xf32>
    %cst_142 = arith.constant dense<0.000000e+00> : vector<1x32xf32>
    %180 = tpu.matmul %177, %179, %cst_142 {dimension_numbers = #tpu.dot_dimension_numbers<[1], [0], [0], [1], [0, 0, 1, 1], [], []>} : vector<1x128xf32>, vector<128x32xf32>, vector<1x32xf32> -> vector<1x32xf32>
    %181 = arith.addf %176, %180 : vector<1x32xf32>
    %182 = vector.shape_cast %181 : vector<1x32xf32> to vector<1x1x32xf32>
    %c0_143 = arith.constant 0 : index
    %c0_144 = arith.constant 0 : index
    %c0_145 = arith.constant 0 : index
    %183 = vector.load %arg22[%c0_143, %c0_144, %c0_145] : memref<1x1x32xf32, #tpu.memory_space<vmem>>, vector<1x1x32xf32>
    tpu.vector_store %arg22[%c0_143, %c0_144, %c0_145], %182 {strides = array<i32>} : memref<1x1x32xf32, #tpu.memory_space<vmem>>, vector<1x1x32xf32>,
    return
  }
  func.func @transform_0(%arg0: i32) -> (i32, i32, i32) {
    %c0_i32 = arith.constant 0 : i32
    %c0_i32_0 = arith.constant 0 : i32
    %c0_i32_1 = arith.constant 0 : i32
    return %arg0, %c0_i32, %c0_i32_0 : i32, i32, i32
  }
  func.func @transform_1(%arg0: i32) -> (i32, i32, i32) {
    %c0_i32 = arith.constant 0 : i32
    %c0_i32_0 = arith.constant 0 : i32
    %c0_i32_1 = arith.constant 0 : i32
    %c0_i32_2 = arith.constant 0 : i32
    return %c0_i32, %c0_i32_0, %c0_i32_1 : i32, i32, i32
  }
  func.func @transform_2(%arg0: i32) -> (i32, i32) {
    %c0_i32 = arith.constant 0 : i32
    %c0_i32_0 = arith.constant 0 : i32
    %c0_i32_1 = arith.constant 0 : i32
    return %c0_i32, %c0_i32_0 : i32, i32
  }
  func.func @transform_3(%arg0: i32) -> (i32, i32, i32) {
    %c0_i32 = arith.constant 0 : i32
    %c0_i32_0 = arith.constant 0 : i32
    %c0_i32_1 = arith.constant 0 : i32
    %c0_i32_2 = arith.constant 0 : i32
    return %c0_i32, %c0_i32_0, %c0_i32_1 : i32, i32, i32
  }
  func.func @transform_4(%arg0: i32) -> (i32, i32) {
    %c0_i32 = arith.constant 0 : i32
    %c0_i32_0 = arith.constant 0 : i32
    %c0_i32_1 = arith.constant 0 : i32
    return %c0_i32, %c0_i32_0 : i32, i32
  }
  func.func @transform_5(%arg0: i32) -> (i32, i32, i32) {
    %c0_i32 = arith.constant 0 : i32
    %c0_i32_0 = arith.constant 0 : i32
    %c0_i32_1 = arith.constant 0 : i32
    %c0_i32_2 = arith.constant 0 : i32
    return %c0_i32, %c0_i32_0, %c0_i32_1 : i32, i32, i32
  }
  func.func @transform_6(%arg0: i32) -> (i32, i32) {
    %c0_i32 = arith.constant 0 : i32
    %c0_i32_0 = arith.constant 0 : i32
    %c0_i32_1 = arith.constant 0 : i32
    return %c0_i32, %c0_i32_0 : i32, i32
  }
  func.func @transform_7(%arg0: i32) -> (i32, i32, i32) {
    %c0_i32 = arith.constant 0 : i32
    %c0_i32_0 = arith.constant 0 : i32
    %c0_i32_1 = arith.constant 0 : i32
    %c0_i32_2 = arith.constant 0 : i32
    return %c0_i32, %c0_i32_0, %c0_i32_1 : i32, i32, i32
  }
  func.func @transform_8(%arg0: i32) -> (i32, i32) {
    %c0_i32 = arith.constant 0 : i32
    %c0_i32_0 = arith.constant 0 : i32
    %c0_i32_1 = arith.constant 0 : i32
    return %c0_i32, %c0_i32_0 : i32, i32
  }
  func.func @transform_9(%arg0: i32) -> (i32, i32, i32) {
    %c0_i32 = arith.constant 0 : i32
    %c0_i32_0 = arith.constant 0 : i32
    %c0_i32_1 = arith.constant 0 : i32
    %c0_i32_2 = arith.constant 0 : i32
    return %c0_i32, %c0_i32_0, %c0_i32_1 : i32, i32, i32
  }
  func.func @transform_10(%arg0: i32) -> (i32, i32) {
    %c0_i32 = arith.constant 0 : i32
    %c0_i32_0 = arith.constant 0 : i32
    %c0_i32_1 = arith.constant 0 : i32
    return %c0_i32, %c0_i32_0 : i32, i32
  }
  func.func @transform_11(%arg0: i32) -> (i32, i32, i32) {
    %c0_i32 = arith.constant 0 : i32
    %c0_i32_0 = arith.constant 0 : i32
    %c0_i32_1 = arith.constant 0 : i32
    %c0_i32_2 = arith.constant 0 : i32
    return %c0_i32, %c0_i32_0, %c0_i32_1 : i32, i32, i32
  }
  func.func @transform_12(%arg0: i32) -> (i32, i32) {
    %c0_i32 = arith.constant 0 : i32
    %c0_i32_0 = arith.constant 0 : i32
    %c0_i32_1 = arith.constant 0 : i32
    return %c0_i32, %c0_i32_0 : i32, i32
  }
  func.func @transform_13(%arg0: i32) -> (i32, i32, i32) {
    %c0_i32 = arith.constant 0 : i32
    %c0_i32_0 = arith.constant 0 : i32
    %c0_i32_1 = arith.constant 0 : i32
    %c0_i32_2 = arith.constant 0 : i32
    return %c0_i32, %c0_i32_0, %c0_i32_1 : i32, i32, i32
  }
  func.func @transform_14(%arg0: i32) -> (i32, i32) {
    %c0_i32 = arith.constant 0 : i32
    %c0_i32_0 = arith.constant 0 : i32
    %c0_i32_1 = arith.constant 0 : i32
    return %c0_i32, %c0_i32_0 : i32, i32
  }
  func.func @transform_15(%arg0: i32) -> (i32, i32, i32) {
    %c0_i32 = arith.constant 0 : i32
    %c0_i32_0 = arith.constant 0 : i32
    %c0_i32_1 = arith.constant 0 : i32
    %c0_i32_2 = arith.constant 0 : i32
    return %c0_i32, %c0_i32_0, %c0_i32_1 : i32, i32, i32
  }
  func.func @transform_16(%arg0: i32) -> (i32, i32) {
    %c0_i32 = arith.constant 0 : i32
    %c0_i32_0 = arith.constant 0 : i32
    %c0_i32_1 = arith.constant 0 : i32
    return %c0_i32, %c0_i32_0 : i32, i32
  }
  func.func @transform_17(%arg0: i32) -> (i32, i32, i32) {
    %c0_i32 = arith.constant 0 : i32
    %c0_i32_0 = arith.constant 0 : i32
    %c0_i32_1 = arith.constant 0 : i32
    %c0_i32_2 = arith.constant 0 : i32
    return %c0_i32, %c0_i32_0, %c0_i32_1 : i32, i32, i32
  }
  func.func @transform_18(%arg0: i32) -> (i32, i32) {
    %c0_i32 = arith.constant 0 : i32
    %c0_i32_0 = arith.constant 0 : i32
    %c0_i32_1 = arith.constant 0 : i32
    return %c0_i32, %c0_i32_0 : i32, i32
  }
  func.func @transform_19(%arg0: i32) -> (i32, i32, i32) {
    %c0_i32 = arith.constant 0 : i32
    %c0_i32_0 = arith.constant 0 : i32
    %c0_i32_1 = arith.constant 0 : i32
    %c0_i32_2 = arith.constant 0 : i32
    return %c0_i32, %c0_i32_0, %c0_i32_1 : i32, i32, i32
  }
  func.func @transform_20(%arg0: i32) -> (i32, i32) {
    %c0_i32 = arith.constant 0 : i32
    %c0_i32_0 = arith.constant 0 : i32
    %c0_i32_1 = arith.constant 0 : i32
    return %c0_i32, %c0_i32_0 : i32, i32
  }
  func.func @transform_21(%arg0: i32) -> (i32, i32, i32) {
    %c0_i32 = arith.constant 0 : i32
    %c0_i32_0 = arith.constant 0 : i32
    %c0_i32_1 = arith.constant 0 : i32
    return %arg0, %c0_i32, %c0_i32_0 : i32, i32, i32
  }
}

</mosaic_0001>

<llo_original>
// kernel: tpu_custom_call.1
$region0: #{tpu_custom_call.1}
  #allocation0 [shape = 'u32[]', space=smem, size = 0x4, offset = 0x4, fixed_abs, tag = 'smem constant byte address 0x4 - core index']
  #allocation1 [shape = 'u32[144,128]{1,0:T(1,128)}', space=vmem, size = 0x12000, scoped, tag = 'internal scratch']
  %s0 = inlined_call_operand.vmem [shape: f32[2,20,60], index: 0, kind: input, shape index: {}]
  %s1 = inlined_call_operand.hbm [shape: f32[3,60,144], index: 1, kind: input, shape index: {}]
  %s2 = inlined_call_operand.vmem [shape: f32[1,144], index: 2, kind: input, shape index: {}]
  %s3 = inlined_call_operand.vmem [shape: f32[3,144,128], index: 3, kind: input, shape index: {}]
  %s4 = inlined_call_operand.vmem [shape: f32[1,128], index: 4, kind: input, shape index: {}]
  %s5 = inlined_call_operand.vmem [shape: f32[3,128,224], index: 5, kind: input, shape index: {}]
  %s6 = inlined_call_operand.vmem [shape: f32[1,224], index: 6, kind: input, shape index: {}]
  %s7 = inlined_call_operand.vmem [shape: f32[3,224,192], index: 7, kind: input, shape index: {}]
  %s8 = inlined_call_operand.vmem [shape: f32[1,192], index: 8, kind: input, shape index: {}]
  %s9 = inlined_call_operand.vmem [shape: f32[3,192,160], index: 9, kind: input, shape index: {}]
  %s10 = inlined_call_operand.vmem [shape: f32[1,160], index: 10, kind: input, shape index: {}]
  %s11 = inlined_call_operand.hbm [shape: f32[3,160,256], index: 11, kind: input, shape index: {}]
  %s12 = inlined_call_operand.vmem [shape: f32[1,256], index: 12, kind: input, shape index: {}]
  %s13 = inlined_call_operand.vmem [shape: f32[3,256,384], index: 13, kind: input, shape index: {}]
  %s14 = inlined_call_operand.vmem [shape: f32[1,384], index: 14, kind: input, shape index: {}]
  %s15 = inlined_call_operand.vmem [shape: f32[3,384,256], index: 15, kind: input, shape index: {}]
  %s16 = inlined_call_operand.vmem [shape: f32[1,256], index: 16, kind: input, shape index: {}]
  %s17 = inlined_call_operand.hbm [shape: f32[3,256,128], index: 17, kind: input, shape index: {}]
  %s18 = inlined_call_operand.vmem [shape: f32[1,128], index: 18, kind: input, shape index: {}]
  %s19 = inlined_call_operand.vmem [shape: f32[2,128,32], index: 19, kind: input, shape index: {}]
  %s20 = inlined_call_operand.vmem [shape: f32[1,32], index: 20, kind: input, shape index: {}]
  %s21 = inlined_call_operand.hbm [shape: f32[2,1,32], index: 21, kind: output, shape index: {}]
  %s22 = sld [smem:[#allocation0]]
  $region129: #{tpu_custom_call.1} parent=0
    _
  %s24 = ssub.s32 1, %s22
  %s25 = scalar_select 0, %s24, %s22
  $region1: #{tpu_custom_call.1} parent=0
    #allocation2 [shape = 'u8[196608]{0}', space=vmem, size = 0x30000, scoped, tag = 'input window, operand 1, single buffered']
    #allocation3 [shape = 's32[2]{0}', space=sflag, size = 0x8, scoped, tag = 'scoped memory for tpu_custom_call.1']
    #allocation4 [shape = 's32[2]{0}', space=sflag, size = 0x8, scoped, tag = 'scoped memory for tpu_custom_call.1']
    #allocation5 [shape = 'u8[491520]{0}', space=vmem, size = 0x78000, scoped, tag = 'input window, operand 11, single buffered']
    #allocation6 [shape = 's32[1]{0}', space=sflag, size = 0x4, scoped, tag = 'scoped memory for tpu_custom_call.1']
    #allocation7 [shape = 'u8[393216]{0}', space=vmem, size = 0x60000, scoped, tag = 'input window, operand 17, single buffered']
    #allocation8 [shape = 'u8[1024]{0}', space=vmem, size = 0x400, scoped, tag = 'output window, operand 0']
    %26 = vsyncpa [#allocation3], 0
    %27 = vsyncpa [#allocation6], 0
    %28 = vsyncpa [#allocation4], 0
    %s29 = scalar_lea.sflag [#allocation4], 1
    %30 = vsyncpa %s29, 0
    loop: start=0, step=1, limit=4
    $region2: #{tpu_custom_call.1} parent=1 // loop_pre_header
      _
    $region3: #{tpu_custom_call.1} parent=1 // loop_header
      %s32 = sphi 0, %s36
      %p33 = scmp.ge.s32.totalorder %s32, 4
      %s42 = sphi 0, %s44
      %s45 = sphi 0, %s42
      %s46 = sphi 0, %s45
      %s62 = sphi 0, %s46
      %s66 = sphi 0, %s66
      %s68 = sphi 0, %s66
      %s69 = sphi 0, %s68
      %s83 = sphi 0, %s69
      %s87 = sphi 0, %s87
      %s89 = sphi 0, %s87
      %s90 = sphi 0, %s89
      %s104 = sphi 0, %s90
      %s108 = sphi 0, %s108
      %s110 = sphi 0, %s108
      %s111 = sphi 0, %s110
      %s125 = sphi 0, %s111
      %s129 = sphi 0, %s129
      %s131 = sphi 0, %s129
      %s132 = sphi 0, %s131
      %s146 = sphi 0, %s132
      %s150 = sphi 0, %s150
      %s152 = sphi 0, %s150
      %s153 = sphi 0, %s152
      %s167 = sphi 0, %s153
      %s171 = sphi 0, %s171
      %s173 = sphi 0, %s171
      %s174 = sphi 0, %s173
      %s188 = sphi 0, %s174
      %s192 = sphi 0, %s192
      %s194 = sphi 0, %s192
      %s195 = sphi 0, %s194
      %s209 = sphi 0, %s195
      %s213 = sphi 0, %s213
      %s215 = sphi 0, %s213
      %s216 = sphi 0, %s215
      %s230 = sphi 0, %s216
      %s234 = sphi 0, %s234
      %s236 = sphi 0, %s234
      %s237 = sphi 0, %s236
      %s251 = sphi 0, %s237
      %s255 = sphi 0, %s255
      %s257 = sphi 0, %s255
      %s258 = sphi 0, %s257
      %s272 = sphi 0, %s258
      %s276 = sphi 0, %s276
      %s278 = sphi 0, %s276
      %s279 = sphi 0, %s278
      %s293 = sphi 0, %s279
      %s297 = sphi 0, %s297
      %s299 = sphi 0, %s297
      %s300 = sphi 0, %s299
      %s314 = sphi 0, %s300
      %s318 = sphi 0, %s318
      %s320 = sphi 0, %s318
      %s321 = sphi 0, %s320
      %s335 = sphi 0, %s321
      %s339 = sphi 0, %s339
      %s341 = sphi 0, %s339
      %s342 = sphi 0, %s341
      %s356 = sphi 0, %s342
      %s360 = sphi 0, %s360
      %s362 = sphi 0, %s360
      %s363 = sphi 0, %s362
      %s377 = sphi 0, %s363
      %s381 = sphi 0, %s381
      %s383 = sphi 0, %s381
      %s384 = sphi 0, %s383
      %s398 = sphi 0, %s384
      %s402 = sphi 0, %s402
      %s404 = sphi 0, %s402
      %s405 = sphi 0, %s404
      %s419 = sphi 0, %s405
      %s423 = sphi 0, %s423
      %s425 = sphi 0, %s423
      %s426 = sphi 0, %s425
      %s440 = sphi 0, %s426
      %s444 = sphi 0, %s444
      %s446 = sphi 0, %s444
      %s447 = sphi 0, %s446
      %s461 = sphi 0, %s447
      %s465 = sphi 0, %s465
      %s467 = sphi 0, %s465
      %s468 = sphi 0, %s467
      %s482 = sphi 0, %s468
      %s488 = sphi 0, %s490
      %s491 = sphi 0, %s488
      %s492 = sphi 0, %s491
      %s508 = sphi 0, %s492
    $region4: #{tpu_custom_call.1} parent=1 // loop_header_branch
      %35 = sbr.rel (%p33) target = $region8
    $region5: #{tpu_custom_call.1} parent=1 // loop_body
      %s37 = ssub.s32 %s32, 1
      %s38 = ssub.s32 %s32, 2
      %s39 = sadd.s32 %s32, 1
      %s40 = ssub.s32 %s32, %s39
      %p41 = scmp.eq.s32.totalorder %s40, 0
      %s43 = sadd.s32 %s42, 1
      %s44 = scalar_select %p41, %s42, %s43
      %p47 = pneg %p41
      %p48 = scmp.eq.s32.totalorder %s32, 1
      %p49 = por %p47, %p48
      %p50 = scmp.ne.s32.totalorder %s42, %s45
      %p51 = scmp.eq.s32.totalorder %s32, 0
      %p52 = por %p50, %p51
      %p53 = scmp.ne.s32.totalorder %s42, %s45
      %p54 = scmp.eq.s32.totalorder %s37, 1
      %p55 = por %p53, %p54
      %p56 = scmp.ne.s32.totalorder %s45, %s46
      %p57 = scmp.eq.s32.totalorder %s37, 0
      %p58 = por %p56, %p57
      %p59 = scmp.ne.s32.totalorder %s45, %s46
      %p60 = scmp.eq.s32.totalorder %s38, 1
      %p61 = por %p59, %p60
      %p63 = scmp.ne.s32.totalorder %s46, %s62
      %p64 = scmp.eq.s32.totalorder %s38, 0
      %p65 = por %p63, %p64
      %s67 = sadd.s32 %s66, 1
      %p70 = scmp.eq.s32.totalorder %s32, 1
      %p71 = scmp.ne.s32.totalorder %s66, %s68
      %p72 = scmp.eq.s32.totalorder %s32, 0
      %p73 = por %p71, %p72
      %p74 = scmp.ne.s32.totalorder %s66, %s68
      %p75 = scmp.eq.s32.totalorder %s37, 1
      %p76 = por %p74, %p75
      %p77 = scmp.ne.s32.totalorder %s68, %s69
      %p78 = scmp.eq.s32.totalorder %s37, 0
      %p79 = por %p77, %p78
      %p80 = scmp.ne.s32.totalorder %s68, %s69
      %p81 = scmp.eq.s32.totalorder %s38, 1
      %p82 = por %p80, %p81
      %p84 = scmp.ne.s32.totalorder %s69, %s83
      %p85 = scmp.eq.s32.totalorder %s38, 0
      %p86 = por %p84, %p85
      %s88 = sadd.s32 %s87, 1
      %p91 = scmp.eq.s32.totalorder %s32, 1
      %p92 = scmp.ne.s32.totalorder %s87, %s89
      %p93 = scmp.eq.s32.totalorder %s32, 0
      %p94 = por %p92, %p93
      %p95 = scmp.ne.s32.totalorder %s87, %s89
      %p96 = scmp.eq.s32.totalorder %s37, 1
      %p97 = por %p95, %p96
      %p98 = scmp.ne.s32.totalorder %s89, %s90
      %p99 = scmp.eq.s32.totalorder %s37, 0
      %p100 = por %p98, %p99
      %p101 = scmp.ne.s32.totalorder %s89, %s90
      %p102 = scmp.eq.s32.totalorder %s38, 1
      %p103 = por %p101, %p102
      %p105 = scmp.ne.s32.totalorder %s90, %s104
      %p106 = scmp.eq.s32.totalorder %s38, 0
      %p107 = por %p105, %p106
      %s109 = sadd.s32 %s108, 1
      %p112 = scmp.eq.s32.totalorder %s32, 1
      %p113 = scmp.ne.s32.totalorder %s108, %s110
      %p114 = scmp.eq.s32.totalorder %s32, 0
      %p115 = por %p113, %p114
      %p116 = scmp.ne.s32.totalorder %s108, %s110
      %p117 = scmp.eq.s32.totalorder %s37, 1
      %p118 = por %p116, %p117
      %p119 = scmp.ne.s32.totalorder %s110, %s111
      %p120 = scmp.eq.s32.totalorder %s37, 0
      %p121 = por %p119, %p120
      %p122 = scmp.ne.s32.totalorder %s110, %s111
      %p123 = scmp.eq.s32.totalorder %s38, 1
      %p124 = por %p122, %p123
      %p126 = scmp.ne.s32.totalorder %s111, %s125
      %p127 = scmp.eq.s32.totalorder %s38, 0
      %p128 = por %p126, %p127
      %s130 = sadd.s32 %s129, 1
      %p133 = scmp.eq.s32.totalorder %s32, 1
      %p134 = scmp.ne.s32.totalorder %s129, %s131
      %p135 = scmp.eq.s32.totalorder %s32, 0
      %p136 = por %p134, %p135
      %p137 = scmp.ne.s32.totalorder %s129, %s131
      %p138 = scmp.eq.s32.totalorder %s37, 1
      %p139 = por %p137, %p138
      %p140 = scmp.ne.s32.totalorder %s131, %s132
      %p141 = scmp.eq.s32.totalorder %s37, 0
      %p142 = por %p140, %p141
      %p143 = scmp.ne.s32.totalorder %s131, %s132
      %p144 = scmp.eq.s32.totalorder %s38, 1
      %p145 = por %p143, %p144
      %p147 = scmp.ne.s32.totalorder %s132, %s146
      %p148 = scmp.eq.s32.totalorder %s38, 0
      %p149 = por %p147, %p148
      %s151 = sadd.s32 %s150, 1
      %p154 = scmp.eq.s32.totalorder %s32, 1
      %p155 = scmp.ne.s32.totalorder %s150, %s152
      %p156 = scmp.eq.s32.totalorder %s32, 0
      %p157 = por %p155, %p156
      %p158 = scmp.ne.s32.totalorder %s150, %s152
      %p159 = scmp.eq.s32.totalorder %s37, 1
      %p160 = por %p158, %p159
      %p161 = scmp.ne.s32.totalorder %s152, %s153
      %p162 = scmp.eq.s32.totalorder %s37, 0
      %p163 = por %p161, %p162
      %p164 = scmp.ne.s32.totalorder %s152, %s153
      %p165 = scmp.eq.s32.totalorder %s38, 1
      %p166 = por %p164, %p165
      %p168 = scmp.ne.s32.totalorder %s153, %s167
      %p169 = scmp.eq.s32.totalorder %s38, 0
      %p170 = por %p168, %p169
      %s172 = sadd.s32 %s171, 1
      %p175 = scmp.eq.s32.totalorder %s32, 1
      %p176 = scmp.ne.s32.totalorder %s171, %s173
      %p177 = scmp.eq.s32.totalorder %s32, 0
      %p178 = por %p176, %p177
      %p179 = scmp.ne.s32.totalorder %s171, %s173
      %p180 = scmp.eq.s32.totalorder %s37, 1
      %p181 = por %p179, %p180
      %p182 = scmp.ne.s32.totalorder %s173, %s174
      %p183 = scmp.eq.s32.totalorder %s37, 0
      %p184 = por %p182, %p183
      %p185 = scmp.ne.s32.totalorder %s173, %s174
      %p186 = scmp.eq.s32.totalorder %s38, 1
      %p187 = por %p185, %p186
      %p189 = scmp.ne.s32.totalorder %s174, %s188
      %p190 = scmp.eq.s32.totalorder %s38, 0
      %p191 = por %p189, %p190
      %s193 = sadd.s32 %s192, 1
      %p196 = scmp.eq.s32.totalorder %s32, 1
      %p197 = scmp.ne.s32.totalorder %s192, %s194
      %p198 = scmp.eq.s32.totalorder %s32, 0
      %p199 = por %p197, %p198
      %p200 = scmp.ne.s32.totalorder %s192, %s194
      %p201 = scmp.eq.s32.totalorder %s37, 1
      %p202 = por %p200, %p201
      %p203 = scmp.ne.s32.totalorder %s194, %s195
      %p204 = scmp.eq.s32.totalorder %s37, 0
      %p205 = por %p203, %p204
      %p206 = scmp.ne.s32.totalorder %s194, %s195
      %p207 = scmp.eq.s32.totalorder %s38, 1
      %p208 = por %p206, %p207
      %p210 = scmp.ne.s32.totalorder %s195, %s209
      %p211 = scmp.eq.s32.totalorder %s38, 0
      %p212 = por %p210, %p211
      %s214 = sadd.s32 %s213, 1
      %p217 = scmp.eq.s32.totalorder %s32, 1
      %p218 = scmp.ne.s32.totalorder %s213, %s215
      %p219 = scmp.eq.s32.totalorder %s32, 0
      %p220 = por %p218, %p219
      %p221 = scmp.ne.s32.totalorder %s213, %s215
      %p222 = scmp.eq.s32.totalorder %s37, 1
      %p223 = por %p221, %p222
      %p224 = scmp.ne.s32.totalorder %s215, %s216
      %p225 = scmp.eq.s32.totalorder %s37, 0
      %p226 = por %p224, %p225
      %p227 = scmp.ne.s32.totalorder %s215, %s216
      %p228 = scmp.eq.s32.totalorder %s38, 1
      %p229 = por %p227, %p228
      %p231 = scmp.ne.s32.totalorder %s216, %s230
      %p232 = scmp.eq.s32.totalorder %s38, 0
      %p233 = por %p231, %p232
      %s235 = sadd.s32 %s234, 1
      %p238 = scmp.eq.s32.totalorder %s32, 1
      %p239 = scmp.ne.s32.totalorder %s234, %s236
      %p240 = scmp.eq.s32.totalorder %s32, 0
      %p241 = por %p239, %p240
      %p242 = scmp.ne.s32.totalorder %s234, %s236
      %p243 = scmp.eq.s32.totalorder %s37, 1
      %p244 = por %p242, %p243
      %p245 = scmp.ne.s32.totalorder %s236, %s237
      %p246 = scmp.eq.s32.totalorder %s37, 0
      %p247 = por %p245, %p246
      %p248 = scmp.ne.s32.totalorder %s236, %s237
      %p249 = scmp.eq.s32.totalorder %s38, 1
      %p250 = por %p248, %p249
      %p252 = scmp.ne.s32.totalorder %s237, %s251
      %p253 = scmp.eq.s32.totalorder %s38, 0
      %p254 = por %p252, %p253
      %s256 = sadd.s32 %s255, 1
      %p259 = scmp.eq.s32.totalorder %s32, 1
      %p260 = scmp.ne.s32.totalorder %s255, %s257
      %p261 = scmp.eq.s32.totalorder %s32, 0
      %p262 = por %p260, %p261
      %p263 = scmp.ne.s32.totalorder %s255, %s257
      %p264 = scmp.eq.s32.totalorder %s37, 1
      %p265 = por %p263, %p264
      %p266 = scmp.ne.s32.totalorder %s257, %s258
      %p267 = scmp.eq.s32.totalorder %s37, 0
      %p268 = por %p266, %p267
      %p269 = scmp.ne.s32.totalorder %s257, %s258
      %p270 = scmp.eq.s32.totalorder %s38, 1
      %p271 = por %p269, %p270
      %p273 = scmp.ne.s32.totalorder %s258, %s272
      %p274 = scmp.eq.s32.totalorder %s38, 0
      %p275 = por %p273, %p274
      %s277 = sadd.s32 %s276, 1
      %p280 = scmp.eq.s32.totalorder %s32, 1
      %p281 = scmp.ne.s32.totalorder %s276, %s278
      %p282 = scmp.eq.s32.totalorder %s32, 0
      %p283 = por %p281, %p282
      %p284 = scmp.ne.s32.totalorder %s276, %s278
      %p285 = scmp.eq.s32.totalorder %s37, 1
      %p286 = por %p284, %p285
      %p287 = scmp.ne.s32.totalorder %s278, %s279
      %p288 = scmp.eq.s32.totalorder %s37, 0
      %p289 = por %p287, %p288
      %p290 = scmp.ne.s32.totalorder %s278, %s279
      %p291 = scmp.eq.s32.totalorder %s38, 1
      %p292 = por %p290, %p291
      %p294 = scmp.ne.s32.totalorder %s279, %s293
      %p295 = scmp.eq.s32.totalorder %s38, 0
      %p296 = por %p294, %p295
      %s298 = sadd.s32 %s297, 1
      %p301 = scmp.eq.s32.totalorder %s32, 1
      %p302 = scmp.ne.s32.totalorder %s297, %s299
      %p303 = scmp.eq.s32.totalorder %s32, 0
      %p304 = por %p302, %p303
      %p305 = scmp.ne.s32.totalorder %s297, %s299
      %p306 = scmp.eq.s32.totalorder %s37, 1
      %p307 = por %p305, %p306
      %p308 = scmp.ne.s32.totalorder %s299, %s300
      %p309 = scmp.eq.s32.totalorder %s37, 0
      %p310 = por %p308, %p309
      %p311 = scmp.ne.s32.totalorder %s299, %s300
      %p312 = scmp.eq.s32.totalorder %s38, 1
      %p313 = por %p311, %p312
      %p315 = scmp.ne.s32.totalorder %s300, %s314
      %p316 = scmp.eq.s32.totalorder %s38, 0
      %p317 = por %p315, %p316
      %s319 = sadd.s32 %s318, 1
      %p322 = scmp.eq.s32.totalorder %s32, 1
      %p323 = scmp.ne.s32.totalorder %s318, %s320
      %p324 = scmp.eq.s32.totalorder %s32, 0
      %p325 = por %p323, %p324
      %p326 = scmp.ne.s32.totalorder %s318, %s320
      %p327 = scmp.eq.s32.totalorder %s37, 1
      %p328 = por %p326, %p327
      %p329 = scmp.ne.s32.totalorder %s320, %s321
      %p330 = scmp.eq.s32.totalorder %s37, 0
      %p331 = por %p329, %p330
      %p332 = scmp.ne.s32.totalorder %s320, %s321
      %p333 = scmp.eq.s32.totalorder %s38, 1
      %p334 = por %p332, %p333
      %p336 = scmp.ne.s32.totalorder %s321, %s335
      %p337 = scmp.eq.s32.totalorder %s38, 0
      %p338 = por %p336, %p337
      %s340 = sadd.s32 %s339, 1
      %p343 = scmp.eq.s32.totalorder %s32, 1
      %p344 = scmp.ne.s32.totalorder %s339, %s341
      %p345 = scmp.eq.s32.totalorder %s32, 0
      %p346 = por %p344, %p345
      %p347 = scmp.ne.s32.totalorder %s339, %s341
      %p348 = scmp.eq.s32.totalorder %s37, 1
      %p349 = por %p347, %p348
      %p350 = scmp.ne.s32.totalorder %s341, %s342
      %p351 = scmp.eq.s32.totalorder %s37, 0
      %p352 = por %p350, %p351
      %p353 = scmp.ne.s32.totalorder %s341, %s342
      %p354 = scmp.eq.s32.totalorder %s38, 1
      %p355 = por %p353, %p354
      %p357 = scmp.ne.s32.totalorder %s342, %s356
      %p358 = scmp.eq.s32.totalorder %s38, 0
      %p359 = por %p357, %p358
      %s361 = sadd.s32 %s360, 1
      %p364 = scmp.eq.s32.totalorder %s32, 1
      %p365 = scmp.ne.s32.totalorder %s360, %s362
      %p366 = scmp.eq.s32.totalorder %s32, 0
      %p367 = por %p365, %p366
      %p368 = scmp.ne.s32.totalorder %s360, %s362
      %p369 = scmp.eq.s32.totalorder %s37, 1
      %p370 = por %p368, %p369
      %p371 = scmp.ne.s32.totalorder %s362, %s363
      %p372 = scmp.eq.s32.totalorder %s37, 0
      %p373 = por %p371, %p372
      %p374 = scmp.ne.s32.totalorder %s362, %s363
      %p375 = scmp.eq.s32.totalorder %s38, 1
      %p376 = por %p374, %p375
      %p378 = scmp.ne.s32.totalorder %s363, %s377
      %p379 = scmp.eq.s32.totalorder %s38, 0
      %p380 = por %p378, %p379
      %s382 = sadd.s32 %s381, 1
      %p385 = scmp.eq.s32.totalorder %s32, 1
      %p386 = scmp.ne.s32.totalorder %s381, %s383
      %p387 = scmp.eq.s32.totalorder %s32, 0
      %p388 = por %p386, %p387
      %p389 = scmp.ne.s32.totalorder %s381, %s383
      %p390 = scmp.eq.s32.totalorder %s37, 1
      %p391 = por %p389, %p390
      %p392 = scmp.ne.s32.totalorder %s383, %s384
      %p393 = scmp.eq.s32.totalorder %s37, 0
      %p394 = por %p392, %p393
      %p395 = scmp.ne.s32.totalorder %s383, %s384
      %p396 = scmp.eq.s32.totalorder %s38, 1
      %p397 = por %p395, %p396
      %p399 = scmp.ne.s32.totalorder %s384, %s398
      %p400 = scmp.eq.s32.totalorder %s38, 0
      %p401 = por %p399, %p400
      %s403 = sadd.s32 %s402, 1
      %p406 = scmp.eq.s32.totalorder %s32, 1
      %p407 = scmp.ne.s32.totalorder %s402, %s404
      %p408 = scmp.eq.s32.totalorder %s32, 0
      %p409 = por %p407, %p408
      %p410 = scmp.ne.s32.totalorder %s402, %s404
      %p411 = scmp.eq.s32.totalorder %s37, 1
      %p412 = por %p410, %p411
      %p413 = scmp.ne.s32.totalorder %s404, %s405
      %p414 = scmp.eq.s32.totalorder %s37, 0
      %p415 = por %p413, %p414
      %p416 = scmp.ne.s32.totalorder %s404, %s405
      %p417 = scmp.eq.s32.totalorder %s38, 1
      %p418 = por %p416, %p417
      %p420 = scmp.ne.s32.totalorder %s405, %s419
      %p421 = scmp.eq.s32.totalorder %s38, 0
      %p422 = por %p420, %p421
      %s424 = sadd.s32 %s423, 1
      %p427 = scmp.eq.s32.totalorder %s32, 1
      %p428 = scmp.ne.s32.totalorder %s423, %s425
      %p429 = scmp.eq.s32.totalorder %s32, 0
      %p430 = por %p428, %p429
      %p431 = scmp.ne.s32.totalorder %s423, %s425
      %p432 = scmp.eq.s32.totalorder %s37, 1
      %p433 = por %p431, %p432
      %p434 = scmp.ne.s32.totalorder %s425, %s426
      %p435 = scmp.eq.s32.totalorder %s37, 0
      %p436 = por %p434, %p435
      %p437 = scmp.ne.s32.totalorder %s425, %s426
      %p438 = scmp.eq.s32.totalorder %s38, 1
      %p439 = por %p437, %p438
      %p441 = scmp.ne.s32.totalorder %s426, %s440
      %p442 = scmp.eq.s32.totalorder %s38, 0
      %p443 = por %p441, %p442
      %s445 = sadd.s32 %s444, 1
      %p448 = scmp.eq.s32.totalorder %s32, 1
      %p449 = scmp.ne.s32.totalorder %s444, %s446
      %p450 = scmp.eq.s32.totalorder %s32, 0
      %p451 = por %p449, %p450
      %p452 = scmp.ne.s32.totalorder %s444, %s446
      %p453 = scmp.eq.s32.totalorder %s37, 1
      %p454 = por %p452, %p453
      %p455 = scmp.ne.s32.totalorder %s446, %s447
      %p456 = scmp.eq.s32.totalorder %s37, 0
      %p457 = por %p455, %p456
      %p458 = scmp.ne.s32.totalorder %s446, %s447
      %p459 = scmp.eq.s32.totalorder %s38, 1
      %p460 = por %p458, %p459
      %p462 = scmp.ne.s32.totalorder %s447, %s461
      %p463 = scmp.eq.s32.totalorder %s38, 0
      %p464 = por %p462, %p463
      %s466 = sadd.s32 %s465, 1
      %p469 = scmp.eq.s32.totalorder %s32, 1
      %p470 = scmp.ne.s32.totalorder %s465, %s467
      %p471 = scmp.eq.s32.totalorder %s32, 0
      %p472 = por %p470, %p471
      %p473 = scmp.ne.s32.totalorder %s465, %s467
      %p474 = scmp.eq.s32.totalorder %s37, 1
      %p475 = por %p473, %p474
      %p476 = scmp.ne.s32.totalorder %s467, %s468
      %p477 = scmp.eq.s32.totalorder %s37, 0
      %p478 = por %p476, %p477
      %p479 = scmp.ne.s32.totalorder %s467, %s468
      %p480 = scmp.eq.s32.totalorder %s38, 1
      %p481 = por %p479, %p480
      %p483 = scmp.ne.s32.totalorder %s468, %s482
      %p484 = scmp.eq.s32.totalorder %s38, 0
      %p485 = por %p483, %p484
      %s486 = ssub.s32 %s32, %s39
      %p487 = scmp.eq.s32.totalorder %s486, 0
      %s489 = sadd.s32 %s488, 1
      %s490 = scalar_select %p487, %s488, %s489
      %p493 = pneg %p487
      %p494 = scmp.eq.s32.totalorder %s32, 1
      %p495 = por %p493, %p494
      %p496 = scmp.ne.s32.totalorder %s488, %s491
      %p497 = scmp.eq.s32.totalorder %s32, 0
      %p498 = por %p496, %p497
      %p499 = scmp.ne.s32.totalorder %s488, %s491
      %p500 = scmp.eq.s32.totalorder %s37, 1
      %p501 = por %p499, %p500
      %p502 = scmp.ne.s32.totalorder %s491, %s492
      %p503 = scmp.eq.s32.totalorder %s37, 0
      %p504 = por %p502, %p503
      %p505 = scmp.ne.s32.totalorder %s491, %s492
      %p506 = scmp.eq.s32.totalorder %s38, 1
      %p507 = por %p505, %p506
      %p509 = scmp.ne.s32.totalorder %s492, %s508
      %p510 = scmp.eq.s32.totalorder %s38, 0
      %p511 = por %p509, %p510
      %p512 = scmp.le.s32.totalorder 1, %s32
      %p513 = scmp.lt.s32.totalorder %s32, 3
      %p514 = pnand %p512, %p513
      %p515 = pneg %p514
      // Predicated region
      $region9: #{tpu_custom_call.1} parent=5 // pred_check
        _
      $region10: #{tpu_custom_call.1} parent=5 // pred_check_branch
        %517 = sbr.rel (%p514) target = $region12
      $region11: #{tpu_custom_call.1} parent=5 // pred_region
        %s518 = ssub.s32 %s32, 1
        // Predicated region
        $region13: #{tpu_custom_call.1} parent=11 // pred_check
          %p519 = pneg %p79
        $region14: #{tpu_custom_call.1} parent=11 // pred_check_branch
          %521 = sbr.rel (%p519) target = $region16
        $region15: #{tpu_custom_call.1} parent=11 // pred_region
          %s523 = ssub.s32 6144, 6144
          %524 = vsyncadd [#allocation3], %s523
          %s525 = sshll.u32 [#allocation2], 4
          %s526 = int_to_ptr.vmem [resolvable:$true] %s525
          %531 = dma.hbm_to_vmem [thread:$0]  %s1, 6144, %s526, [#allocation3], 256, 256, 16
        $region16: #{tpu_custom_call.1} parent=11 // pred_fallthru
          _
        // Predicated region
        $region17: #{tpu_custom_call.1} parent=11 // pred_check
          %p532 = pneg %p100
        $region18: #{tpu_custom_call.1} parent=11 // pred_check_branch
          %534 = sbr.rel (%p532) target = $region20
        $region19: #{tpu_custom_call.1} parent=11 // pred_region
          _
        $region20: #{tpu_custom_call.1} parent=11 // pred_fallthru
          _
        // Predicated region
        $region21: #{tpu_custom_call.1} parent=11 // pred_check
          %p535 = pneg %p121
        $region22: #{tpu_custom_call.1} parent=11 // pred_check_branch
          %537 = sbr.rel (%p535) target = $region24
        $region23: #{tpu_custom_call.1} parent=11 // pred_region
          _
        $region24: #{tpu_custom_call.1} parent=11 // pred_fallthru
          _
        // Predicated region
        $region25: #{tpu_custom_call.1} parent=11 // pred_check
          %p538 = pneg %p142
        $region26: #{tpu_custom_call.1} parent=11 // pred_check_branch
          %540 = sbr.rel (%p538) target = $region28
        $region27: #{tpu_custom_call.1} parent=11 // pred_region
          _
        $region28: #{tpu_custom_call.1} parent=11 // pred_fallthru
          _
        // Predicated region
        $region29: #{tpu_custom_call.1} parent=11 // pred_check
          %p541 = pneg %p163
        $region30: #{tpu_custom_call.1} parent=11 // pred_check_branch
          %543 = sbr.rel (%p541) target = $region32
        $region31: #{tpu_custom_call.1} parent=11 // pred_region
          _
        $region32: #{tpu_custom_call.1} parent=11 // pred_fallthru
          _
        // Predicated region
        $region33: #{tpu_custom_call.1} parent=11 // pred_check
          %p544 = pneg %p184
        $region34: #{tpu_custom_call.1} parent=11 // pred_check_branch
          %546 = sbr.rel (%p544) target = $region36
        $region35: #{tpu_custom_call.1} parent=11 // pred_region
          _
        $region36: #{tpu_custom_call.1} parent=11 // pred_fallthru
          _
        // Predicated region
        $region37: #{tpu_custom_call.1} parent=11 // pred_check
          %p547 = pneg %p205
        $region38: #{tpu_custom_call.1} parent=11 // pred_check_branch
          %549 = sbr.rel (%p547) target = $region40
        $region39: #{tpu_custom_call.1} parent=11 // pred_region
          _
        $region40: #{tpu_custom_call.1} parent=11 // pred_fallthru
          _
        // Predicated region
        $region41: #{tpu_custom_call.1} parent=11 // pred_check
          %p550 = pneg %p226
        $region42: #{tpu_custom_call.1} parent=11 // pred_check_branch
          %552 = sbr.rel (%p550) target = $region44
        $region43: #{tpu_custom_call.1} parent=11 // pred_region
          _
        $region44: #{tpu_custom_call.1} parent=11 // pred_fallthru
          _
        // Predicated region
        $region45: #{tpu_custom_call.1} parent=11 // pred_check
          %p553 = pneg %p247
        $region46: #{tpu_custom_call.1} parent=11 // pred_check_branch
          %555 = sbr.rel (%p553) target = $region48
        $region47: #{tpu_custom_call.1} parent=11 // pred_region
          _
        $region48: #{tpu_custom_call.1} parent=11 // pred_fallthru
          _
        // Predicated region
        $region49: #{tpu_custom_call.1} parent=11 // pred_check
          %p556 = pneg %p268
        $region50: #{tpu_custom_call.1} parent=11 // pred_check_branch
          %558 = sbr.rel (%p556) target = $region52
        $region51: #{tpu_custom_call.1} parent=11 // pred_region
          _
        $region52: #{tpu_custom_call.1} parent=11 // pred_fallthru
          _
        // Predicated region
        $region53: #{tpu_custom_call.1} parent=11 // pred_check
          %p559 = pneg %p289
        $region54: #{tpu_custom_call.1} parent=11 // pred_check_branch
          %561 = sbr.rel (%p559) target = $region56
        $region55: #{tpu_custom_call.1} parent=11 // pred_region
          %s563 = ssub.s32 15360, 15360
          %564 = vsyncadd [#allocation6], %s563
          %s565 = sshll.u32 [#allocation5], 4
          %s566 = int_to_ptr.vmem [resolvable:$true] %s565
          %571 = dma.hbm_to_vmem [thread:$0]  %s11, 15360, %s566, [#allocation6], 256, 256, 16
        $region56: #{tpu_custom_call.1} parent=11 // pred_fallthru
          _
        // Predicated region
        $region57: #{tpu_custom_call.1} parent=11 // pred_check
          %p572 = pneg %p310
        $region58: #{tpu_custom_call.1} parent=11 // pred_check_branch
          %574 = sbr.rel (%p572) target = $region60
        $region59: #{tpu_custom_call.1} parent=11 // pred_region
          _
        $region60: #{tpu_custom_call.1} parent=11 // pred_fallthru
          _
        // Predicated region
        $region61: #{tpu_custom_call.1} parent=11 // pred_check
          %p575 = pneg %p331
        $region62: #{tpu_custom_call.1} parent=11 // pred_check_branch
          %577 = sbr.rel (%p575) target = $region64
        $region63: #{tpu_custom_call.1} parent=11 // pred_region
          _
        $region64: #{tpu_custom_call.1} parent=11 // pred_fallthru
          _
        // Predicated region
        $region65: #{tpu_custom_call.1} parent=11 // pred_check
          %p578 = pneg %p352
        $region66: #{tpu_custom_call.1} parent=11 // pred_check_branch
          %580 = sbr.rel (%p578) target = $region68
        $region67: #{tpu_custom_call.1} parent=11 // pred_region
          _
        $region68: #{tpu_custom_call.1} parent=11 // pred_fallthru
          _
        // Predicated region
        $region69: #{tpu_custom_call.1} parent=11 // pred_check
          %p581 = pneg %p373
        $region70: #{tpu_custom_call.1} parent=11 // pred_check_branch
          %583 = sbr.rel (%p581) target = $region72
        $region71: #{tpu_custom_call.1} parent=11 // pred_region
          _
        $region72: #{tpu_custom_call.1} parent=11 // pred_fallthru
          _
        // Predicated region
        $region73: #{tpu_custom_call.1} parent=11 // pred_check
          %p584 = pneg %p394
        $region74: #{tpu_custom_call.1} parent=11 // pred_check_branch
          %586 = sbr.rel (%p584) target = $region76
        $region75: #{tpu_custom_call.1} parent=11 // pred_region
          _
        $region76: #{tpu_custom_call.1} parent=11 // pred_fallthru
          _
        // Predicated region
        $region77: #{tpu_custom_call.1} parent=11 // pred_check
          %p587 = pneg %p415
        $region78: #{tpu_custom_call.1} parent=11 // pred_check_branch
          %589 = sbr.rel (%p587) target = $region80
        $region79: #{tpu_custom_call.1} parent=11 // pred_region
          %s591 = ssub.s32 12288, 12288
          %592 = vsyncadd [#allocation6], %s591
          %s593 = sshll.u32 [#allocation7], 4
          %s594 = int_to_ptr.vmem [resolvable:$true] %s593
          %599 = dma.hbm_to_vmem [thread:$0]  %s17, 12288, %s594, [#allocation6], 128, 128, 8
        $region80: #{tpu_custom_call.1} parent=11 // pred_fallthru
          _
        // Predicated region
        $region81: #{tpu_custom_call.1} parent=11 // pred_check
          %p600 = pneg %p436
        $region82: #{tpu_custom_call.1} parent=11 // pred_check_branch
          %602 = sbr.rel (%p600) target = $region84
        $region83: #{tpu_custom_call.1} parent=11 // pred_region
          _
        $region84: #{tpu_custom_call.1} parent=11 // pred_fallthru
          _
        // Predicated region
        $region85: #{tpu_custom_call.1} parent=11 // pred_check
          %p603 = pneg %p457
        $region86: #{tpu_custom_call.1} parent=11 // pred_check_branch
          %605 = sbr.rel (%p603) target = $region88
        $region87: #{tpu_custom_call.1} parent=11 // pred_region
          _
        $region88: #{tpu_custom_call.1} parent=11 // pred_fallthru
          _
        // Predicated region
        $region89: #{tpu_custom_call.1} parent=11 // pred_check
          %p606 = pneg %p478
        $region90: #{tpu_custom_call.1} parent=11 // pred_check_branch
          %608 = sbr.rel (%p606) target = $region92
        $region91: #{tpu_custom_call.1} parent=11 // pred_region
          _
        $region92: #{tpu_custom_call.1} parent=11 // pred_fallthru
          _
      $region12: #{tpu_custom_call.1} parent=5 // pred_fallthru
        _
      %p609 = scmp.lt.s32.totalorder %s32, 2
      // Predicated region
      $region93: #{tpu_custom_call.1} parent=5 // pred_check
        %p610 = pneg %p609
      $region94: #{tpu_custom_call.1} parent=5 // pred_check_branch
        %612 = sbr.rel (%p610) target = $region96
      $region95: #{tpu_custom_call.1} parent=5 // pred_region
        // Predicated region
        $region97: #{tpu_custom_call.1} parent=95 // pred_check
          %p613 = pneg %p52
        $region98: #{tpu_custom_call.1} parent=95 // pred_check_branch
          %615 = sbr.rel (%p613) target = $region100
        $region99: #{tpu_custom_call.1} parent=95 // pred_region
          %p616 = scmp.lt.s32.totalorder %s32, 1
          %s617 = scalar_select %p616, %s32, 1
          %s618 = smul.addr %s617, 3
          %s619 = smul.addr %s618, 8
          %s620 = scalar_lea.vmem %s0, %s619
        $region100: #{tpu_custom_call.1} parent=95 // pred_fallthru
          _
      $region96: #{tpu_custom_call.1} parent=5 // pred_fallthru
        _
      %p621 = scmp.le.s32.totalorder 1, %s32
      %p622 = scmp.lt.s32.totalorder %s32, 3
      %p623 = pnand %p621, %p622
      %p624 = pneg %p623
      // Predicated region
      $region101: #{tpu_custom_call.1} parent=5 // pred_check
        _
      $region102: #{tpu_custom_call.1} parent=5 // pred_check_branch
        %626 = sbr.rel (%p623) target = $region104
      $region103: #{tpu_custom_call.1} parent=5 // pred_region
        %s627 = ssub.s32 %s32, 1
        // Predicated region
        $region105: #{tpu_custom_call.1} parent=103 // pred_check
          %p628 = pneg %p79
        $region106: #{tpu_custom_call.1} parent=103 // pred_check_branch
          %630 = sbr.rel (%p628) target = $region108
        $region107: #{tpu_custom_call.1} parent=103 // pred_region
          %631 = dma.done [#allocation3], 6144
        $region108: #{tpu_custom_call.1} parent=103 // pred_fallthru
          _
        // Predicated region
        $region109: #{tpu_custom_call.1} parent=103 // pred_check
          %p632 = pneg %p289
        $region110: #{tpu_custom_call.1} parent=103 // pred_check_branch
          %634 = sbr.rel (%p632) target = $region112
        $region111: #{tpu_custom_call.1} parent=103 // pred_region
          %635 = dma.done [#allocation6], 15360
        $region112: #{tpu_custom_call.1} parent=103 // pred_fallthru
          _
        // Predicated region
        $region113: #{tpu_custom_call.1} parent=103 // pred_check
          %p636 = pneg %p415
        $region114: #{tpu_custom_call.1} parent=103 // pred_check_branch
          %638 = sbr.rel (%p636) target = $region116
        $region115: #{tpu_custom_call.1} parent=103 // pred_region
          %639 = dma.done [#allocation6], 12288
        $region116: #{tpu_custom_call.1} parent=103 // pred_fallthru
          _
        %p640 = scmp.lt.s32.totalorder %s37, 1
        %s641 = scalar_select %p640, %s37, 1
        %s642 = smul.addr %s641, 3
        %s643 = smul.addr %s642, 8
        %s644 = scalar_lea.vmem %s0, %s643
        %p645 = pneg %p58
        %p646 = pneg %p55
        %p647 = pneg %p79
        %p648 = pneg %p76
        %p649 = pneg %p100
        %p650 = pneg %p97
        %p651 = pneg %p121
        %p652 = pneg %p118
        %p653 = pneg %p142
        %p654 = pneg %p139
        %p655 = pneg %p163
        %p656 = pneg %p160
        %p657 = pneg %p184
        %p658 = pneg %p181
        %p659 = pneg %p205
        %p660 = pneg %p202
        %p661 = pneg %p226
        %p662 = pneg %p223
        %p663 = pneg %p247
        %p664 = pneg %p244
        %p665 = pneg %p268
        %p666 = pneg %p265
        %p667 = pneg %p289
        %p668 = pneg %p286
        %p669 = pneg %p310
        %p670 = pneg %p307
        %p671 = pneg %p331
        %p672 = pneg %p328
        %p673 = pneg %p352
        %p674 = pneg %p349
        %p675 = pneg %p373
        %p676 = pneg %p370
        %p677 = pneg %p394
        %p678 = pneg %p391
        %p679 = pneg %p415
        %p680 = pneg %p412
        %p681 = pneg %p436
        %p682 = pneg %p433
        %p683 = pneg %p457
        %p684 = pneg %p454
        %p685 = pneg %p478
        %p686 = pneg %p475
        %p687 = pneg %p504
        %p688 = pneg %p501
        %s689 = sand.u32 %s491, 1
        %s690 = scalar_lea.sflag [#allocation4], %s689
        %s691 = sand.u32 %s491, 1
        %s692 = scalar_lea.vmem [#allocation8], %s691
        %p693 = scmp.lt.s32.totalorder %s37, 1
        %s694 = scalar_select %p693, %s37, 1
        %s695 = smul.addr %s694, 3
        %s696 = smul.addr %s695, 8
        %s697 = scalar_lea.vmem %s0, %s696
        %v698 = vld [vmem:[%s697] sm:$0xff]
        %v699 = vld [vmem:[%s697 + $0x8] sm:$0xff]
        %v700 = vld [vmem:[%s697 + $0x10] sm:$0xf]
        %v701 = vld [vmem:[#allocation2] sm:$0xff]
        %v702 = vld [vmem:[#allocation2 + $0x8] sm:$0xff]
        %v703 = vld [vmem:[#allocation2 + $0x10] sm:$0xff]
        %v704 = vld [vmem:[#allocation2 + $0x18] sm:$0xff]
        %v705 = vld [vmem:[#allocation2 + $0x20] sm:$0xff]
        %v706 = vld [vmem:[#allocation2 + $0x28] sm:$0xff]
        %v707 = vld [vmem:[#allocation2 + $0x30] sm:$0xff]
        %v708 = vld [vmem:[#allocation2 + $0x38] sm:$0xff]
        %v709 = vld [vmem:[#allocation2 + $0x40] sm:$0xff]
        %v710 = vld [vmem:[#allocation2 + $0x48] sm:$0xff]
        %v711 = vld [vmem:[#allocation2 + $0x50] sm:$0xff]
        %v712 = vld [vmem:[#allocation2 + $0x58] sm:$0xff]
        %v713 = vld [vmem:[#allocation2 + $0x60] sm:$0xff]
        %v714 = vld [vmem:[#allocation2 + $0x68] sm:$0xff]
        %v715 = vld [vmem:[#allocation2 + $0x70] sm:$0xf]
        %v716 = vld [vmem:[#allocation2 + $0x78] sm:$0xf]
        %v717 = vld [vmem:[%s2] sm:$0x3]
        %v719 = vlaneseq
        %v720 = vshrl.u32 %v719, 7
        %v721 = vsub.s32 0, %v720
        %v722 = vrot.slane %v717, %v721
        %v723 = vlaneseq
        %v724 = vshrl.u32 %v723, 7
        %v725 = vsub.s32 1, %v724
        %v726 = vrot.slane %v717, %v725
        %vm729 = vcmask 490496
        %v731 = vsel %vm729, %v698, 0
        %v734 = vsel %vm729, %v699, 0
        %v737 = vsel %vm729, %v700, 0
        %vm739 = vcmask 1043456
        %v741 = vsel %vm739, %v715, 0
        %v744 = vsel %vm739, %v716, 0
        %746 = vmatprep.subr.mxu0 %v702
        %747 = vmatpush1.msra.mxu0 %v701
        %748 = vmatprep.subr.mxu0 %v704
        %749 = vmatpush1.msra.mxu0 %v703
        %750 = vmatprep.subr.mxu0 %v706
        %751 = vmatpush1.msra.mxu0 %v705
        %752 = vmatprep.subr.mxu0 %v708
        %753 = vmatpush1.msra.mxu0 %v707
        %754 = vmatprep.subr.mxu0 %v710
        %755 = vmatpush1.msra.mxu0 %v709
        %756 = vmatprep.subr.mxu0 %v712
        %757 = vmatpush1.msra.mxu0 %v711
        %758 = vmatprep.subr.mxu0 %v714
        %759 = vmatpush1.msra.mxu0 %v713
        %760 = vmatprep.subr.mxu0 %v744
        %761 = vmatpush1.msra.mxu0 %v741
        %762 = vmatprep.subr.mxu0 0.0
        %763 = vmatpush1.msra.mxu0 0.0
        %764 = vmatprep.subr.mxu0 0.0
        %765 = vmatpush1.msra.mxu0 0.0
        %766 = vmatprep.subr.mxu0 0.0
        %767 = vmatpush1.msra.mxu0 0.0
        %768 = vmatprep.subr.mxu0 0.0
        %769 = vmatpush1.msra.mxu0 0.0
        %770 = vmatprep.subr.mxu0 0.0
        %771 = vmatpush1.msra.mxu0 0.0
        %772 = vmatprep.subr.mxu0 0.0
        %773 = vmatpush1.msra.mxu0 0.0
        %774 = vmatprep.subr.mxu0 0.0
        %775 = vmatpush1.msra.mxu0 0.0
        %776 = vmatprep.subr.mxu0 0.0
        %777 = vmatpush1.msra.mxu0 0.0
        %778 = vmatprep.subr.mxu0 0.0
        %779 = vmatpush1.msra.mxu0 0.0
        %780 = vmatprep.subr.mxu0 0.0
        %781 = vmatpush1.msra.mxu0 0.0
        %782 = vmatprep.subr.mxu0 0.0
        %783 = vmatpush1.msra.mxu0 0.0
        %784 = vmatprep.subr.mxu0 0.0
        %785 = vmatpush1.msra.mxu0 0.0
        %786 = vmatprep.subr.mxu0 0.0
        %787 = vmatpush1.msra.mxu0 0.0
        %788 = vmatprep.subr.mxu0 0.0
        %789 = vmatpush1.msra.mxu0 0.0
        %790 = vmatprep.subr.mxu0 0.0
        %791 = vmatpush1.msra.mxu0 0.0
        %792 = vmatprep.subr.mxu0 0.0
        %793 = vmatpush1.msra.mxu0 0.0
        %794 = vmatprep.subr.mxu0 0.0
        %795 = vmatpush1.msra.mxu0 0.0
        %796 = vmatprep.subr.mxu0 0.0
        %797 = vmatpush1.msra.mxu0 0.0
        %798 = vmatprep.subr.mxu0 0.0
        %799 = vmatpush1.msra.mxu0 0.0
        %800 = vmatprep.subr.mxu0 0.0
        %801 = vmatpush1.msra.mxu0 0.0
        %802 = vmatprep.subr.mxu0 0.0
        %803 = vmatpush1.msra.mxu0 0.0
        %804 = vmatprep.subr.mxu0 0.0
        %805 = vmatpush1.msra.mxu0 0.0
        %806 = vmatprep.subr.mxu0 0.0
        %807 = vmatpush1.msra.mxu0 0.0
        %808 = vmatprep.subr.mxu0 0.0
        %809 = vmatpush1.msra.mxu0 0.0
        %810 = vmatprep.mubr.f32.mxu0 0.0
        %811 = vmatmul.mubr.f32.gmra.mrb[0].mxu0 %v731
        %v812 = vpop.f32.mrb[0].mxu0
        %v813 = vadd.f32 %v722, %v812
        %v814 = vpop.f32.mrb[0].mxu0
        %v815 = vadd.f32 %v726, %v814
        %816 = vmatprep.mubr.f32.mxu0 0.0
        %817 = vmatmul.mubr.f32.gmra.mrb[0].mxu0 %v734
        %v818 = vpop.f32.mrb[0].mxu0
        %v819 = vadd.f32 %v722, %v818
        %v820 = vpop.f32.mrb[0].mxu0
        %v821 = vadd.f32 %v726, %v820
        %822 = vmatprep.mubr.f32.mxu0 0.0
        %823 = vmatmul.mubr.f32.gmra.mrb[0].mxu0 %v737
        %v824 = vpop.f32.mrb[0].mxu0
        %v825 = vadd.f32 %v722, %v824
        %v826 = vpop.f32.mrb[0].mxu0
        %v827 = vadd.f32 %v726, %v826
        %828 = vdwg.mxu0
        %s829 = scalar_lea.vmem [#allocation2], 128
        %v830 = vld [vmem:[%s829] sm:$0xff]
        %v831 = vld [vmem:[%s829 + $0x8] sm:$0xff]
        %v832 = vld [vmem:[%s829 + $0x10] sm:$0xff]
        %v833 = vld [vmem:[%s829 + $0x18] sm:$0xff]
        %v834 = vld [vmem:[%s829 + $0x20] sm:$0xff]
        %v835 = vld [vmem:[%s829 + $0x28] sm:$0xff]
        %v836 = vld [vmem:[%s829 + $0x30] sm:$0xff]
        %v837 = vld [vmem:[%s829 + $0x38] sm:$0xff]
        %v838 = vld [vmem:[%s829 + $0x40] sm:$0xff]
        %v839 = vld [vmem:[%s829 + $0x48] sm:$0xff]
        %v840 = vld [vmem:[%s829 + $0x50] sm:$0xff]
        %v841 = vld [vmem:[%s829 + $0x58] sm:$0xff]
        %v842 = vld [vmem:[%s829 + $0x60] sm:$0xff]
        %v843 = vld [vmem:[%s829 + $0x68] sm:$0xff]
        %v844 = vld [vmem:[%s829 + $0x70] sm:$0xf]
        %v845 = vld [vmem:[%s829 + $0x78] sm:$0xf]
        %vm846 = vcmask 1046528
        %v847 = vrot.slane %v698, 1
        %v848 = vrot.slane %v699, 1
        %v849 = vsel %vm846, %v847, %v848
        %v850 = vrot.slane %v700, 1
        %v851 = vsel %vm846, %v848, %v850
        %v852 = vsel %vm729, %v849, 0
        %v854 = vsel %vm729, %v851, 0
        %v856 = vsel %vm729, %v850, 0
        %v859 = vsel %vm739, %v844, 0
        %v862 = vsel %vm739, %v845, 0
        %864 = vmatprep.subr.mxu0 %v831
        %865 = vmatpush1.msra.mxu0 %v830
        %866 = vmatprep.subr.mxu0 %v833
        %867 = vmatpush1.msra.mxu0 %v832
        %868 = vmatprep.subr.mxu0 %v835
        %869 = vmatpush1.msra.mxu0 %v834
        %870 = vmatprep.subr.mxu0 %v837
        %871 = vmatpush1.msra.mxu0 %v836
        %872 = vmatprep.subr.mxu0 %v839
        %873 = vmatpush1.msra.mxu0 %v838
        %874 = vmatprep.subr.mxu0 %v841
        %875 = vmatpush1.msra.mxu0 %v840
        %876 = vmatprep.subr.mxu0 %v843
        %877 = vmatpush1.msra.mxu0 %v842
        %878 = vmatprep.subr.mxu0 %v862
        %879 = vmatpush1.msra.mxu0 %v859
        %880 = vmatprep.subr.mxu0 0.0
        %881 = vmatpush1.msra.mxu0 0.0
        %882 = vmatprep.subr.mxu0 0.0
        %883 = vmatpush1.msra.mxu0 0.0
        %884 = vmatprep.subr.mxu0 0.0
        %885 = vmatpush1.msra.mxu0 0.0
        %886 = vmatprep.subr.mxu0 0.0
        %887 = vmatpush1.msra.mxu0 0.0
        %888 = vmatprep.subr.mxu0 0.0
        %889 = vmatpush1.msra.mxu0 0.0
        %890 = vmatprep.subr.mxu0 0.0
        %891 = vmatpush1.msra.mxu0 0.0
        %892 = vmatprep.subr.mxu0 0.0
        %893 = vmatpush1.msra.mxu0 0.0
        %894 = vmatprep.subr.mxu0 0.0
        %895 = vmatpush1.msra.mxu0 0.0
        %896 = vmatprep.subr.mxu0 0.0
        %897 = vmatpush1.msra.mxu0 0.0
        %898 = vmatprep.subr.mxu0 0.0
        %899 = vmatpush1.msra.mxu0 0.0
        %900 = vmatprep.subr.mxu0 0.0
        %901 = vmatpush1.msra.mxu0 0.0
        %902 = vmatprep.subr.mxu0 0.0
        %903 = vmatpush1.msra.mxu0 0.0
        %904 = vmatprep.subr.mxu0 0.0
        %905 = vmatpush1.msra.mxu0 0.0
        %906 = vmatprep.subr.mxu0 0.0
        %907 = vmatpush1.msra.mxu0 0.0
        %908 = vmatprep.subr.mxu0 0.0
        %909 = vmatpush1.msra.mxu0 0.0
        %910 = vmatprep.subr.mxu0 0.0
        %911 = vmatpush1.msra.mxu0 0.0
        %912 = vmatprep.subr.mxu0 0.0
        %913 = vmatpush1.msra.mxu0 0.0
        %914 = vmatprep.subr.mxu0 0.0
        %915 = vmatpush1.msra.mxu0 0.0
        %916 = vmatprep.subr.mxu0 0.0
        %917 = vmatpush1.msra.mxu0 0.0
        %918 = vmatprep.subr.mxu0 0.0
        %919 = vmatpush1.msra.mxu0 0.0
        %920 = vmatprep.subr.mxu0 0.0
        %921 = vmatpush1.msra.mxu0 0.0
        %922 = vmatprep.subr.mxu0 0.0
        %923 = vmatpush1.msra.mxu0 0.0
        %924 = vmatprep.subr.mxu0 0.0
        %925 = vmatpush1.msra.mxu0 0.0
        %926 = vmatprep.subr.mxu0 0.0
        %927 = vmatpush1.msra.mxu0 0.0
        %928 = vmatprep.mubr.f32.mxu0 0.0
        %929 = vmatmul.mubr.f32.gmra.mrb[0].mxu0 %v852
        %v930 = vpop.f32.mrb[0].mxu0
        %v931 = vadd.f32 0.0, %v930
        %v932 = vpop.f32.mrb[0].mxu0
        %v933 = vadd.f32 0.0, %v932
        %934 = vmatprep.mubr.f32.mxu0 0.0
        %935 = vmatmul.mubr.f32.gmra.mrb[0].mxu0 %v854
        %v936 = vpop.f32.mrb[0].mxu0
        %v937 = vadd.f32 0.0, %v936
        %v938 = vpop.f32.mrb[0].mxu0
        %v939 = vadd.f32 0.0, %v938
        %940 = vmatprep.mubr.f32.mxu0 0.0
        %941 = vmatmul.mubr.f32.gmra.mrb[0].mxu0 %v856
        %v942 = vpop.f32.mrb[0].mxu0
        %v943 = vadd.f32 0.0, %v942
        %v944 = vpop.f32.mrb[0].mxu0
        %v945 = vadd.f32 0.0, %v944
        %946 = vdwg.mxu0
        %v947 = vadd.f32 %v813, %v931
        %v948 = vadd.f32 %v815, %v933
        %v949 = vadd.f32 %v819, %v937
        %v950 = vadd.f32 %v821, %v939
        %v951 = vadd.f32 %v825, %v943
        %v952 = vadd.f32 %v827, %v945
        %s953 = scalar_lea.vmem [#allocation2], 256
        %v954 = vld [vmem:[%s953] sm:$0xff]
        %v955 = vld [vmem:[%s953 + $0x8] sm:$0xff]
        %v956 = vld [vmem:[%s953 + $0x10] sm:$0xff]
        %v957 = vld [vmem:[%s953 + $0x18] sm:$0xff]
        %v958 = vld [vmem:[%s953 + $0x20] sm:$0xff]
        %v959 = vld [vmem:[%s953 + $0x28] sm:$0xff]
        %v960 = vld [vmem:[%s953 + $0x30] sm:$0xff]
        %v961 = vld [vmem:[%s953 + $0x38] sm:$0xff]
        %v962 = vld [vmem:[%s953 + $0x40] sm:$0xff]
        %v963 = vld [vmem:[%s953 + $0x48] sm:$0xff]
        %v964 = vld [vmem:[%s953 + $0x50] sm:$0xff]
        %v965 = vld [vmem:[%s953 + $0x58] sm:$0xff]
        %v966 = vld [vmem:[%s953 + $0x60] sm:$0xff]
        %v967 = vld [vmem:[%s953 + $0x68] sm:$0xff]
        %v968 = vld [vmem:[%s953 + $0x70] sm:$0xf]
        %v969 = vld [vmem:[%s953 + $0x78] sm:$0xf]
        %vm970 = vcmask 1045504
        %v971 = vrot.slane %v698, 2
        %v972 = vrot.slane %v699, 2
        %v973 = vsel %vm970, %v971, %v972
        %v974 = vrot.slane %v700, 2
        %v975 = vsel %vm970, %v972, %v974
        %v976 = vsel %vm729, %v973, 0
        %v978 = vsel %vm729, %v975, 0
        %v980 = vsel %vm729, %v974, 0
        %v983 = vsel %vm739, %v968, 0
        %v986 = vsel %vm739, %v969, 0
        %988 = vmatprep.subr.mxu0 %v955
        %989 = vmatpush1.msra.mxu0 %v954
        %990 = vmatprep.subr.mxu0 %v957
        %991 = vmatpush1.msra.mxu0 %v956
        %992 = vmatprep.subr.mxu0 %v959
        %993 = vmatpush1.msra.mxu0 %v958
        %994 = vmatprep.subr.mxu0 %v961
        %995 = vmatpush1.msra.mxu0 %v960
        %996 = vmatprep.subr.mxu0 %v963
        %997 = vmatpush1.msra.mxu0 %v962
        %998 = vmatprep.subr.mxu0 %v965
        %999 = vmatpush1.msra.mxu0 %v964
        %1000 = vmatprep.subr.mxu0 %v967
        %1001 = vmatpush1.msra.mxu0 %v966
        %1002 = vmatprep.subr.mxu0 %v986
        %1003 = vmatpush1.msra.mxu0 %v983
        %1004 = vmatprep.subr.mxu0 0.0
        %1005 = vmatpush1.msra.mxu0 0.0
        %1006 = vmatprep.subr.mxu0 0.0
        %1007 = vmatpush1.msra.mxu0 0.0
        %1008 = vmatprep.subr.mxu0 0.0
        %1009 = vmatpush1.msra.mxu0 0.0
        %1010 = vmatprep.subr.mxu0 0.0
        %1011 = vmatpush1.msra.mxu0 0.0
        %1012 = vmatprep.subr.mxu0 0.0
        %1013 = vmatpush1.msra.mxu0 0.0
        %1014 = vmatprep.subr.mxu0 0.0
        %1015 = vmatpush1.msra.mxu0 0.0
        %1016 = vmatprep.subr.mxu0 0.0
        %1017 = vmatpush1.msra.mxu0 0.0
        %1018 = vmatprep.subr.mxu0 0.0
        %1019 = vmatpush1.msra.mxu0 0.0
        %1020 = vmatprep.subr.mxu0 0.0
        %1021 = vmatpush1.msra.mxu0 0.0
        %1022 = vmatprep.subr.mxu0 0.0
        %1023 = vmatpush1.msra.mxu0 0.0
        %1024 = vmatprep.subr.mxu0 0.0
        %1025 = vmatpush1.msra.mxu0 0.0
        %1026 = vmatprep.subr.mxu0 0.0
        %1027 = vmatpush1.msra.mxu0 0.0
        %1028 = vmatprep.subr.mxu0 0.0
        %1029 = vmatpush1.msra.mxu0 0.0
        %1030 = vmatprep.subr.mxu0 0.0
        %1031 = vmatpush1.msra.mxu0 0.0
        %1032 = vmatprep.subr.mxu0 0.0
        %1033 = vmatpush1.msra.mxu0 0.0
        %1034 = vmatprep.subr.mxu0 0.0
        %1035 = vmatpush1.msra.mxu0 0.0
        %1036 = vmatprep.subr.mxu0 0.0
        %1037 = vmatpush1.msra.mxu0 0.0
        %1038 = vmatprep.subr.mxu0 0.0
        %1039 = vmatpush1.msra.mxu0 0.0
        %1040 = vmatprep.subr.mxu0 0.0
        %1041 = vmatpush1.msra.mxu0 0.0
        %1042 = vmatprep.subr.mxu0 0.0
        %1043 = vmatpush1.msra.mxu0 0.0
        %1044 = vmatprep.subr.mxu0 0.0
        %1045 = vmatpush1.msra.mxu0 0.0
        %1046 = vmatprep.subr.mxu0 0.0
        %1047 = vmatpush1.msra.mxu0 0.0
        %1048 = vmatprep.subr.mxu0 0.0
        %1049 = vmatpush1.msra.mxu0 0.0
        %1050 = vmatprep.subr.mxu0 0.0
        %1051 = vmatpush1.msra.mxu0 0.0
        %1052 = vmatprep.mubr.f32.mxu0 0.0
        %1053 = vmatmul.mubr.f32.gmra.mrb[0].mxu0 %v976
        %v1054 = vpop.f32.mrb[0].mxu0
        %v1055 = vadd.f32 0.0, %v1054
        %v1056 = vpop.f32.mrb[0].mxu0
        %v1057 = vadd.f32 0.0, %v1056
        %1058 = vmatprep.mubr.f32.mxu0 0.0
        %1059 = vmatmul.mubr.f32.gmra.mrb[0].mxu0 %v978
        %v1060 = vpop.f32.mrb[0].mxu0
        %v1061 = vadd.f32 0.0, %v1060
        %v1062 = vpop.f32.mrb[0].mxu0
        %v1063 = vadd.f32 0.0, %v1062
        %1064 = vmatprep.mubr.f32.mxu0 0.0
        %1065 = vmatmul.mubr.f32.gmra.mrb[0].mxu0 %v980
        %v1066 = vpop.f32.mrb[0].mxu0
        %v1067 = vadd.f32 0.0, %v1066
        %v1068 = vpop.f32.mrb[0].mxu0
        %v1069 = vadd.f32 0.0, %v1068
        %1070 = vdwg.mxu0
        %v1071 = vadd.f32 %v947, %v1055
        %v1072 = vadd.f32 %v948, %v1057
        %v1073 = vadd.f32 %v949, %v1061
        %v1074 = vadd.f32 %v950, %v1063
        %v1075 = vadd.f32 %v951, %v1067
        %v1076 = vadd.f32 %v952, %v1069
        %v1077 = vld [vmem:[%s3] sm:$0xff]
        %v1078 = vld [vmem:[%s3 + $0x8] sm:$0xff]
        %v1079 = vld [vmem:[%s3 + $0x10] sm:$0xff]
        %v1080 = vld [vmem:[%s3 + $0x18] sm:$0xff]
        %v1081 = vld [vmem:[%s3 + $0x20] sm:$0xff]
        %v1082 = vld [vmem:[%s3 + $0x28] sm:$0xff]
        %v1083 = vld [vmem:[%s3 + $0x30] sm:$0xff]
        %v1084 = vld [vmem:[%s3 + $0x38] sm:$0xff]
        %v1085 = vld [vmem:[%s3 + $0x40] sm:$0xff]
        %v1086 = vld [vmem:[%s3 + $0x48] sm:$0xff]
        %v1087 = vld [vmem:[%s3 + $0x50] sm:$0xff]
        %v1088 = vld [vmem:[%s3 + $0x58] sm:$0xff]
        %v1089 = vld [vmem:[%s3 + $0x60] sm:$0xff]
        %v1090 = vld [vmem:[%s3 + $0x68] sm:$0xff]
        %v1091 = vld [vmem:[%s3 + $0x70] sm:$0xff]
        %v1092 = vld [vmem:[%s3 + $0x78] sm:$0xff]
        %v1093 = vld [vmem:[%s3 + $0x80] sm:$0xff]
        %v1094 = vld [vmem:[%s3 + $0x88] sm:$0xff]
        %v1095 = vld [vmem:[%s4] sm:$0x1]
        %v1097 = vlaneseq
        %v1098 = vshrl.u32 %v1097, 7
        %v1099 = vsub.s32 0, %v1098
        %v1100 = vrot.slane %v1095, %v1099
        %vm1102 = vcmask 130048
        %v1104 = vsel %vm1102, %v1072, 0
        %v1107 = vsel %vm1102, %v1074, 0
        %1109 = vmatprep.subr.mxu0 0.0
        %1110 = vmatpush1.msra.mxu0 %v1077
        %1111 = vmatprep.subr.mxu0 0.0
        %1112 = vmatpush1.msra.mxu0 %v1078
        %1113 = vmatprep.subr.mxu0 0.0
        %1114 = vmatpush1.msra.mxu0 %v1079
        %1115 = vmatprep.subr.mxu0 0.0
        %1116 = vmatpush1.msra.mxu0 %v1080
        %1117 = vmatprep.subr.mxu0 0.0
        %1118 = vmatpush1.msra.mxu0 %v1081
        %1119 = vmatprep.subr.mxu0 0.0
        %1120 = vmatpush1.msra.mxu0 %v1082
        %1121 = vmatprep.subr.mxu0 0.0
        %1122 = vmatpush1.msra.mxu0 %v1083
        %1123 = vmatprep.subr.mxu0 0.0
        %1124 = vmatpush1.msra.mxu0 %v1084
        %1125 = vmatprep.subr.mxu0 0.0
        %1126 = vmatpush1.msra.mxu0 %v1085
        %1127 = vmatprep.subr.mxu0 0.0
        %1128 = vmatpush1.msra.mxu0 %v1086
        %1129 = vmatprep.subr.mxu0 0.0
        %1130 = vmatpush1.msra.mxu0 %v1087
        %1131 = vmatprep.subr.mxu0 0.0
        %1132 = vmatpush1.msra.mxu0 %v1088
        %1133 = vmatprep.subr.mxu0 0.0
        %1134 = vmatpush1.msra.mxu0 %v1089
        %1135 = vmatprep.subr.mxu0 0.0
        %1136 = vmatpush1.msra.mxu0 %v1090
        %1137 = vmatprep.subr.mxu0 0.0
        %1138 = vmatpush1.msra.mxu0 %v1091
        %1139 = vmatprep.subr.mxu0 0.0
        %1140 = vmatpush1.msra.mxu0 %v1092
        %1141 = vmatprep.subr.mxu0 0.0
        %1142 = vmatpush1.msra.mxu0 %v1093
        %1143 = vmatprep.subr.mxu0 0.0
        %1144 = vmatpush1.msra.mxu0 %v1094
        %1145 = vmatprep.subr.mxu0 0.0
        %1146 = vmatpush1.msra.mxu0 0.0
        %1147 = vmatprep.subr.mxu0 0.0
        %1148 = vmatpush1.msra.mxu0 0.0
        %1149 = vmatprep.subr.mxu0 0.0
        %1150 = vmatpush1.msra.mxu0 0.0
        %1151 = vmatprep.subr.mxu0 0.0
        %1152 = vmatpush1.msra.mxu0 0.0
        %1153 = vmatprep.subr.mxu0 0.0
        %1154 = vmatpush1.msra.mxu0 0.0
        %1155 = vmatprep.subr.mxu0 0.0
        %1156 = vmatpush1.msra.mxu0 0.0
        %1157 = vmatprep.subr.mxu0 0.0
        %1158 = vmatpush1.msra.mxu0 0.0
        %1159 = vmatprep.subr.mxu0 0.0
        %1160 = vmatpush1.msra.mxu0 0.0
        %1161 = vmatprep.subr.mxu0 0.0
        %1162 = vmatpush1.msra.mxu0 0.0
        %1163 = vmatprep.subr.mxu0 0.0
        %1164 = vmatpush1.msra.mxu0 0.0
        %1165 = vmatprep.subr.mxu0 0.0
        %1166 = vmatpush1.msra.mxu0 0.0
        %1167 = vmatprep.subr.mxu0 0.0
        %1168 = vmatpush1.msra.mxu0 0.0
        %1169 = vmatprep.subr.mxu0 0.0
        %1170 = vmatpush1.msra.mxu0 0.0
        %1171 = vmatprep.subr.mxu0 0.0
        %1172 = vmatpush1.msra.mxu0 0.0
        %1173 = vmatprep.mubr.f32.mxu0 %v1104
        %1174 = vmatmul.mubr.f32.gmra.mrb[0].mxu0 %v1071
        %v1175 = vpop.f32.mrb[0].mxu0
        %v1176 = vadd.f32 %v1100, %v1175
        %v1177 = vpop.f32.mrb[0].mxu0
        %1178 = vmatprep.mubr.f32.mxu0 %v1107
        %1179 = vmatmul.mubr.f32.gmra.mrb[0].mxu0 %v1073
        %v1180 = vpop.f32.mrb[0].mxu0
        %v1181 = vadd.f32 %v1100, %v1180
        %v1182 = vpop.f32.mrb[0].mxu0
        %1183 = vdwg.mxu0
        %s1184 = scalar_lea.vmem %s3, 144
        %v1185 = vld [vmem:[%s1184] sm:$0xff]
        %v1186 = vld [vmem:[%s1184 + $0x8] sm:$0xff]
        %v1187 = vld [vmem:[%s1184 + $0x10] sm:$0xff]
        %v1188 = vld [vmem:[%s1184 + $0x18] sm:$0xff]
        %v1189 = vld [vmem:[%s1184 + $0x20] sm:$0xff]
        %v1190 = vld [vmem:[%s1184 + $0x28] sm:$0xff]
        %v1191 = vld [vmem:[%s1184 + $0x30] sm:$0xff]
        %v1192 = vld [vmem:[%s1184 + $0x38] sm:$0xff]
        %v1193 = vld [vmem:[%s1184 + $0x40] sm:$0xff]
        %v1194 = vld [vmem:[%s1184 + $0x48] sm:$0xff]
        %v1195 = vld [vmem:[%s1184 + $0x50] sm:$0xff]
        %v1196 = vld [vmem:[%s1184 + $0x58] sm:$0xff]
        %v1197 = vld [vmem:[%s1184 + $0x60] sm:$0xff]
        %v1198 = vld [vmem:[%s1184 + $0x68] sm:$0xff]
        %v1199 = vld [vmem:[%s1184 + $0x70] sm:$0xff]
        %v1200 = vld [vmem:[%s1184 + $0x78] sm:$0xff]
        %v1201 = vld [vmem:[%s1184 + $0x80] sm:$0xff]
        %v1202 = vld [vmem:[%s1184 + $0x88] sm:$0xff]
        %v1207 = vrot.slane %v1071, 1
        %v1208 = vrot.slane %v1073, 1
        %v1209 = vsel %vm846, %v1207, %v1208
        %v1210 = vrot.slane %v1072, 1
        %v1211 = vrot.slane %v1074, 1
        %v1212 = vsel %vm846, %v1210, %v1211
        %v1213 = vrot.slane %v1075, 1
        %v1214 = vsel %vm846, %v1208, %v1213
        %v1215 = vrot.slane %v1076, 1
        %v1216 = vsel %vm846, %v1211, %v1215
        %v1219 = vsel %vm1102, %v1212, 0
        %v1221 = vsel %vm1102, %v1216, 0
        %1223 = vmatprep.subr.mxu0 0.0
        %1224 = vmatpush1.msra.mxu0 %v1185
        %1225 = vmatprep.subr.mxu0 0.0
        %1226 = vmatpush1.msra.mxu0 %v1186
        %1227 = vmatprep.subr.mxu0 0.0
        %1228 = vmatpush1.msra.mxu0 %v1187
        %1229 = vmatprep.subr.mxu0 0.0
        %1230 = vmatpush1.msra.mxu0 %v1188
        %1231 = vmatprep.subr.mxu0 0.0
        %1232 = vmatpush1.msra.mxu0 %v1189
        %1233 = vmatprep.subr.mxu0 0.0
        %1234 = vmatpush1.msra.mxu0 %v1190
        %1235 = vmatprep.subr.mxu0 0.0
        %1236 = vmatpush1.msra.mxu0 %v1191
        %1237 = vmatprep.subr.mxu0 0.0
        %1238 = vmatpush1.msra.mxu0 %v1192
        %1239 = vmatprep.subr.mxu0 0.0
        %1240 = vmatpush1.msra.mxu0 %v1193
        %1241 = vmatprep.subr.mxu0 0.0
        %1242 = vmatpush1.msra.mxu0 %v1194
        %1243 = vmatprep.subr.mxu0 0.0
        %1244 = vmatpush1.msra.mxu0 %v1195
        %1245 = vmatprep.subr.mxu0 0.0
        %1246 = vmatpush1.msra.mxu0 %v1196
        %1247 = vmatprep.subr.mxu0 0.0
        %1248 = vmatpush1.msra.mxu0 %v1197
        %1249 = vmatprep.subr.mxu0 0.0
        %1250 = vmatpush1.msra.mxu0 %v1198
        %1251 = vmatprep.subr.mxu0 0.0
        %1252 = vmatpush1.msra.mxu0 %v1199
        %1253 = vmatprep.subr.mxu0 0.0
        %1254 = vmatpush1.msra.mxu0 %v1200
        %1255 = vmatprep.subr.mxu0 0.0
        %1256 = vmatpush1.msra.mxu0 %v1201
        %1257 = vmatprep.subr.mxu0 0.0
        %1258 = vmatpush1.msra.mxu0 %v1202
        %1259 = vmatprep.subr.mxu0 0.0
        %1260 = vmatpush1.msra.mxu0 0.0
        %1261 = vmatprep.subr.mxu0 0.0
        %1262 = vmatpush1.msra.mxu0 0.0
        %1263 = vmatprep.subr.mxu0 0.0
        %1264 = vmatpush1.msra.mxu0 0.0
        %1265 = vmatprep.subr.mxu0 0.0
        %1266 = vmatpush1.msra.mxu0 0.0
        %1267 = vmatprep.subr.mxu0 0.0
        %1268 = vmatpush1.msra.mxu0 0.0
        %1269 = vmatprep.subr.mxu0 0.0
        %1270 = vmatpush1.msra.mxu0 0.0
        %1271 = vmatprep.subr.mxu0 0.0
        %1272 = vmatpush1.msra.mxu0 0.0
        %1273 = vmatprep.subr.mxu0 0.0
        %1274 = vmatpush1.msra.mxu0 0.0
        %1275 = vmatprep.subr.mxu0 0.0
        %1276 = vmatpush1.msra.mxu0 0.0
        %1277 = vmatprep.subr.mxu0 0.0
        %1278 = vmatpush1.msra.mxu0 0.0
        %1279 = vmatprep.subr.mxu0 0.0
        %1280 = vmatpush1.msra.mxu0 0.0
        %1281 = vmatprep.subr.mxu0 0.0
        %1282 = vmatpush1.msra.mxu0 0.0
        %1283 = vmatprep.subr.mxu0 0.0
        %1284 = vmatpush1.msra.mxu0 0.0
        %1285 = vmatprep.subr.mxu0 0.0
        %1286 = vmatpush1.msra.mxu0 0.0
        %1287 = vmatprep.mubr.f32.mxu0 %v1219
        %1288 = vmatmul.mubr.f32.gmra.mrb[0].mxu0 %v1209
        %v1289 = vpop.f32.mrb[0].mxu0
        %v1290 = vadd.f32 0.0, %v1289
        %v1291 = vpop.f32.mrb[0].mxu0
        %1292 = vmatprep.mubr.f32.mxu0 %v1221
        %1293 = vmatmul.mubr.f32.gmra.mrb[0].mxu0 %v1214
        %v1294 = vpop.f32.mrb[0].mxu0
        %v1295 = vadd.f32 0.0, %v1294
        %v1296 = vpop.f32.mrb[0].mxu0
        %1297 = vdwg.mxu0
        %v1298 = vadd.f32 %v1176, %v1290
        %v1299 = vadd.f32 %v1181, %v1295
        %s1300 = scalar_lea.vmem %s3, 288
        %v1301 = vld [vmem:[%s1300] sm:$0xff]
        %v1302 = vld [vmem:[%s1300 + $0x8] sm:$0xff]
        %v1303 = vld [vmem:[%s1300 + $0x10] sm:$0xff]
        %v1304 = vld [vmem:[%s1300 + $0x18] sm:$0xff]
        %v1305 = vld [vmem:[%s1300 + $0x20] sm:$0xff]
        %v1306 = vld [vmem:[%s1300 + $0x28] sm:$0xff]
        %v1307 = vld [vmem:[%s1300 + $0x30] sm:$0xff]
        %v1308 = vld [vmem:[%s1300 + $0x38] sm:$0xff]
        %v1309 = vld [vmem:[%s1300 + $0x40] sm:$0xff]
        %v1310 = vld [vmem:[%s1300 + $0x48] sm:$0xff]
        %v1311 = vld [vmem:[%s1300 + $0x50] sm:$0xff]
        %v1312 = vld [vmem:[%s1300 + $0x58] sm:$0xff]
        %v1313 = vld [vmem:[%s1300 + $0x60] sm:$0xff]
        %v1314 = vld [vmem:[%s1300 + $0x68] sm:$0xff]
        %v1315 = vld [vmem:[%s1300 + $0x70] sm:$0xff]
        %v1316 = vld [vmem:[%s1300 + $0x78] sm:$0xff]
        %v1317 = vld [vmem:[%s1300 + $0x80] sm:$0xff]
        %v1318 = vld [vmem:[%s1300 + $0x88] sm:$0xff]
        %v1319 = vrot.slane %v1071, 2
        %v1320 = vrot.slane %v1073, 2
        %v1321 = vsel %vm970, %v1319, %v1320
        %v1322 = vrot.slane %v1072, 2
        %v1323 = vrot.slane %v1074, 2
        %v1324 = vsel %vm970, %v1322, %v1323
        %v1325 = vrot.slane %v1075, 2
        %v1326 = vsel %vm970, %v1320, %v1325
        %v1327 = vrot.slane %v1076, 2
        %v1328 = vsel %vm970, %v1323, %v1327
        %v1331 = vsel %vm1102, %v1324, 0
        %v1333 = vsel %vm1102, %v1328, 0
        %1335 = vmatprep.subr.mxu0 0.0
        %1336 = vmatpush1.msra.mxu0 %v1301
        %1337 = vmatprep.subr.mxu0 0.0
        %1338 = vmatpush1.msra.mxu0 %v1302
        %1339 = vmatprep.subr.mxu0 0.0
        %1340 = vmatpush1.msra.mxu0 %v1303
        %1341 = vmatprep.subr.mxu0 0.0
        %1342 = vmatpush1.msra.mxu0 %v1304
        %1343 = vmatprep.subr.mxu0 0.0
        %1344 = vmatpush1.msra.mxu0 %v1305
        %1345 = vmatprep.subr.mxu0 0.0
        %1346 = vmatpush1.msra.mxu0 %v1306
        %1347 = vmatprep.subr.mxu0 0.0
        %1348 = vmatpush1.msra.mxu0 %v1307
        %1349 = vmatprep.subr.mxu0 0.0
        %1350 = vmatpush1.msra.mxu0 %v1308
        %1351 = vmatprep.subr.mxu0 0.0
        %1352 = vmatpush1.msra.mxu0 %v1309
        %1353 = vmatprep.subr.mxu0 0.0
        %1354 = vmatpush1.msra.mxu0 %v1310
        %1355 = vmatprep.subr.mxu0 0.0
        %1356 = vmatpush1.msra.mxu0 %v1311
        %1357 = vmatprep.subr.mxu0 0.0
        %1358 = vmatpush1.msra.mxu0 %v1312
        %1359 = vmatprep.subr.mxu0 0.0
        %1360 = vmatpush1.msra.mxu0 %v1313
        %1361 = vmatprep.subr.mxu0 0.0
        %1362 = vmatpush1.msra.mxu0 %v1314
        %1363 = vmatprep.subr.mxu0 0.0
        %1364 = vmatpush1.msra.mxu0 %v1315
        %1365 = vmatprep.subr.mxu0 0.0
        %1366 = vmatpush1.msra.mxu0 %v1316
        %1367 = vmatprep.subr.mxu0 0.0
        %1368 = vmatpush1.msra.mxu0 %v1317
        %1369 = vmatprep.subr.mxu0 0.0
        %1370 = vmatpush1.msra.mxu0 %v1318
        %1371 = vmatprep.subr.mxu0 0.0
        %1372 = vmatpush1.msra.mxu0 0.0
        %1373 = vmatprep.subr.mxu0 0.0
        %1374 = vmatpush1.msra.mxu0 0.0
        %1375 = vmatprep.subr.mxu0 0.0
        %1376 = vmatpush1.msra.mxu0 0.0
        %1377 = vmatprep.subr.mxu0 0.0
        %1378 = vmatpush1.msra.mxu0 0.0
        %1379 = vmatprep.subr.mxu0 0.0
        %1380 = vmatpush1.msra.mxu0 0.0
        %1381 = vmatprep.subr.mxu0 0.0
        %1382 = vmatpush1.msra.mxu0 0.0
        %1383 = vmatprep.subr.mxu0 0.0
        %1384 = vmatpush1.msra.mxu0 0.0
        %1385 = vmatprep.subr.mxu0 0.0
        %1386 = vmatpush1.msra.mxu0 0.0
        %1387 = vmatprep.subr.mxu0 0.0
        %1388 = vmatpush1.msra.mxu0 0.0
        %1389 = vmatprep.subr.mxu0 0.0
        %1390 = vmatpush1.msra.mxu0 0.0
        %1391 = vmatprep.subr.mxu0 0.0
        %1392 = vmatpush1.msra.mxu0 0.0
        %1393 = vmatprep.subr.mxu0 0.0
        %1394 = vmatpush1.msra.mxu0 0.0
        %1395 = vmatprep.subr.mxu0 0.0
        %1396 = vmatpush1.msra.mxu0 0.0
        %1397 = vmatprep.subr.mxu0 0.0
        %1398 = vmatpush1.msra.mxu0 0.0
        %1399 = vmatprep.mubr.f32.mxu0 %v1331
        %1400 = vmatmul.mubr.f32.gmra.mrb[0].mxu0 %v1321
        %v1401 = vpop.f32.mrb[0].mxu0
        %v1402 = vadd.f32 0.0, %v1401
        %v1403 = vpop.f32.mrb[0].mxu0
        %1404 = vmatprep.mubr.f32.mxu0 %v1333
        %1405 = vmatmul.mubr.f32.gmra.mrb[0].mxu0 %v1326
        %v1406 = vpop.f32.mrb[0].mxu0
        %v1407 = vadd.f32 0.0, %v1406
        %v1408 = vpop.f32.mrb[0].mxu0
        %1409 = vdwg.mxu0
        %v1410 = vadd.f32 %v1298, %v1402
        %v1411 = vadd.f32 %v1299, %v1407
        %v1412 = vmax.f32 %v1410, 0.0
        %v1413 = vmax.f32 %v1411, 0.0
        %v1414 = vld [vmem:[%s5] sm:$0xff]
        %v1415 = vld [vmem:[%s5 + $0x8] sm:$0xff]
        %v1416 = vld [vmem:[%s5 + $0x10] sm:$0xff]
        %v1417 = vld [vmem:[%s5 + $0x18] sm:$0xff]
        %v1418 = vld [vmem:[%s5 + $0x20] sm:$0xff]
        %v1419 = vld [vmem:[%s5 + $0x28] sm:$0xff]
        %v1420 = vld [vmem:[%s5 + $0x30] sm:$0xff]
        %v1421 = vld [vmem:[%s5 + $0x38] sm:$0xff]
        %v1422 = vld [vmem:[%s5 + $0x40] sm:$0xff]
        %v1423 = vld [vmem:[%s5 + $0x48] sm:$0xff]
        %v1424 = vld [vmem:[%s5 + $0x50] sm:$0xff]
        %v1425 = vld [vmem:[%s5 + $0x58] sm:$0xff]
        %v1426 = vld [vmem:[%s5 + $0x60] sm:$0xff]
        %v1427 = vld [vmem:[%s5 + $0x68] sm:$0xff]
        %v1428 = vld [vmem:[%s5 + $0x70] sm:$0xff]
        %v1429 = vld [vmem:[%s5 + $0x78] sm:$0xff]
        %v1430 = vld [vmem:[%s5 + $0x80] sm:$0xff]
        %v1431 = vld [vmem:[%s5 + $0x88] sm:$0xff]
        %v1432 = vld [vmem:[%s5 + $0x90] sm:$0xff]
        %v1433 = vld [vmem:[%s5 + $0x98] sm:$0xff]
        %v1434 = vld [vmem:[%s5 + $0xa0] sm:$0xff]
        %v1435 = vld [vmem:[%s5 + $0xa8] sm:$0xff]
        %v1436 = vld [vmem:[%s5 + $0xb0] sm:$0xff]
        %v1437 = vld [vmem:[%s5 + $0xb8] sm:$0xff]
        %v1438 = vld [vmem:[%s5 + $0xc0] sm:$0xff]
        %v1439 = vld [vmem:[%s5 + $0xc8] sm:$0xff]
        %v1440 = vld [vmem:[%s5 + $0xd0] sm:$0xff]
        %v1441 = vld [vmem:[%s5 + $0xd8] sm:$0xff]
        %v1442 = vld [vmem:[%s5 + $0xe0] sm:$0xff]
        %v1443 = vld [vmem:[%s5 + $0xe8] sm:$0xff]
        %v1444 = vld [vmem:[%s5 + $0xf0] sm:$0xff]
        %v1445 = vld [vmem:[%s5 + $0xf8] sm:$0xff]
        %v1446 = vld [vmem:[%s6] sm:$0x3]
        %v1448 = vlaneseq
        %v1449 = vshrl.u32 %v1448, 7
        %v1450 = vsub.s32 0, %v1449
        %v1451 = vrot.slane %v1446, %v1450
        %v1452 = vlaneseq
        %v1453 = vshrl.u32 %v1452, 7
        %v1454 = vsub.s32 1, %v1453
        %v1455 = vrot.slane %v1446, %v1454
        %1458 = vmatprep.subr.mxu0 %v1415
        %1459 = vmatpush1.msra.mxu0 %v1414
        %1460 = vmatprep.subr.mxu0 %v1417
        %1461 = vmatpush1.msra.mxu0 %v1416
        %1462 = vmatprep.subr.mxu0 %v1419
        %1463 = vmatpush1.msra.mxu0 %v1418
        %1464 = vmatprep.subr.mxu0 %v1421
        %1465 = vmatpush1.msra.mxu0 %v1420
        %1466 = vmatprep.subr.mxu0 %v1423
        %1467 = vmatpush1.msra.mxu0 %v1422
        %1468 = vmatprep.subr.mxu0 %v1425
        %1469 = vmatpush1.msra.mxu0 %v1424
        %1470 = vmatprep.subr.mxu0 %v1427
        %1471 = vmatpush1.msra.mxu0 %v1426
        %1472 = vmatprep.subr.mxu0 %v1429
        %1473 = vmatpush1.msra.mxu0 %v1428
        %1474 = vmatprep.subr.mxu0 %v1431
        %1475 = vmatpush1.msra.mxu0 %v1430
        %1476 = vmatprep.subr.mxu0 %v1433
        %1477 = vmatpush1.msra.mxu0 %v1432
        %1478 = vmatprep.subr.mxu0 %v1435
        %1479 = vmatpush1.msra.mxu0 %v1434
        %1480 = vmatprep.subr.mxu0 %v1437
        %1481 = vmatpush1.msra.mxu0 %v1436
        %1482 = vmatprep.subr.mxu0 %v1439
        %1483 = vmatpush1.msra.mxu0 %v1438
        %1484 = vmatprep.subr.mxu0 %v1441
        %1485 = vmatpush1.msra.mxu0 %v1440
        %1486 = vmatprep.subr.mxu0 %v1443
        %1487 = vmatpush1.msra.mxu0 %v1442
        %1488 = vmatprep.subr.mxu0 %v1445
        %1489 = vmatpush1.msra.mxu0 %v1444
        %1490 = vmatprep.subr.mxu0 0.0
        %1491 = vmatpush1.msra.mxu0 0.0
        %1492 = vmatprep.subr.mxu0 0.0
        %1493 = vmatpush1.msra.mxu0 0.0
        %1494 = vmatprep.subr.mxu0 0.0
        %1495 = vmatpush1.msra.mxu0 0.0
        %1496 = vmatprep.subr.mxu0 0.0
        %1497 = vmatpush1.msra.mxu0 0.0
        %1498 = vmatprep.subr.mxu0 0.0
        %1499 = vmatpush1.msra.mxu0 0.0
        %1500 = vmatprep.subr.mxu0 0.0
        %1501 = vmatpush1.msra.mxu0 0.0
        %1502 = vmatprep.subr.mxu0 0.0
        %1503 = vmatpush1.msra.mxu0 0.0
        %1504 = vmatprep.subr.mxu0 0.0
        %1505 = vmatpush1.msra.mxu0 0.0
        %1506 = vmatprep.subr.mxu0 0.0
        %1507 = vmatpush1.msra.mxu0 0.0
        %1508 = vmatprep.subr.mxu0 0.0
        %1509 = vmatpush1.msra.mxu0 0.0
        %1510 = vmatprep.subr.mxu0 0.0
        %1511 = vmatpush1.msra.mxu0 0.0
        %1512 = vmatprep.subr.mxu0 0.0
        %1513 = vmatpush1.msra.mxu0 0.0
        %1514 = vmatprep.subr.mxu0 0.0
        %1515 = vmatpush1.msra.mxu0 0.0
        %1516 = vmatprep.subr.mxu0 0.0
        %1517 = vmatpush1.msra.mxu0 0.0
        %1518 = vmatprep.subr.mxu0 0.0
        %1519 = vmatpush1.msra.mxu0 0.0
        %1520 = vmatprep.subr.mxu0 0.0
        %1521 = vmatpush1.msra.mxu0 0.0
        %1522 = vmatprep.mubr.f32.mxu0 0.0
        %1523 = vmatmul.mubr.f32.gmra.mrb[0].mxu0 %v1412
        %v1524 = vpop.f32.mrb[0].mxu0
        %v1525 = vadd.f32 %v1451, %v1524
        %v1526 = vpop.f32.mrb[0].mxu0
        %v1527 = vadd.f32 %v1455, %v1526
        %1528 = vmatprep.mubr.f32.mxu0 0.0
        %1529 = vmatmul.mubr.f32.gmra.mrb[0].mxu0 %v1413
        %v1530 = vpop.f32.mrb[0].mxu0
        %v1531 = vadd.f32 %v1451, %v1530
        %v1532 = vpop.f32.mrb[0].mxu0
        %v1533 = vadd.f32 %v1455, %v1532
        %1534 = vdwg.mxu0
        %s1535 = scalar_lea.vmem %s5, 256
        %v1536 = vld [vmem:[%s1535] sm:$0xff]
        %v1537 = vld [vmem:[%s1535 + $0x8] sm:$0xff]
        %v1538 = vld [vmem:[%s1535 + $0x10] sm:$0xff]
        %v1539 = vld [vmem:[%s1535 + $0x18] sm:$0xff]
        %v1540 = vld [vmem:[%s1535 + $0x20] sm:$0xff]
        %v1541 = vld [vmem:[%s1535 + $0x28] sm:$0xff]
        %v1542 = vld [vmem:[%s1535 + $0x30] sm:$0xff]
        %v1543 = vld [vmem:[%s1535 + $0x38] sm:$0xff]
        %v1544 = vld [vmem:[%s1535 + $0x40] sm:$0xff]
        %v1545 = vld [vmem:[%s1535 + $0x48] sm:$0xff]
        %v1546 = vld [vmem:[%s1535 + $0x50] sm:$0xff]
        %v1547 = vld [vmem:[%s1535 + $0x58] sm:$0xff]
        %v1548 = vld [vmem:[%s1535 + $0x60] sm:$0xff]
        %v1549 = vld [vmem:[%s1535 + $0x68] sm:$0xff]
        %v1550 = vld [vmem:[%s1535 + $0x70] sm:$0xff]
        %v1551 = vld [vmem:[%s1535 + $0x78] sm:$0xff]
        %v1552 = vld [vmem:[%s1535 + $0x80] sm:$0xff]
        %v1553 = vld [vmem:[%s1535 + $0x88] sm:$0xff]
        %v1554 = vld [vmem:[%s1535 + $0x90] sm:$0xff]
        %v1555 = vld [vmem:[%s1535 + $0x98] sm:$0xff]
        %v1556 = vld [vmem:[%s1535 + $0xa0] sm:$0xff]
        %v1557 = vld [vmem:[%s1535 + $0xa8] sm:$0xff]
        %v1558 = vld [vmem:[%s1535 + $0xb0] sm:$0xff]
        %v1559 = vld [vmem:[%s1535 + $0xb8] sm:$0xff]
        %v1560 = vld [vmem:[%s1535 + $0xc0] sm:$0xff]
        %v1561 = vld [vmem:[%s1535 + $0xc8] sm:$0xff]
        %v1562 = vld [vmem:[%s1535 + $0xd0] sm:$0xff]
        %v1563 = vld [vmem:[%s1535 + $0xd8] sm:$0xff]
        %v1564 = vld [vmem:[%s1535 + $0xe0] sm:$0xff]
        %v1565 = vld [vmem:[%s1535 + $0xe8] sm:$0xff]
        %v1566 = vld [vmem:[%s1535 + $0xf0] sm:$0xff]
        %v1567 = vld [vmem:[%s1535 + $0xf8] sm:$0xff]
        %v1570 = vrot.slane %v1412, 1
        %v1571 = vrot.slane %v1413, 1
        %v1572 = vsel %vm846, %v1570, %v1571
        %1575 = vmatprep.subr.mxu0 %v1537
        %1576 = vmatpush1.msra.mxu0 %v1536
        %1577 = vmatprep.subr.mxu0 %v1539
        %1578 = vmatpush1.msra.mxu0 %v1538
        %1579 = vmatprep.subr.mxu0 %v1541
        %1580 = vmatpush1.msra.mxu0 %v1540
        %1581 = vmatprep.subr.mxu0 %v1543
        %1582 = vmatpush1.msra.mxu0 %v1542
        %1583 = vmatprep.subr.mxu0 %v1545
        %1584 = vmatpush1.msra.mxu0 %v1544
        %1585 = vmatprep.subr.mxu0 %v1547
        %1586 = vmatpush1.msra.mxu0 %v1546
        %1587 = vmatprep.subr.mxu0 %v1549
        %1588 = vmatpush1.msra.mxu0 %v1548
        %1589 = vmatprep.subr.mxu0 %v1551
        %1590 = vmatpush1.msra.mxu0 %v1550
        %1591 = vmatprep.subr.mxu0 %v1553
        %1592 = vmatpush1.msra.mxu0 %v1552
        %1593 = vmatprep.subr.mxu0 %v1555
        %1594 = vmatpush1.msra.mxu0 %v1554
        %1595 = vmatprep.subr.mxu0 %v1557
        %1596 = vmatpush1.msra.mxu0 %v1556
        %1597 = vmatprep.subr.mxu0 %v1559
        %1598 = vmatpush1.msra.mxu0 %v1558
        %1599 = vmatprep.subr.mxu0 %v1561
        %1600 = vmatpush1.msra.mxu0 %v1560
        %1601 = vmatprep.subr.mxu0 %v1563
        %1602 = vmatpush1.msra.mxu0 %v1562
        %1603 = vmatprep.subr.mxu0 %v1565
        %1604 = vmatpush1.msra.mxu0 %v1564
        %1605 = vmatprep.subr.mxu0 %v1567
        %1606 = vmatpush1.msra.mxu0 %v1566
        %1607 = vmatprep.subr.mxu0 0.0
        %1608 = vmatpush1.msra.mxu0 0.0
        %1609 = vmatprep.subr.mxu0 0.0
        %1610 = vmatpush1.msra.mxu0 0.0
        %1611 = vmatprep.subr.mxu0 0.0
        %1612 = vmatpush1.msra.mxu0 0.0
        %1613 = vmatprep.subr.mxu0 0.0
        %1614 = vmatpush1.msra.mxu0 0.0
        %1615 = vmatprep.subr.mxu0 0.0
        %1616 = vmatpush1.msra.mxu0 0.0
        %1617 = vmatprep.subr.mxu0 0.0
        %1618 = vmatpush1.msra.mxu0 0.0
        %1619 = vmatprep.subr.mxu0 0.0
        %1620 = vmatpush1.msra.mxu0 0.0
        %1621 = vmatprep.subr.mxu0 0.0
        %1622 = vmatpush1.msra.mxu0 0.0
        %1623 = vmatprep.subr.mxu0 0.0
        %1624 = vmatpush1.msra.mxu0 0.0
        %1625 = vmatprep.subr.mxu0 0.0
        %1626 = vmatpush1.msra.mxu0 0.0
        %1627 = vmatprep.subr.mxu0 0.0
        %1628 = vmatpush1.msra.mxu0 0.0
        %1629 = vmatprep.subr.mxu0 0.0
        %1630 = vmatpush1.msra.mxu0 0.0
        %1631 = vmatprep.subr.mxu0 0.0
        %1632 = vmatpush1.msra.mxu0 0.0
        %1633 = vmatprep.subr.mxu0 0.0
        %1634 = vmatpush1.msra.mxu0 0.0
        %1635 = vmatprep.subr.mxu0 0.0
        %1636 = vmatpush1.msra.mxu0 0.0
        %1637 = vmatprep.subr.mxu0 0.0
        %1638 = vmatpush1.msra.mxu0 0.0
        %1639 = vmatprep.mubr.f32.mxu0 0.0
        %1640 = vmatmul.mubr.f32.gmra.mrb[0].mxu0 %v1572
        %v1641 = vpop.f32.mrb[0].mxu0
        %v1642 = vadd.f32 0.0, %v1641
        %v1643 = vpop.f32.mrb[0].mxu0
        %v1644 = vadd.f32 0.0, %v1643
        %1645 = vmatprep.mubr.f32.mxu0 0.0
        %1646 = vmatmul.mubr.f32.gmra.mrb[0].mxu0 %v1571
        %v1647 = vpop.f32.mrb[0].mxu0
        %v1648 = vadd.f32 0.0, %v1647
        %v1649 = vpop.f32.mrb[0].mxu0
        %v1650 = vadd.f32 0.0, %v1649
        %1651 = vdwg.mxu0
        %v1652 = vadd.f32 %v1525, %v1642
        %v1653 = vadd.f32 %v1527, %v1644
        %v1654 = vadd.f32 %v1531, %v1648
        %v1655 = vadd.f32 %v1533, %v1650
        %s1656 = scalar_lea.vmem %s5, 512
        %v1657 = vld [vmem:[%s1656] sm:$0xff]
        %v1658 = vld [vmem:[%s1656 + $0x8] sm:$0xff]
        %v1659 = vld [vmem:[%s1656 + $0x10] sm:$0xff]
        %v1660 = vld [vmem:[%s1656 + $0x18] sm:$0xff]
        %v1661 = vld [vmem:[%s1656 + $0x20] sm:$0xff]
        %v1662 = vld [vmem:[%s1656 + $0x28] sm:$0xff]
        %v1663 = vld [vmem:[%s1656 + $0x30] sm:$0xff]
        %v1664 = vld [vmem:[%s1656 + $0x38] sm:$0xff]
        %v1665 = vld [vmem:[%s1656 + $0x40] sm:$0xff]
        %v1666 = vld [vmem:[%s1656 + $0x48] sm:$0xff]
        %v1667 = vld [vmem:[%s1656 + $0x50] sm:$0xff]
        %v1668 = vld [vmem:[%s1656 + $0x58] sm:$0xff]
        %v1669 = vld [vmem:[%s1656 + $0x60] sm:$0xff]
        %v1670 = vld [vmem:[%s1656 + $0x68] sm:$0xff]
        %v1671 = vld [vmem:[%s1656 + $0x70] sm:$0xff]
        %v1672 = vld [vmem:[%s1656 + $0x78] sm:$0xff]
        %v1673 = vld [vmem:[%s1656 + $0x80] sm:$0xff]
        %v1674 = vld [vmem:[%s1656 + $0x88] sm:$0xff]
        %v1675 = vld [vmem:[%s1656 + $0x90] sm:$0xff]
        %v1676 = vld [vmem:[%s1656 + $0x98] sm:$0xff]
        %v1677 = vld [vmem:[%s1656 + $0xa0] sm:$0xff]
        %v1678 = vld [vmem:[%s1656 + $0xa8] sm:$0xff]
        %v1679 = vld [vmem:[%s1656 + $0xb0] sm:$0xff]
        %v1680 = vld [vmem:[%s1656 + $0xb8] sm:$0xff]
        %v1681 = vld [vmem:[%s1656 + $0xc0] sm:$0xff]
        %v1682 = vld [vmem:[%s1656 + $0xc8] sm:$0xff]
        %v1683 = vld [vmem:[%s1656 + $0xd0] sm:$0xff]
        %v1684 = vld [vmem:[%s1656 + $0xd8] sm:$0xff]
        %v1685 = vld [vmem:[%s1656 + $0xe0] sm:$0xff]
        %v1686 = vld [vmem:[%s1656 + $0xe8] sm:$0xff]
        %v1687 = vld [vmem:[%s1656 + $0xf0] sm:$0xff]
        %v1688 = vld [vmem:[%s1656 + $0xf8] sm:$0xff]
        %v1689 = vrot.slane %v1412, 2
        %v1690 = vrot.slane %v1413, 2
        %v1691 = vsel %vm970, %v1689, %v1690
        %1694 = vmatprep.subr.mxu0 %v1658
        %1695 = vmatpush1.msra.mxu0 %v1657
        %1696 = vmatprep.subr.mxu0 %v1660
        %1697 = vmatpush1.msra.mxu0 %v1659
        %1698 = vmatprep.subr.mxu0 %v1662
        %1699 = vmatpush1.msra.mxu0 %v1661
        %1700 = vmatprep.subr.mxu0 %v1664
        %1701 = vmatpush1.msra.mxu0 %v1663
        %1702 = vmatprep.subr.mxu0 %v1666
        %1703 = vmatpush1.msra.mxu0 %v1665
        %1704 = vmatprep.subr.mxu0 %v1668
        %1705 = vmatpush1.msra.mxu0 %v1667
        %1706 = vmatprep.subr.mxu0 %v1670
        %1707 = vmatpush1.msra.mxu0 %v1669
        %1708 = vmatprep.subr.mxu0 %v1672
        %1709 = vmatpush1.msra.mxu0 %v1671
        %1710 = vmatprep.subr.mxu0 %v1674
        %1711 = vmatpush1.msra.mxu0 %v1673
        %1712 = vmatprep.subr.mxu0 %v1676
        %1713 = vmatpush1.msra.mxu0 %v1675
        %1714 = vmatprep.subr.mxu0 %v1678
        %1715 = vmatpush1.msra.mxu0 %v1677
        %1716 = vmatprep.subr.mxu0 %v1680
        %1717 = vmatpush1.msra.mxu0 %v1679
        %1718 = vmatprep.subr.mxu0 %v1682
        %1719 = vmatpush1.msra.mxu0 %v1681
        %1720 = vmatprep.subr.mxu0 %v1684
        %1721 = vmatpush1.msra.mxu0 %v1683
        %1722 = vmatprep.subr.mxu0 %v1686
        %1723 = vmatpush1.msra.mxu0 %v1685
        %1724 = vmatprep.subr.mxu0 %v1688
        %1725 = vmatpush1.msra.mxu0 %v1687
        %1726 = vmatprep.subr.mxu0 0.0
        %1727 = vmatpush1.msra.mxu0 0.0
        %1728 = vmatprep.subr.mxu0 0.0
        %1729 = vmatpush1.msra.mxu0 0.0
        %1730 = vmatprep.subr.mxu0 0.0
        %1731 = vmatpush1.msra.mxu0 0.0
        %1732 = vmatprep.subr.mxu0 0.0
        %1733 = vmatpush1.msra.mxu0 0.0
        %1734 = vmatprep.subr.mxu0 0.0
        %1735 = vmatpush1.msra.mxu0 0.0
        %1736 = vmatprep.subr.mxu0 0.0
        %1737 = vmatpush1.msra.mxu0 0.0
        %1738 = vmatprep.subr.mxu0 0.0
        %1739 = vmatpush1.msra.mxu0 0.0
        %1740 = vmatprep.subr.mxu0 0.0
        %1741 = vmatpush1.msra.mxu0 0.0
        %1742 = vmatprep.subr.mxu0 0.0
        %1743 = vmatpush1.msra.mxu0 0.0
        %1744 = vmatprep.subr.mxu0 0.0
        %1745 = vmatpush1.msra.mxu0 0.0
        %1746 = vmatprep.subr.mxu0 0.0
        %1747 = vmatpush1.msra.mxu0 0.0
        %1748 = vmatprep.subr.mxu0 0.0
        %1749 = vmatpush1.msra.mxu0 0.0
        %1750 = vmatprep.subr.mxu0 0.0
        %1751 = vmatpush1.msra.mxu0 0.0
        %1752 = vmatprep.subr.mxu0 0.0
        %1753 = vmatpush1.msra.mxu0 0.0
        %1754 = vmatprep.subr.mxu0 0.0
        %1755 = vmatpush1.msra.mxu0 0.0
        %1756 = vmatprep.subr.mxu0 0.0
        %1757 = vmatpush1.msra.mxu0 0.0
        %1758 = vmatprep.mubr.f32.mxu0 0.0
        %1759 = vmatmul.mubr.f32.gmra.mrb[0].mxu0 %v1691
        %v1760 = vpop.f32.mrb[0].mxu0
        %v1761 = vadd.f32 0.0, %v1760
        %v1762 = vpop.f32.mrb[0].mxu0
        %v1763 = vadd.f32 0.0, %v1762
        %1764 = vmatprep.mubr.f32.mxu0 0.0
        %1765 = vmatmul.mubr.f32.gmra.mrb[0].mxu0 %v1690
        %v1766 = vpop.f32.mrb[0].mxu0
        %v1767 = vadd.f32 0.0, %v1766
        %v1768 = vpop.f32.mrb[0].mxu0
        %v1769 = vadd.f32 0.0, %v1768
        %1770 = vdwg.mxu0
        %v1771 = vadd.f32 %v1652, %v1761
        %v1772 = vadd.f32 %v1653, %v1763
        %v1773 = vadd.f32 %v1654, %v1767
        %v1774 = vadd.f32 %v1655, %v1769
        %v1775 = vmax.f32 %v1771, 0.0
        %v1776 = vmax.f32 %v1772, 0.0
        %v1777 = vmax.f32 %v1773, 0.0
        %v1778 = vmax.f32 %v1774, 0.0
        %v1779 = vld [vmem:[%s7] sm:$0xff]
        %v1780 = vld [vmem:[%s7 + $0x8] sm:$0xff]
        %v1781 = vld [vmem:[%s7 + $0x10] sm:$0xff]
        %v1782 = vld [vmem:[%s7 + $0x18] sm:$0xff]
        %v1783 = vld [vmem:[%s7 + $0x20] sm:$0xff]
        %v1784 = vld [vmem:[%s7 + $0x28] sm:$0xff]
        %v1785 = vld [vmem:[%s7 + $0x30] sm:$0xff]
        %v1786 = vld [vmem:[%s7 + $0x38] sm:$0xff]
        %v1787 = vld [vmem:[%s7 + $0x40] sm:$0xff]
        %v1788 = vld [vmem:[%s7 + $0x48] sm:$0xff]
        %v1789 = vld [vmem:[%s7 + $0x50] sm:$0xff]
        %v1790 = vld [vmem:[%s7 + $0x58] sm:$0xff]
        %v1791 = vld [vmem:[%s7 + $0x60] sm:$0xff]
        %v1792 = vld [vmem:[%s7 + $0x68] sm:$0xff]
        %v1793 = vld [vmem:[%s7 + $0x70] sm:$0xff]
        %v1794 = vld [vmem:[%s7 + $0x78] sm:$0xff]
        %v1795 = vld [vmem:[%s7 + $0x80] sm:$0xff]
        %v1796 = vld [vmem:[%s7 + $0x88] sm:$0xff]
        %v1797 = vld [vmem:[%s7 + $0x90] sm:$0xff]
        %v1798 = vld [vmem:[%s7 + $0x98] sm:$0xff]
        %v1799 = vld [vmem:[%s7 + $0xa0] sm:$0xff]
        %v1800 = vld [vmem:[%s7 + $0xa8] sm:$0xff]
        %v1801 = vld [vmem:[%s7 + $0xb0] sm:$0xff]
        %v1802 = vld [vmem:[%s7 + $0xb8] sm:$0xff]
        %v1803 = vld [vmem:[%s7 + $0xc0] sm:$0xff]
        %v1804 = vld [vmem:[%s7 + $0xc8] sm:$0xff]
        %v1805 = vld [vmem:[%s7 + $0xd0] sm:$0xff]
        %v1806 = vld [vmem:[%s7 + $0xd8] sm:$0xff]
        %v1807 = vld [vmem:[%s7 + $0xe0] sm:$0xff]
        %v1808 = vld [vmem:[%s7 + $0xe8] sm:$0xff]
        %v1809 = vld [vmem:[%s7 + $0xf0] sm:$0xff]
        %v1810 = vld [vmem:[%s7 + $0xf8] sm:$0xff]
        %v1811 = vld [vmem:[%s7 + $0x100] sm:$0xff]
        %v1812 = vld [vmem:[%s7 + $0x108] sm:$0xff]
        %v1813 = vld [vmem:[%s7 + $0x110] sm:$0xff]
        %v1814 = vld [vmem:[%s7 + $0x118] sm:$0xff]
        %v1815 = vld [vmem:[%s7 + $0x120] sm:$0xff]
        %v1816 = vld [vmem:[%s7 + $0x128] sm:$0xff]
        %v1817 = vld [vmem:[%s7 + $0x130] sm:$0xff]
        %v1818 = vld [vmem:[%s7 + $0x138] sm:$0xff]
        %v1819 = vld [vmem:[%s7 + $0x140] sm:$0xff]
        %v1820 = vld [vmem:[%s7 + $0x148] sm:$0xff]
        %v1821 = vld [vmem:[%s7 + $0x150] sm:$0xff]
        %v1822 = vld [vmem:[%s7 + $0x158] sm:$0xff]
        %v1823 = vld [vmem:[%s7 + $0x160] sm:$0xff]
        %v1824 = vld [vmem:[%s7 + $0x168] sm:$0xff]
        %v1825 = vld [vmem:[%s7 + $0x170] sm:$0xff]
        %v1826 = vld [vmem:[%s7 + $0x178] sm:$0xff]
        %v1827 = vld [vmem:[%s7 + $0x180] sm:$0xff]
        %v1828 = vld [vmem:[%s7 + $0x188] sm:$0xff]
        %v1829 = vld [vmem:[%s7 + $0x190] sm:$0xff]
        %v1830 = vld [vmem:[%s7 + $0x198] sm:$0xff]
        %v1831 = vld [vmem:[%s7 + $0x1a0] sm:$0xff]
        %v1832 = vld [vmem:[%s7 + $0x1a8] sm:$0xff]
        %v1833 = vld [vmem:[%s7 + $0x1b0] sm:$0xff]
        %v1834 = vld [vmem:[%s7 + $0x1b8] sm:$0xff]
        %v1835 = vld [vmem:[%s8] sm:$0x3]
        %v1837 = vlaneseq
        %v1838 = vshrl.u32 %v1837, 7
        %v1839 = vsub.s32 0, %v1838
        %v1840 = vrot.slane %v1835, %v1839
        %v1841 = vlaneseq
        %v1842 = vshrl.u32 %v1841, 7
        %v1843 = vsub.s32 1, %v1842
        %v1844 = vrot.slane %v1835, %v1843
        %vm1847 = vcmask 785408
        %v1849 = vsel %vm1847, %v1776, 0
        %v1852 = vsel %vm1847, %v1778, 0
        %1854 = vmatprep.subr.mxu0 %v1780
        %1855 = vmatpush1.msra.mxu0 %v1779
        %1856 = vmatprep.subr.mxu0 %v1782
        %1857 = vmatpush1.msra.mxu0 %v1781
        %1858 = vmatprep.subr.mxu0 %v1784
        %1859 = vmatpush1.msra.mxu0 %v1783
        %1860 = vmatprep.subr.mxu0 %v1786
        %1861 = vmatpush1.msra.mxu0 %v1785
        %1862 = vmatprep.subr.mxu0 %v1788
        %1863 = vmatpush1.msra.mxu0 %v1787
        %1864 = vmatprep.subr.mxu0 %v1790
        %1865 = vmatpush1.msra.mxu0 %v1789
        %1866 = vmatprep.subr.mxu0 %v1792
        %1867 = vmatpush1.msra.mxu0 %v1791
        %1868 = vmatprep.subr.mxu0 %v1794
        %1869 = vmatpush1.msra.mxu0 %v1793
        %1870 = vmatprep.subr.mxu0 %v1796
        %1871 = vmatpush1.msra.mxu0 %v1795
        %1872 = vmatprep.subr.mxu0 %v1798
        %1873 = vmatpush1.msra.mxu0 %v1797
        %1874 = vmatprep.subr.mxu0 %v1800
        %1875 = vmatpush1.msra.mxu0 %v1799
        %1876 = vmatprep.subr.mxu0 %v1802
        %1877 = vmatpush1.msra.mxu0 %v1801
        %1878 = vmatprep.subr.mxu0 %v1804
        %1879 = vmatpush1.msra.mxu0 %v1803
        %1880 = vmatprep.subr.mxu0 %v1806
        %1881 = vmatpush1.msra.mxu0 %v1805
        %1882 = vmatprep.subr.mxu0 %v1808
        %1883 = vmatpush1.msra.mxu0 %v1807
        %1884 = vmatprep.subr.mxu0 %v1810
        %1885 = vmatpush1.msra.mxu0 %v1809
        %1886 = vmatprep.subr.mxu0 %v1812
        %1887 = vmatpush1.msra.mxu0 %v1811
        %1888 = vmatprep.subr.mxu0 %v1814
        %1889 = vmatpush1.msra.mxu0 %v1813
        %1890 = vmatprep.subr.mxu0 %v1816
        %1891 = vmatpush1.msra.mxu0 %v1815
        %1892 = vmatprep.subr.mxu0 %v1818
        %1893 = vmatpush1.msra.mxu0 %v1817
        %1894 = vmatprep.subr.mxu0 %v1820
        %1895 = vmatpush1.msra.mxu0 %v1819
        %1896 = vmatprep.subr.mxu0 %v1822
        %1897 = vmatpush1.msra.mxu0 %v1821
        %1898 = vmatprep.subr.mxu0 %v1824
        %1899 = vmatpush1.msra.mxu0 %v1823
        %1900 = vmatprep.subr.mxu0 %v1826
        %1901 = vmatpush1.msra.mxu0 %v1825
        %1902 = vmatprep.subr.mxu0 %v1828
        %1903 = vmatpush1.msra.mxu0 %v1827
        %1904 = vmatprep.subr.mxu0 %v1830
        %1905 = vmatpush1.msra.mxu0 %v1829
        %1906 = vmatprep.subr.mxu0 %v1832
        %1907 = vmatpush1.msra.mxu0 %v1831
        %1908 = vmatprep.subr.mxu0 %v1834
        %1909 = vmatpush1.msra.mxu0 %v1833
        %1910 = vmatprep.subr.mxu0 0.0
        %1911 = vmatpush1.msra.mxu0 0.0
        %1912 = vmatprep.subr.mxu0 0.0
        %1913 = vmatpush1.msra.mxu0 0.0
        %1914 = vmatprep.subr.mxu0 0.0
        %1915 = vmatpush1.msra.mxu0 0.0
        %1916 = vmatprep.subr.mxu0 0.0
        %1917 = vmatpush1.msra.mxu0 0.0
        %1918 = vmatprep.mubr.f32.mxu0 %v1849
        %1919 = vmatmul.mubr.f32.gmra.mrb[0].mxu0 %v1775
        %v1920 = vpop.f32.mrb[0].mxu0
        %v1921 = vadd.f32 %v1840, %v1920
        %v1922 = vpop.f32.mrb[0].mxu0
        %v1923 = vadd.f32 %v1844, %v1922
        %1924 = vmatprep.mubr.f32.mxu0 %v1852
        %1925 = vmatmul.mubr.f32.gmra.mrb[0].mxu0 %v1777
        %v1926 = vpop.f32.mrb[0].mxu0
        %v1927 = vadd.f32 %v1840, %v1926
        %v1928 = vpop.f32.mrb[0].mxu0
        %v1929 = vadd.f32 %v1844, %v1928
        %1930 = vdwg.mxu0
        %s1931 = scalar_lea.vmem %s7, 448
        %v1932 = vld [vmem:[%s1931] sm:$0xff]
        %v1933 = vld [vmem:[%s1931 + $0x8] sm:$0xff]
        %v1934 = vld [vmem:[%s1931 + $0x10] sm:$0xff]
        %v1935 = vld [vmem:[%s1931 + $0x18] sm:$0xff]
        %v1936 = vld [vmem:[%s1931 + $0x20] sm:$0xff]
        %v1937 = vld [vmem:[%s1931 + $0x28] sm:$0xff]
        %v1938 = vld [vmem:[%s1931 + $0x30] sm:$0xff]
        %v1939 = vld [vmem:[%s1931 + $0x38] sm:$0xff]
        %v1940 = vld [vmem:[%s1931 + $0x40] sm:$0xff]
        %v1941 = vld [vmem:[%s1931 + $0x48] sm:$0xff]
        %v1942 = vld [vmem:[%s1931 + $0x50] sm:$0xff]
        %v1943 = vld [vmem:[%s1931 + $0x58] sm:$0xff]
        %v1944 = vld [vmem:[%s1931 + $0x60] sm:$0xff]
        %v1945 = vld [vmem:[%s1931 + $0x68] sm:$0xff]
        %v1946 = vld [vmem:[%s1931 + $0x70] sm:$0xff]
        %v1947 = vld [vmem:[%s1931 + $0x78] sm:$0xff]
        %v1948 = vld [vmem:[%s1931 + $0x80] sm:$0xff]
        %v1949 = vld [vmem:[%s1931 + $0x88] sm:$0xff]
        %v1950 = vld [vmem:[%s1931 + $0x90] sm:$0xff]
        %v1951 = vld [vmem:[%s1931 + $0x98] sm:$0xff]
        %v1952 = vld [vmem:[%s1931 + $0xa0] sm:$0xff]
        %v1953 = vld [vmem:[%s1931 + $0xa8] sm:$0xff]
        %v1954 = vld [vmem:[%s1931 + $0xb0] sm:$0xff]
        %v1955 = vld [vmem:[%s1931 + $0xb8] sm:$0xff]
        %v1956 = vld [vmem:[%s1931 + $0xc0] sm:$0xff]
        %v1957 = vld [vmem:[%s1931 + $0xc8] sm:$0xff]
        %v1958 = vld [vmem:[%s1931 + $0xd0] sm:$0xff]
        %v1959 = vld [vmem:[%s1931 + $0xd8] sm:$0xff]
        %v1960 = vld [vmem:[%s1931 + $0xe0] sm:$0xff]
        %v1961 = vld [vmem:[%s1931 + $0xe8] sm:$0xff]
        %v1962 = vld [vmem:[%s1931 + $0xf0] sm:$0xff]
        %v1963 = vld [vmem:[%s1931 + $0xf8] sm:$0xff]
        %v1964 = vld [vmem:[%s1931 + $0x100] sm:$0xff]
        %v1965 = vld [vmem:[%s1931 + $0x108] sm:$0xff]
        %v1966 = vld [vmem:[%s1931 + $0x110] sm:$0xff]
        %v1967 = vld [vmem:[%s1931 + $0x118] sm:$0xff]
        %v1968 = vld [vmem:[%s1931 + $0x120] sm:$0xff]
        %v1969 = vld [vmem:[%s1931 + $0x128] sm:$0xff]
        %v1970 = vld [vmem:[%s1931 + $0x130] sm:$0xff]
        %v1971 = vld [vmem:[%s1931 + $0x138] sm:$0xff]
        %v1972 = vld [vmem:[%s1931 + $0x140] sm:$0xff]
        %v1973 = vld [vmem:[%s1931 + $0x148] sm:$0xff]
        %v1974 = vld [vmem:[%s1931 + $0x150] sm:$0xff]
        %v1975 = vld [vmem:[%s1931 + $0x158] sm:$0xff]
        %v1976 = vld [vmem:[%s1931 + $0x160] sm:$0xff]
        %v1977 = vld [vmem:[%s1931 + $0x168] sm:$0xff]
        %v1978 = vld [vmem:[%s1931 + $0x170] sm:$0xff]
        %v1979 = vld [vmem:[%s1931 + $0x178] sm:$0xff]
        %v1980 = vld [vmem:[%s1931 + $0x180] sm:$0xff]
        %v1981 = vld [vmem:[%s1931 + $0x188] sm:$0xff]
        %v1982 = vld [vmem:[%s1931 + $0x190] sm:$0xff]
        %v1983 = vld [vmem:[%s1931 + $0x198] sm:$0xff]
        %v1984 = vld [vmem:[%s1931 + $0x1a0] sm:$0xff]
        %v1985 = vld [vmem:[%s1931 + $0x1a8] sm:$0xff]
        %v1986 = vld [vmem:[%s1931 + $0x1b0] sm:$0xff]
        %v1987 = vld [vmem:[%s1931 + $0x1b8] sm:$0xff]
        %v1990 = vrot.slane %v1775, 1
        %v1991 = vrot.slane %v1777, 1
        %v1992 = vsel %vm846, %v1990, %v1991
        %v1993 = vrot.slane %v1776, 1
        %v1994 = vrot.slane %v1778, 1
        %v1995 = vsel %vm846, %v1993, %v1994
        %v1998 = vsel %vm1847, %v1995, 0
        %v2000 = vsel %vm1847, %v1994, 0
        %2002 = vmatprep.subr.mxu0 %v1933
        %2003 = vmatpush1.msra.mxu0 %v1932
        %2004 = vmatprep.subr.mxu0 %v1935
        %2005 = vmatpush1.msra.mxu0 %v1934
        %2006 = vmatprep.subr.mxu0 %v1937
        %2007 = vmatpush1.msra.mxu0 %v1936
        %2008 = vmatprep.subr.mxu0 %v1939
        %2009 = vmatpush1.msra.mxu0 %v1938
        %2010 = vmatprep.subr.mxu0 %v1941
        %2011 = vmatpush1.msra.mxu0 %v1940
        %2012 = vmatprep.subr.mxu0 %v1943
        %2013 = vmatpush1.msra.mxu0 %v1942
        %2014 = vmatprep.subr.mxu0 %v1945
        %2015 = vmatpush1.msra.mxu0 %v1944
        %2016 = vmatprep.subr.mxu0 %v1947
        %2017 = vmatpush1.msra.mxu0 %v1946
        %2018 = vmatprep.subr.mxu0 %v1949
        %2019 = vmatpush1.msra.mxu0 %v1948
        %2020 = vmatprep.subr.mxu0 %v1951
        %2021 = vmatpush1.msra.mxu0 %v1950
        %2022 = vmatprep.subr.mxu0 %v1953
        %2023 = vmatpush1.msra.mxu0 %v1952
        %2024 = vmatprep.subr.mxu0 %v1955
        %2025 = vmatpush1.msra.mxu0 %v1954
        %2026 = vmatprep.subr.mxu0 %v1957
        %2027 = vmatpush1.msra.mxu0 %v1956
        %2028 = vmatprep.subr.mxu0 %v1959
        %2029 = vmatpush1.msra.mxu0 %v1958
        %2030 = vmatprep.subr.mxu0 %v1961
        %2031 = vmatpush1.msra.mxu0 %v1960
        %2032 = vmatprep.subr.mxu0 %v1963
        %2033 = vmatpush1.msra.mxu0 %v1962
        %2034 = vmatprep.subr.mxu0 %v1965
        %2035 = vmatpush1.msra.mxu0 %v1964
        %2036 = vmatprep.subr.mxu0 %v1967
        %2037 = vmatpush1.msra.mxu0 %v1966
        %2038 = vmatprep.subr.mxu0 %v1969
        %2039 = vmatpush1.msra.mxu0 %v1968
        %2040 = vmatprep.subr.mxu0 %v1971
        %2041 = vmatpush1.msra.mxu0 %v1970
        %2042 = vmatprep.subr.mxu0 %v1973
        %2043 = vmatpush1.msra.mxu0 %v1972
        %2044 = vmatprep.subr.mxu0 %v1975
        %2045 = vmatpush1.msra.mxu0 %v1974
        %2046 = vmatprep.subr.mxu0 %v1977
        %2047 = vmatpush1.msra.mxu0 %v1976
        %2048 = vmatprep.subr.mxu0 %v1979
        %2049 = vmatpush1.msra.mxu0 %v1978
        %2050 = vmatprep.subr.mxu0 %v1981
        %2051 = vmatpush1.msra.mxu0 %v1980
        %2052 = vmatprep.subr.mxu0 %v1983
        %2053 = vmatpush1.msra.mxu0 %v1982
        %2054 = vmatprep.subr.mxu0 %v1985
        %2055 = vmatpush1.msra.mxu0 %v1984
        %2056 = vmatprep.subr.mxu0 %v1987
        %2057 = vmatpush1.msra.mxu0 %v1986
        %2058 = vmatprep.subr.mxu0 0.0
        %2059 = vmatpush1.msra.mxu0 0.0
        %2060 = vmatprep.subr.mxu0 0.0
        %2061 = vmatpush1.msra.mxu0 0.0
        %2062 = vmatprep.subr.mxu0 0.0
        %2063 = vmatpush1.msra.mxu0 0.0
        %2064 = vmatprep.subr.mxu0 0.0
        %2065 = vmatpush1.msra.mxu0 0.0
        %2066 = vmatprep.mubr.f32.mxu0 %v1998
        %2067 = vmatmul.mubr.f32.gmra.mrb[0].mxu0 %v1992
        %v2068 = vpop.f32.mrb[0].mxu0
        %v2069 = vadd.f32 0.0, %v2068
        %v2070 = vpop.f32.mrb[0].mxu0
        %v2071 = vadd.f32 0.0, %v2070
        %2072 = vmatprep.mubr.f32.mxu0 %v2000
        %2073 = vmatmul.mubr.f32.gmra.mrb[0].mxu0 %v1991
        %v2074 = vpop.f32.mrb[0].mxu0
        %v2075 = vadd.f32 0.0, %v2074
        %v2076 = vpop.f32.mrb[0].mxu0
        %v2077 = vadd.f32 0.0, %v2076
        %2078 = vdwg.mxu0
        %v2079 = vadd.f32 %v1921, %v2069
        %v2080 = vadd.f32 %v1923, %v2071
        %v2081 = vadd.f32 %v1927, %v2075
        %v2082 = vadd.f32 %v1929, %v2077
        %s2083 = scalar_lea.vmem %s7, 896
        %v2084 = vld [vmem:[%s2083] sm:$0xff]
        %v2085 = vld [vmem:[%s2083 + $0x8] sm:$0xff]
        %v2086 = vld [vmem:[%s2083 + $0x10] sm:$0xff]
        %v2087 = vld [vmem:[%s2083 + $0x18] sm:$0xff]
        %v2088 = vld [vmem:[%s2083 + $0x20] sm:$0xff]
        %v2089 = vld [vmem:[%s2083 + $0x28] sm:$0xff]
        %v2090 = vld [vmem:[%s2083 + $0x30] sm:$0xff]
        %v2091 = vld [vmem:[%s2083 + $0x38] sm:$0xff]
        %v2092 = vld [vmem:[%s2083 + $0x40] sm:$0xff]
        %v2093 = vld [vmem:[%s2083 + $0x48] sm:$0xff]
        %v2094 = vld [vmem:[%s2083 + $0x50] sm:$0xff]
        %v2095 = vld [vmem:[%s2083 + $0x58] sm:$0xff]
        %v2096 = vld [vmem:[%s2083 + $0x60] sm:$0xff]
        %v2097 = vld [vmem:[%s2083 + $0x68] sm:$0xff]
        %v2098 = vld [vmem:[%s2083 + $0x70] sm:$0xff]
        %v2099 = vld [vmem:[%s2083 + $0x78] sm:$0xff]
        %v2100 = vld [vmem:[%s2083 + $0x80] sm:$0xff]
        %v2101 = vld [vmem:[%s2083 + $0x88] sm:$0xff]
        %v2102 = vld [vmem:[%s2083 + $0x90] sm:$0xff]
        %v2103 = vld [vmem:[%s2083 + $0x98] sm:$0xff]
        %v2104 = vld [vmem:[%s2083 + $0xa0] sm:$0xff]
        %v2105 = vld [vmem:[%s2083 + $0xa8] sm:$0xff]
        %v2106 = vld [vmem:[%s2083 + $0xb0] sm:$0xff]
        %v2107 = vld [vmem:[%s2083 + $0xb8] sm:$0xff]
        %v2108 = vld [vmem:[%s2083 + $0xc0] sm:$0xff]
        %v2109 = vld [vmem:[%s2083 + $0xc8] sm:$0xff]
        %v2110 = vld [vmem:[%s2083 + $0xd0] sm:$0xff]
        %v2111 = vld [vmem:[%s2083 + $0xd8] sm:$0xff]
        %v2112 = vld [vmem:[%s2083 + $0xe0] sm:$0xff]
        %v2113 = vld [vmem:[%s2083 + $0xe8] sm:$0xff]
        %v2114 = vld [vmem:[%s2083 + $0xf0] sm:$0xff]
        %v2115 = vld [vmem:[%s2083 + $0xf8] sm:$0xff]
        %v2116 = vld [vmem:[%s2083 + $0x100] sm:$0xff]
        %v2117 = vld [vmem:[%s2083 + $0x108] sm:$0xff]
        %v2118 = vld [vmem:[%s2083 + $0x110] sm:$0xff]
        %v2119 = vld [vmem:[%s2083 + $0x118] sm:$0xff]
        %v2120 = vld [vmem:[%s2083 + $0x120] sm:$0xff]
        %v2121 = vld [vmem:[%s2083 + $0x128] sm:$0xff]
        %v2122 = vld [vmem:[%s2083 + $0x130] sm:$0xff]
        %v2123 = vld [vmem:[%s2083 + $0x138] sm:$0xff]
        %v2124 = vld [vmem:[%s2083 + $0x140] sm:$0xff]
        %v2125 = vld [vmem:[%s2083 + $0x148] sm:$0xff]
        %v2126 = vld [vmem:[%s2083 + $0x150] sm:$0xff]
        %v2127 = vld [vmem:[%s2083 + $0x158] sm:$0xff]
        %v2128 = vld [vmem:[%s2083 + $0x160] sm:$0xff]
        %v2129 = vld [vmem:[%s2083 + $0x168] sm:$0xff]
        %v2130 = vld [vmem:[%s2083 + $0x170] sm:$0xff]
        %v2131 = vld [vmem:[%s2083 + $0x178] sm:$0xff]
        %v2132 = vld [vmem:[%s2083 + $0x180] sm:$0xff]
        %v2133 = vld [vmem:[%s2083 + $0x188] sm:$0xff]
        %v2134 = vld [vmem:[%s2083 + $0x190] sm:$0xff]
        %v2135 = vld [vmem:[%s2083 + $0x198] sm:$0xff]
        %v2136 = vld [vmem:[%s2083 + $0x1a0] sm:$0xff]
        %v2137 = vld [vmem:[%s2083 + $0x1a8] sm:$0xff]
        %v2138 = vld [vmem:[%s2083 + $0x1b0] sm:$0xff]
        %v2139 = vld [vmem:[%s2083 + $0x1b8] sm:$0xff]
        %v2140 = vrot.slane %v1775, 2
        %v2141 = vrot.slane %v1777, 2
        %v2142 = vsel %vm970, %v2140, %v2141
        %v2143 = vrot.slane %v1776, 2
        %v2144 = vrot.slane %v1778, 2
        %v2145 = vsel %vm970, %v2143, %v2144
        %v2148 = vsel %vm1847, %v2145, 0
        %v2150 = vsel %vm1847, %v2144, 0
        %2152 = vmatprep.subr.mxu0 %v2085
        %2153 = vmatpush1.msra.mxu0 %v2084
        %2154 = vmatprep.subr.mxu0 %v2087
        %2155 = vmatpush1.msra.mxu0 %v2086
        %2156 = vmatprep.subr.mxu0 %v2089
        %2157 = vmatpush1.msra.mxu0 %v2088
        %2158 = vmatprep.subr.mxu0 %v2091
        %2159 = vmatpush1.msra.mxu0 %v2090
        %2160 = vmatprep.subr.mxu0 %v2093
        %2161 = vmatpush1.msra.mxu0 %v2092
        %2162 = vmatprep.subr.mxu0 %v2095
        %2163 = vmatpush1.msra.mxu0 %v2094
        %2164 = vmatprep.subr.mxu0 %v2097
        %2165 = vmatpush1.msra.mxu0 %v2096
        %2166 = vmatprep.subr.mxu0 %v2099
        %2167 = vmatpush1.msra.mxu0 %v2098
        %2168 = vmatprep.subr.mxu0 %v2101
        %2169 = vmatpush1.msra.mxu0 %v2100
        %2170 = vmatprep.subr.mxu0 %v2103
        %2171 = vmatpush1.msra.mxu0 %v2102
        %2172 = vmatprep.subr.mxu0 %v2105
        %2173 = vmatpush1.msra.mxu0 %v2104
        %2174 = vmatprep.subr.mxu0 %v2107
        %2175 = vmatpush1.msra.mxu0 %v2106
        %2176 = vmatprep.subr.mxu0 %v2109
        %2177 = vmatpush1.msra.mxu0 %v2108
        %2178 = vmatprep.subr.mxu0 %v2111
        %2179 = vmatpush1.msra.mxu0 %v2110
        %2180 = vmatprep.subr.mxu0 %v2113
        %2181 = vmatpush1.msra.mxu0 %v2112
        %2182 = vmatprep.subr.mxu0 %v2115
        %2183 = vmatpush1.msra.mxu0 %v2114
        %2184 = vmatprep.subr.mxu0 %v2117
        %2185 = vmatpush1.msra.mxu0 %v2116
        %2186 = vmatprep.subr.mxu0 %v2119
        %2187 = vmatpush1.msra.mxu0 %v2118
        %2188 = vmatprep.subr.mxu0 %v2121
        %2189 = vmatpush1.msra.mxu0 %v2120
        %2190 = vmatprep.subr.mxu0 %v2123
        %2191 = vmatpush1.msra.mxu0 %v2122
        %2192 = vmatprep.subr.mxu0 %v2125
        %2193 = vmatpush1.msra.mxu0 %v2124
        %2194 = vmatprep.subr.mxu0 %v2127
        %2195 = vmatpush1.msra.mxu0 %v2126
        %2196 = vmatprep.subr.mxu0 %v2129
        %2197 = vmatpush1.msra.mxu0 %v2128
        %2198 = vmatprep.subr.mxu0 %v2131
        %2199 = vmatpush1.msra.mxu0 %v2130
        %2200 = vmatprep.subr.mxu0 %v2133
        %2201 = vmatpush1.msra.mxu0 %v2132
        %2202 = vmatprep.subr.mxu0 %v2135
        %2203 = vmatpush1.msra.mxu0 %v2134
        %2204 = vmatprep.subr.mxu0 %v2137
        %2205 = vmatpush1.msra.mxu0 %v2136
        %2206 = vmatprep.subr.mxu0 %v2139
        %2207 = vmatpush1.msra.mxu0 %v2138
        %2208 = vmatprep.subr.mxu0 0.0
        %2209 = vmatpush1.msra.mxu0 0.0
        %2210 = vmatprep.subr.mxu0 0.0
        %2211 = vmatpush1.msra.mxu0 0.0
        %2212 = vmatprep.subr.mxu0 0.0
        %2213 = vmatpush1.msra.mxu0 0.0
        %2214 = vmatprep.subr.mxu0 0.0
        %2215 = vmatpush1.msra.mxu0 0.0
        %2216 = vmatprep.mubr.f32.mxu0 %v2148
        %2217 = vmatmul.mubr.f32.gmra.mrb[0].mxu0 %v2142
        %v2218 = vpop.f32.mrb[0].mxu0
        %v2219 = vadd.f32 0.0, %v2218
        %v2220 = vpop.f32.mrb[0].mxu0
        %v2221 = vadd.f32 0.0, %v2220
        %2222 = vmatprep.mubr.f32.mxu0 %v2150
        %2223 = vmatmul.mubr.f32.gmra.mrb[0].mxu0 %v2141
        %v2224 = vpop.f32.mrb[0].mxu0
        %v2225 = vadd.f32 0.0, %v2224
        %v2226 = vpop.f32.mrb[0].mxu0
        %v2227 = vadd.f32 0.0, %v2226
        %2228 = vdwg.mxu0
        %v2229 = vadd.f32 %v2079, %v2219
        %v2230 = vadd.f32 %v2080, %v2221
        %v2231 = vadd.f32 %v2081, %v2225
        %v2232 = vadd.f32 %v2082, %v2227
        %v2233 = vmax.f32 %v2229, 0.0
        %v2234 = vmax.f32 %v2230, 0.0
        %v2235 = vmax.f32 %v2231, 0.0
        %v2236 = vmax.f32 %v2232, 0.0
        %v2237 = vld [vmem:[%s9] sm:$0xff]
        %v2238 = vld [vmem:[%s9 + $0x8] sm:$0xff]
        %v2239 = vld [vmem:[%s9 + $0x10] sm:$0xff]
        %v2240 = vld [vmem:[%s9 + $0x18] sm:$0xff]
        %v2241 = vld [vmem:[%s9 + $0x20] sm:$0xff]
        %v2242 = vld [vmem:[%s9 + $0x28] sm:$0xff]
        %v2243 = vld [vmem:[%s9 + $0x30] sm:$0xff]
        %v2244 = vld [vmem:[%s9 + $0x38] sm:$0xff]
        %v2245 = vld [vmem:[%s9 + $0x40] sm:$0xff]
        %v2246 = vld [vmem:[%s9 + $0x48] sm:$0xff]
        %v2247 = vld [vmem:[%s9 + $0x50] sm:$0xff]
        %v2248 = vld [vmem:[%s9 + $0x58] sm:$0xff]
        %v2249 = vld [vmem:[%s9 + $0x60] sm:$0xff]
        %v2250 = vld [vmem:[%s9 + $0x68] sm:$0xff]
        %v2251 = vld [vmem:[%s9 + $0x70] sm:$0xff]
        %v2252 = vld [vmem:[%s9 + $0x78] sm:$0xff]
        %v2253 = vld [vmem:[%s9 + $0x80] sm:$0xff]
        %v2254 = vld [vmem:[%s9 + $0x88] sm:$0xff]
        %v2255 = vld [vmem:[%s9 + $0x90] sm:$0xff]
        %v2256 = vld [vmem:[%s9 + $0x98] sm:$0xff]
        %v2257 = vld [vmem:[%s9 + $0xa0] sm:$0xff]
        %v2258 = vld [vmem:[%s9 + $0xa8] sm:$0xff]
        %v2259 = vld [vmem:[%s9 + $0xb0] sm:$0xff]
        %v2260 = vld [vmem:[%s9 + $0xb8] sm:$0xff]
        %v2261 = vld [vmem:[%s9 + $0xc0] sm:$0xff]
        %v2262 = vld [vmem:[%s9 + $0xc8] sm:$0xff]
        %v2263 = vld [vmem:[%s9 + $0xd0] sm:$0xff]
        %v2264 = vld [vmem:[%s9 + $0xd8] sm:$0xff]
        %v2265 = vld [vmem:[%s9 + $0xe0] sm:$0xff]
        %v2266 = vld [vmem:[%s9 + $0xe8] sm:$0xff]
        %v2267 = vld [vmem:[%s9 + $0xf0] sm:$0xff]
        %v2268 = vld [vmem:[%s9 + $0xf8] sm:$0xff]
        %v2269 = vld [vmem:[%s9 + $0x100] sm:$0xff]
        %v2270 = vld [vmem:[%s9 + $0x108] sm:$0xff]
        %v2271 = vld [vmem:[%s9 + $0x110] sm:$0xff]
        %v2272 = vld [vmem:[%s9 + $0x118] sm:$0xff]
        %v2273 = vld [vmem:[%s9 + $0x120] sm:$0xff]
        %v2274 = vld [vmem:[%s9 + $0x128] sm:$0xff]
        %v2275 = vld [vmem:[%s9 + $0x130] sm:$0xff]
        %v2276 = vld [vmem:[%s9 + $0x138] sm:$0xff]
        %v2277 = vld [vmem:[%s9 + $0x140] sm:$0xff]
        %v2278 = vld [vmem:[%s9 + $0x148] sm:$0xff]
        %v2279 = vld [vmem:[%s9 + $0x150] sm:$0xff]
        %v2280 = vld [vmem:[%s9 + $0x158] sm:$0xff]
        %v2281 = vld [vmem:[%s9 + $0x160] sm:$0xff]
        %v2282 = vld [vmem:[%s9 + $0x168] sm:$0xff]
        %v2283 = vld [vmem:[%s9 + $0x170] sm:$0xff]
        %v2284 = vld [vmem:[%s9 + $0x178] sm:$0xff]
        %v2285 = vld [vmem:[%s10] sm:$0x3]
        %v2287 = vlaneseq
        %v2288 = vshrl.u32 %v2287, 7
        %v2289 = vsub.s32 0, %v2288
        %v2290 = vrot.slane %v2285, %v2289
        %v2291 = vlaneseq
        %v2292 = vshrl.u32 %v2291, 7
        %v2293 = vsub.s32 1, %v2292
        %v2294 = vrot.slane %v2285, %v2293
        %vm2297 = vcmask 523264
        %v2299 = vsel %vm2297, %v2234, 0
        %v2302 = vsel %vm2297, %v2236, 0
        %2304 = vmatprep.subr.mxu0 %v2238
        %2305 = vmatpush1.msra.mxu0 %v2237
        %2306 = vmatprep.subr.mxu0 %v2240
        %2307 = vmatpush1.msra.mxu0 %v2239
        %2308 = vmatprep.subr.mxu0 %v2242
        %2309 = vmatpush1.msra.mxu0 %v2241
        %2310 = vmatprep.subr.mxu0 %v2244
        %2311 = vmatpush1.msra.mxu0 %v2243
        %2312 = vmatprep.subr.mxu0 %v2246
        %2313 = vmatpush1.msra.mxu0 %v2245
        %2314 = vmatprep.subr.mxu0 %v2248
        %2315 = vmatpush1.msra.mxu0 %v2247
        %2316 = vmatprep.subr.mxu0 %v2250
        %2317 = vmatpush1.msra.mxu0 %v2249
        %2318 = vmatprep.subr.mxu0 %v2252
        %2319 = vmatpush1.msra.mxu0 %v2251
        %2320 = vmatprep.subr.mxu0 %v2254
        %2321 = vmatpush1.msra.mxu0 %v2253
        %2322 = vmatprep.subr.mxu0 %v2256
        %2323 = vmatpush1.msra.mxu0 %v2255
        %2324 = vmatprep.subr.mxu0 %v2258
        %2325 = vmatpush1.msra.mxu0 %v2257
        %2326 = vmatprep.subr.mxu0 %v2260
        %2327 = vmatpush1.msra.mxu0 %v2259
        %2328 = vmatprep.subr.mxu0 %v2262
        %2329 = vmatpush1.msra.mxu0 %v2261
        %2330 = vmatprep.subr.mxu0 %v2264
        %2331 = vmatpush1.msra.mxu0 %v2263
        %2332 = vmatprep.subr.mxu0 %v2266
        %2333 = vmatpush1.msra.mxu0 %v2265
        %2334 = vmatprep.subr.mxu0 %v2268
        %2335 = vmatpush1.msra.mxu0 %v2267
        %2336 = vmatprep.subr.mxu0 %v2270
        %2337 = vmatpush1.msra.mxu0 %v2269
        %2338 = vmatprep.subr.mxu0 %v2272
        %2339 = vmatpush1.msra.mxu0 %v2271
        %2340 = vmatprep.subr.mxu0 %v2274
        %2341 = vmatpush1.msra.mxu0 %v2273
        %2342 = vmatprep.subr.mxu0 %v2276
        %2343 = vmatpush1.msra.mxu0 %v2275
        %2344 = vmatprep.subr.mxu0 %v2278
        %2345 = vmatpush1.msra.mxu0 %v2277
        %2346 = vmatprep.subr.mxu0 %v2280
        %2347 = vmatpush1.msra.mxu0 %v2279
        %2348 = vmatprep.subr.mxu0 %v2282
        %2349 = vmatpush1.msra.mxu0 %v2281
        %2350 = vmatprep.subr.mxu0 %v2284
        %2351 = vmatpush1.msra.mxu0 %v2283
        %2352 = vmatprep.subr.mxu0 0.0
        %2353 = vmatpush1.msra.mxu0 0.0
        %2354 = vmatprep.subr.mxu0 0.0
        %2355 = vmatpush1.msra.mxu0 0.0
        %2356 = vmatprep.subr.mxu0 0.0
        %2357 = vmatpush1.msra.mxu0 0.0
        %2358 = vmatprep.subr.mxu0 0.0
        %2359 = vmatpush1.msra.mxu0 0.0
        %2360 = vmatprep.subr.mxu0 0.0
        %2361 = vmatpush1.msra.mxu0 0.0
        %2362 = vmatprep.subr.mxu0 0.0
        %2363 = vmatpush1.msra.mxu0 0.0
        %2364 = vmatprep.subr.mxu0 0.0
        %2365 = vmatpush1.msra.mxu0 0.0
        %2366 = vmatprep.subr.mxu0 0.0
        %2367 = vmatpush1.msra.mxu0 0.0
        %2368 = vmatprep.mubr.f32.mxu0 %v2299
        %2369 = vmatmul.mubr.f32.gmra.mrb[0].mxu0 %v2233
        %v2370 = vpop.f32.mrb[0].mxu0
        %v2371 = vadd.f32 %v2290, %v2370
        %v2372 = vpop.f32.mrb[0].mxu0
        %v2373 = vadd.f32 %v2294, %v2372
        %2374 = vmatprep.mubr.f32.mxu0 %v2302
        %2375 = vmatmul.mubr.f32.gmra.mrb[0].mxu0 %v2235
        %v2376 = vpop.f32.mrb[0].mxu0
        %v2377 = vadd.f32 %v2290, %v2376
        %v2378 = vpop.f32.mrb[0].mxu0
        %v2379 = vadd.f32 %v2294, %v2378
        %2380 = vdwg.mxu0
        %s2381 = scalar_lea.vmem %s9, 384
        %v2382 = vld [vmem:[%s2381] sm:$0xff]
        %v2383 = vld [vmem:[%s2381 + $0x8] sm:$0xff]
        %v2384 = vld [vmem:[%s2381 + $0x10] sm:$0xff]
        %v2385 = vld [vmem:[%s2381 + $0x18] sm:$0xff]
        %v2386 = vld [vmem:[%s2381 + $0x20] sm:$0xff]
        %v2387 = vld [vmem:[%s2381 + $0x28] sm:$0xff]
        %v2388 = vld [vmem:[%s2381 + $0x30] sm:$0xff]
        %v2389 = vld [vmem:[%s2381 + $0x38] sm:$0xff]
        %v2390 = vld [vmem:[%s2381 + $0x40] sm:$0xff]
        %v2391 = vld [vmem:[%s2381 + $0x48] sm:$0xff]
        %v2392 = vld [vmem:[%s2381 + $0x50] sm:$0xff]
        %v2393 = vld [vmem:[%s2381 + $0x58] sm:$0xff]
        %v2394 = vld [vmem:[%s2381 + $0x60] sm:$0xff]
        %v2395 = vld [vmem:[%s2381 + $0x68] sm:$0xff]
        %v2396 = vld [vmem:[%s2381 + $0x70] sm:$0xff]
        %v2397 = vld [vmem:[%s2381 + $0x78] sm:$0xff]
        %v2398 = vld [vmem:[%s2381 + $0x80] sm:$0xff]
        %v2399 = vld [vmem:[%s2381 + $0x88] sm:$0xff]
        %v2400 = vld [vmem:[%s2381 + $0x90] sm:$0xff]
        %v2401 = vld [vmem:[%s2381 + $0x98] sm:$0xff]
        %v2402 = vld [vmem:[%s2381 + $0xa0] sm:$0xff]
        %v2403 = vld [vmem:[%s2381 + $0xa8] sm:$0xff]
        %v2404 = vld [vmem:[%s2381 + $0xb0] sm:$0xff]
        %v2405 = vld [vmem:[%s2381 + $0xb8] sm:$0xff]
        %v2406 = vld [vmem:[%s2381 + $0xc0] sm:$0xff]
        %v2407 = vld [vmem:[%s2381 + $0xc8] sm:$0xff]
        %v2408 = vld [vmem:[%s2381 + $0xd0] sm:$0xff]
        %v2409 = vld [vmem:[%s2381 + $0xd8] sm:$0xff]
        %v2410 = vld [vmem:[%s2381 + $0xe0] sm:$0xff]
        %v2411 = vld [vmem:[%s2381 + $0xe8] sm:$0xff]
        %v2412 = vld [vmem:[%s2381 + $0xf0] sm:$0xff]
        %v2413 = vld [vmem:[%s2381 + $0xf8] sm:$0xff]
        %v2414 = vld [vmem:[%s2381 + $0x100] sm:$0xff]
        %v2415 = vld [vmem:[%s2381 + $0x108] sm:$0xff]
        %v2416 = vld [vmem:[%s2381 + $0x110] sm:$0xff]
        %v2417 = vld [vmem:[%s2381 + $0x118] sm:$0xff]
        %v2418 = vld [vmem:[%s2381 + $0x120] sm:$0xff]
        %v2419 = vld [vmem:[%s2381 + $0x128] sm:$0xff]
        %v2420 = vld [vmem:[%s2381 + $0x130] sm:$0xff]
        %v2421 = vld [vmem:[%s2381 + $0x138] sm:$0xff]
        %v2422 = vld [vmem:[%s2381 + $0x140] sm:$0xff]
        %v2423 = vld [vmem:[%s2381 + $0x148] sm:$0xff]
        %v2424 = vld [vmem:[%s2381 + $0x150] sm:$0xff]
        %v2425 = vld [vmem:[%s2381 + $0x158] sm:$0xff]
        %v2426 = vld [vmem:[%s2381 + $0x160] sm:$0xff]
        %v2427 = vld [vmem:[%s2381 + $0x168] sm:$0xff]
        %v2428 = vld [vmem:[%s2381 + $0x170] sm:$0xff]
        %v2429 = vld [vmem:[%s2381 + $0x178] sm:$0xff]
        %v2432 = vrot.slane %v2233, 1
        %v2433 = vrot.slane %v2235, 1
        %v2434 = vsel %vm846, %v2432, %v2433
        %v2435 = vrot.slane %v2234, 1
        %v2436 = vrot.slane %v2236, 1
        %v2437 = vsel %vm846, %v2435, %v2436
        %v2440 = vsel %vm2297, %v2437, 0
        %v2442 = vsel %vm2297, %v2436, 0
        %2444 = vmatprep.subr.mxu0 %v2383
        %2445 = vmatpush1.msra.mxu0 %v2382
        %2446 = vmatprep.subr.mxu0 %v2385
        %2447 = vmatpush1.msra.mxu0 %v2384
        %2448 = vmatprep.subr.mxu0 %v2387
        %2449 = vmatpush1.msra.mxu0 %v2386
        %2450 = vmatprep.subr.mxu0 %v2389
        %2451 = vmatpush1.msra.mxu0 %v2388
        %2452 = vmatprep.subr.mxu0 %v2391
        %2453 = vmatpush1.msra.mxu0 %v2390
        %2454 = vmatprep.subr.mxu0 %v2393
        %2455 = vmatpush1.msra.mxu0 %v2392
        %2456 = vmatprep.subr.mxu0 %v2395
        %2457 = vmatpush1.msra.mxu0 %v2394
        %2458 = vmatprep.subr.mxu0 %v2397
        %2459 = vmatpush1.msra.mxu0 %v2396
        %2460 = vmatprep.subr.mxu0 %v2399
        %2461 = vmatpush1.msra.mxu0 %v2398
        %2462 = vmatprep.subr.mxu0 %v2401
        %2463 = vmatpush1.msra.mxu0 %v2400
        %2464 = vmatprep.subr.mxu0 %v2403
        %2465 = vmatpush1.msra.mxu0 %v2402
        %2466 = vmatprep.subr.mxu0 %v2405
        %2467 = vmatpush1.msra.mxu0 %v2404
        %2468 = vmatprep.subr.mxu0 %v2407
        %2469 = vmatpush1.msra.mxu0 %v2406
        %2470 = vmatprep.subr.mxu0 %v2409
        %2471 = vmatpush1.msra.mxu0 %v2408
        %2472 = vmatprep.subr.mxu0 %v2411
        %2473 = vmatpush1.msra.mxu0 %v2410
        %2474 = vmatprep.subr.mxu0 %v2413
        %2475 = vmatpush1.msra.mxu0 %v2412
        %2476 = vmatprep.subr.mxu0 %v2415
        %2477 = vmatpush1.msra.mxu0 %v2414
        %2478 = vmatprep.subr.mxu0 %v2417
        %2479 = vmatpush1.msra.mxu0 %v2416
        %2480 = vmatprep.subr.mxu0 %v2419
        %2481 = vmatpush1.msra.mxu0 %v2418
        %2482 = vmatprep.subr.mxu0 %v2421
        %2483 = vmatpush1.msra.mxu0 %v2420
        %2484 = vmatprep.subr.mxu0 %v2423
        %2485 = vmatpush1.msra.mxu0 %v2422
        %2486 = vmatprep.subr.mxu0 %v2425
        %2487 = vmatpush1.msra.mxu0 %v2424
        %2488 = vmatprep.subr.mxu0 %v2427
        %2489 = vmatpush1.msra.mxu0 %v2426
        %2490 = vmatprep.subr.mxu0 %v2429
        %2491 = vmatpush1.msra.mxu0 %v2428
        %2492 = vmatprep.subr.mxu0 0.0
        %2493 = vmatpush1.msra.mxu0 0.0
        %2494 = vmatprep.subr.mxu0 0.0
        %2495 = vmatpush1.msra.mxu0 0.0
        %2496 = vmatprep.subr.mxu0 0.0
        %2497 = vmatpush1.msra.mxu0 0.0
        %2498 = vmatprep.subr.mxu0 0.0
        %2499 = vmatpush1.msra.mxu0 0.0
        %2500 = vmatprep.subr.mxu0 0.0
        %2501 = vmatpush1.msra.mxu0 0.0
        %2502 = vmatprep.subr.mxu0 0.0
        %2503 = vmatpush1.msra.mxu0 0.0
        %2504 = vmatprep.subr.mxu0 0.0
        %2505 = vmatpush1.msra.mxu0 0.0
        %2506 = vmatprep.subr.mxu0 0.0
        %2507 = vmatpush1.msra.mxu0 0.0
        %2508 = vmatprep.mubr.f32.mxu0 %v2440
        %2509 = vmatmul.mubr.f32.gmra.mrb[0].mxu0 %v2434
        %v2510 = vpop.f32.mrb[0].mxu0
        %v2511 = vadd.f32 0.0, %v2510
        %v2512 = vpop.f32.mrb[0].mxu0
        %v2513 = vadd.f32 0.0, %v2512
        %2514 = vmatprep.mubr.f32.mxu0 %v2442
        %2515 = vmatmul.mubr.f32.gmra.mrb[0].mxu0 %v2433
        %v2516 = vpop.f32.mrb[0].mxu0
        %v2517 = vadd.f32 0.0, %v2516
        %v2518 = vpop.f32.mrb[0].mxu0
        %v2519 = vadd.f32 0.0, %v2518
        %2520 = vdwg.mxu0
        %v2521 = vadd.f32 %v2371, %v2511
        %v2522 = vadd.f32 %v2373, %v2513
        %v2523 = vadd.f32 %v2377, %v2517
        %v2524 = vadd.f32 %v2379, %v2519
        %s2525 = scalar_lea.vmem %s9, 768
        %v2526 = vld [vmem:[%s2525] sm:$0xff]
        %v2527 = vld [vmem:[%s2525 + $0x8] sm:$0xff]
        %v2528 = vld [vmem:[%s2525 + $0x10] sm:$0xff]
        %v2529 = vld [vmem:[%s2525 + $0x18] sm:$0xff]
        %v2530 = vld [vmem:[%s2525 + $0x20] sm:$0xff]
        %v2531 = vld [vmem:[%s2525 + $0x28] sm:$0xff]
        %v2532 = vld [vmem:[%s2525 + $0x30] sm:$0xff]
        %v2533 = vld [vmem:[%s2525 + $0x38] sm:$0xff]
        %v2534 = vld [vmem:[%s2525 + $0x40] sm:$0xff]
        %v2535 = vld [vmem:[%s2525 + $0x48] sm:$0xff]
        %v2536 = vld [vmem:[%s2525 + $0x50] sm:$0xff]
        %v2537 = vld [vmem:[%s2525 + $0x58] sm:$0xff]
        %v2538 = vld [vmem:[%s2525 + $0x60] sm:$0xff]
        %v2539 = vld [vmem:[%s2525 + $0x68] sm:$0xff]
        %v2540 = vld [vmem:[%s2525 + $0x70] sm:$0xff]
        %v2541 = vld [vmem:[%s2525 + $0x78] sm:$0xff]
        %v2542 = vld [vmem:[%s2525 + $0x80] sm:$0xff]
        %v2543 = vld [vmem:[%s2525 + $0x88] sm:$0xff]
        %v2544 = vld [vmem:[%s2525 + $0x90] sm:$0xff]
        %v2545 = vld [vmem:[%s2525 + $0x98] sm:$0xff]
        %v2546 = vld [vmem:[%s2525 + $0xa0] sm:$0xff]
        %v2547 = vld [vmem:[%s2525 + $0xa8] sm:$0xff]
        %v2548 = vld [vmem:[%s2525 + $0xb0] sm:$0xff]
        %v2549 = vld [vmem:[%s2525 + $0xb8] sm:$0xff]
        %v2550 = vld [vmem:[%s2525 + $0xc0] sm:$0xff]
        %v2551 = vld [vmem:[%s2525 + $0xc8] sm:$0xff]
        %v2552 = vld [vmem:[%s2525 + $0xd0] sm:$0xff]
        %v2553 = vld [vmem:[%s2525 + $0xd8] sm:$0xff]
        %v2554 = vld [vmem:[%s2525 + $0xe0] sm:$0xff]
        %v2555 = vld [vmem:[%s2525 + $0xe8] sm:$0xff]
        %v2556 = vld [vmem:[%s2525 + $0xf0] sm:$0xff]
        %v2557 = vld [vmem:[%s2525 + $0xf8] sm:$0xff]
        %v2558 = vld [vmem:[%s2525 + $0x100] sm:$0xff]
        %v2559 = vld [vmem:[%s2525 + $0x108] sm:$0xff]
        %v2560 = vld [vmem:[%s2525 + $0x110] sm:$0xff]
        %v2561 = vld [vmem:[%s2525 + $0x118] sm:$0xff]
        %v2562 = vld [vmem:[%s2525 + $0x120] sm:$0xff]
        %v2563 = vld [vmem:[%s2525 + $0x128] sm:$0xff]
        %v2564 = vld [vmem:[%s2525 + $0x130] sm:$0xff]
        %v2565 = vld [vmem:[%s2525 + $0x138] sm:$0xff]
        %v2566 = vld [vmem:[%s2525 + $0x140] sm:$0xff]
        %v2567 = vld [vmem:[%s2525 + $0x148] sm:$0xff]
        %v2568 = vld [vmem:[%s2525 + $0x150] sm:$0xff]
        %v2569 = vld [vmem:[%s2525 + $0x158] sm:$0xff]
        %v2570 = vld [vmem:[%s2525 + $0x160] sm:$0xff]
        %v2571 = vld [vmem:[%s2525 + $0x168] sm:$0xff]
        %v2572 = vld [vmem:[%s2525 + $0x170] sm:$0xff]
        %v2573 = vld [vmem:[%s2525 + $0x178] sm:$0xff]
        %v2574 = vrot.slane %v2233, 2
        %v2575 = vrot.slane %v2235, 2
        %v2576 = vsel %vm970, %v2574, %v2575
        %v2577 = vrot.slane %v2234, 2
        %v2578 = vrot.slane %v2236, 2
        %v2579 = vsel %vm970, %v2577, %v2578
        %v2582 = vsel %vm2297, %v2579, 0
        %v2584 = vsel %vm2297, %v2578, 0
        %2586 = vmatprep.subr.mxu0 %v2527
        %2587 = vmatpush1.msra.mxu0 %v2526
        %2588 = vmatprep.subr.mxu0 %v2529
        %2589 = vmatpush1.msra.mxu0 %v2528
        %2590 = vmatprep.subr.mxu0 %v2531
        %2591 = vmatpush1.msra.mxu0 %v2530
        %2592 = vmatprep.subr.mxu0 %v2533
        %2593 = vmatpush1.msra.mxu0 %v2532
        %2594 = vmatprep.subr.mxu0 %v2535
        %2595 = vmatpush1.msra.mxu0 %v2534
        %2596 = vmatprep.subr.mxu0 %v2537
        %2597 = vmatpush1.msra.mxu0 %v2536
        %2598 = vmatprep.subr.mxu0 %v2539
        %2599 = vmatpush1.msra.mxu0 %v2538
        %2600 = vmatprep.subr.mxu0 %v2541
        %2601 = vmatpush1.msra.mxu0 %v2540
        %2602 = vmatprep.subr.mxu0 %v2543
        %2603 = vmatpush1.msra.mxu0 %v2542
        %2604 = vmatprep.subr.mxu0 %v2545
        %2605 = vmatpush1.msra.mxu0 %v2544
        %2606 = vmatprep.subr.mxu0 %v2547
        %2607 = vmatpush1.msra.mxu0 %v2546
        %2608 = vmatprep.subr.mxu0 %v2549
        %2609 = vmatpush1.msra.mxu0 %v2548
        %2610 = vmatprep.subr.mxu0 %v2551
        %2611 = vmatpush1.msra.mxu0 %v2550
        %2612 = vmatprep.subr.mxu0 %v2553
        %2613 = vmatpush1.msra.mxu0 %v2552
        %2614 = vmatprep.subr.mxu0 %v2555
        %2615 = vmatpush1.msra.mxu0 %v2554
        %2616 = vmatprep.subr.mxu0 %v2557
        %2617 = vmatpush1.msra.mxu0 %v2556
        %2618 = vmatprep.subr.mxu0 %v2559
        %2619 = vmatpush1.msra.mxu0 %v2558
        %2620 = vmatprep.subr.mxu0 %v2561
        %2621 = vmatpush1.msra.mxu0 %v2560
        %2622 = vmatprep.subr.mxu0 %v2563
        %2623 = vmatpush1.msra.mxu0 %v2562
        %2624 = vmatprep.subr.mxu0 %v2565
        %2625 = vmatpush1.msra.mxu0 %v2564
        %2626 = vmatprep.subr.mxu0 %v2567
        %2627 = vmatpush1.msra.mxu0 %v2566
        %2628 = vmatprep.subr.mxu0 %v2569
        %2629 = vmatpush1.msra.mxu0 %v2568
        %2630 = vmatprep.subr.mxu0 %v2571
        %2631 = vmatpush1.msra.mxu0 %v2570
        %2632 = vmatprep.subr.mxu0 %v2573
        %2633 = vmatpush1.msra.mxu0 %v2572
        %2634 = vmatprep.subr.mxu0 0.0
        %2635 = vmatpush1.msra.mxu0 0.0
        %2636 = vmatprep.subr.mxu0 0.0
        %2637 = vmatpush1.msra.mxu0 0.0
        %2638 = vmatprep.subr.mxu0 0.0
        %2639 = vmatpush1.msra.mxu0 0.0
        %2640 = vmatprep.subr.mxu0 0.0
        %2641 = vmatpush1.msra.mxu0 0.0
        %2642 = vmatprep.subr.mxu0 0.0
        %2643 = vmatpush1.msra.mxu0 0.0
        %2644 = vmatprep.subr.mxu0 0.0
        %2645 = vmatpush1.msra.mxu0 0.0
        %2646 = vmatprep.subr.mxu0 0.0
        %2647 = vmatpush1.msra.mxu0 0.0
        %2648 = vmatprep.subr.mxu0 0.0
        %2649 = vmatpush1.msra.mxu0 0.0
        %2650 = vmatprep.mubr.f32.mxu0 %v2582
        %2651 = vmatmul.mubr.f32.gmra.mrb[0].mxu0 %v2576
        %v2652 = vpop.f32.mrb[0].mxu0
        %v2653 = vadd.f32 0.0, %v2652
        %v2654 = vpop.f32.mrb[0].mxu0
        %v2655 = vadd.f32 0.0, %v2654
        %2656 = vmatprep.mubr.f32.mxu0 %v2584
        %2657 = vmatmul.mubr.f32.gmra.mrb[0].mxu0 %v2575
        %v2658 = vpop.f32.mrb[0].mxu0
        %v2659 = vadd.f32 0.0, %v2658
        %v2660 = vpop.f32.mrb[0].mxu0
        %v2661 = vadd.f32 0.0, %v2660
        %2662 = vdwg.mxu0
        %v2663 = vadd.f32 %v2521, %v2653
        %v2664 = vadd.f32 %v2522, %v2655
        %v2665 = vadd.f32 %v2523, %v2659
        %v2666 = vadd.f32 %v2524, %v2661
        %v2667 = vmax.f32 %v2663, 0.0
        %v2668 = vmax.f32 %v2664, 0.0
        %v2669 = vmax.f32 %v2665, 0.0
        %v2670 = vmax.f32 %v2666, 0.0
        %v2671 = vld [vmem:[#allocation5] sm:$0xff]
        %v2672 = vld [vmem:[#allocation5 + $0x8] sm:$0xff]
        %v2673 = vld [vmem:[#allocation5 + $0x10] sm:$0xff]
        %v2674 = vld [vmem:[#allocation5 + $0x18] sm:$0xff]
        %v2675 = vld [vmem:[#allocation5 + $0x20] sm:$0xff]
        %v2676 = vld [vmem:[#allocation5 + $0x28] sm:$0xff]
        %v2677 = vld [vmem:[#allocation5 + $0x30] sm:$0xff]
        %v2678 = vld [vmem:[#allocation5 + $0x38] sm:$0xff]
        %v2679 = vld [vmem:[#allocation5 + $0x40] sm:$0xff]
        %v2680 = vld [vmem:[#allocation5 + $0x48] sm:$0xff]
        %v2681 = vld [vmem:[#allocation5 + $0x50] sm:$0xff]
        %v2682 = vld [vmem:[#allocation5 + $0x58] sm:$0xff]
        %v2683 = vld [vmem:[#allocation5 + $0x60] sm:$0xff]
        %v2684 = vld [vmem:[#allocation5 + $0x68] sm:$0xff]
        %v2685 = vld [vmem:[#allocation5 + $0x70] sm:$0xff]
        %v2686 = vld [vmem:[#allocation5 + $0x78] sm:$0xff]
        %v2687 = vld [vmem:[#allocation5 + $0x80] sm:$0xff]
        %v2688 = vld [vmem:[#allocation5 + $0x88] sm:$0xff]
        %v2689 = vld [vmem:[#allocation5 + $0x90] sm:$0xff]
        %v2690 = vld [vmem:[#allocation5 + $0x98] sm:$0xff]
        %v2691 = vld [vmem:[#allocation5 + $0xa0] sm:$0xff]
        %v2692 = vld [vmem:[#allocation5 + $0xa8] sm:$0xff]
        %v2693 = vld [vmem:[#allocation5 + $0xb0] sm:$0xff]
        %v2694 = vld [vmem:[#allocation5 + $0xb8] sm:$0xff]
        %v2695 = vld [vmem:[#allocation5 + $0xc0] sm:$0xff]
        %v2696 = vld [vmem:[#allocation5 + $0xc8] sm:$0xff]
        %v2697 = vld [vmem:[#allocation5 + $0xd0] sm:$0xff]
        %v2698 = vld [vmem:[#allocation5 + $0xd8] sm:$0xff]
        %v2699 = vld [vmem:[#allocation5 + $0xe0] sm:$0xff]
        %v2700 = vld [vmem:[#allocation5 + $0xe8] sm:$0xff]
        %v2701 = vld [vmem:[#allocation5 + $0xf0] sm:$0xff]
        %v2702 = vld [vmem:[#allocation5 + $0xf8] sm:$0xff]
        %v2703 = vld [vmem:[#allocation5 + $0x100] sm:$0xff]
        %v2704 = vld [vmem:[#allocation5 + $0x108] sm:$0xff]
        %v2705 = vld [vmem:[#allocation5 + $0x110] sm:$0xff]
        %v2706 = vld [vmem:[#allocation5 + $0x118] sm:$0xff]
        %v2707 = vld [vmem:[#allocation5 + $0x120] sm:$0xff]
        %v2708 = vld [vmem:[#allocation5 + $0x128] sm:$0xff]
        %v2709 = vld [vmem:[#allocation5 + $0x130] sm:$0xff]
        %v2710 = vld [vmem:[#allocation5 + $0x138] sm:$0xff]
        %v2711 = vld [vmem:[%s12] sm:$0x3]
        %v2713 = vlaneseq
        %v2714 = vshrl.u32 %v2713, 7
        %v2715 = vsub.s32 0, %v2714
        %v2716 = vrot.slane %v2711, %v2715
        %v2717 = vlaneseq
        %v2718 = vshrl.u32 %v2717, 7
        %v2719 = vsub.s32 1, %v2718
        %v2720 = vrot.slane %v2711, %v2719
        %vm2723 = vcmask 261120
        %v2725 = vsel %vm2723, %v2668, 0
        %2727 = vmatprep.subr.mxu0 %v2672
        %2728 = vmatpush1.msra.mxu0 %v2671
        %2729 = vmatprep.subr.mxu0 %v2674
        %2730 = vmatpush1.msra.mxu0 %v2673
        %2731 = vmatprep.subr.mxu0 %v2676
        %2732 = vmatpush1.msra.mxu0 %v2675
        %2733 = vmatprep.subr.mxu0 %v2678
        %2734 = vmatpush1.msra.mxu0 %v2677
        %2735 = vmatprep.subr.mxu0 %v2680
        %2736 = vmatpush1.msra.mxu0 %v2679
        %2737 = vmatprep.subr.mxu0 %v2682
        %2738 = vmatpush1.msra.mxu0 %v2681
        %2739 = vmatprep.subr.mxu0 %v2684
        %2740 = vmatpush1.msra.mxu0 %v2683
        %2741 = vmatprep.subr.mxu0 %v2686
        %2742 = vmatpush1.msra.mxu0 %v2685
        %2743 = vmatprep.subr.mxu0 %v2688
        %2744 = vmatpush1.msra.mxu0 %v2687
        %2745 = vmatprep.subr.mxu0 %v2690
        %2746 = vmatpush1.msra.mxu0 %v2689
        %2747 = vmatprep.subr.mxu0 %v2692
        %2748 = vmatpush1.msra.mxu0 %v2691
        %2749 = vmatprep.subr.mxu0 %v2694
        %2750 = vmatpush1.msra.mxu0 %v2693
        %2751 = vmatprep.subr.mxu0 %v2696
        %2752 = vmatpush1.msra.mxu0 %v2695
        %2753 = vmatprep.subr.mxu0 %v2698
        %2754 = vmatpush1.msra.mxu0 %v2697
        %2755 = vmatprep.subr.mxu0 %v2700
        %2756 = vmatpush1.msra.mxu0 %v2699
        %2757 = vmatprep.subr.mxu0 %v2702
        %2758 = vmatpush1.msra.mxu0 %v2701
        %2759 = vmatprep.subr.mxu0 %v2704
        %2760 = vmatpush1.msra.mxu0 %v2703
        %2761 = vmatprep.subr.mxu0 %v2706
        %2762 = vmatpush1.msra.mxu0 %v2705
        %2763 = vmatprep.subr.mxu0 %v2708
        %2764 = vmatpush1.msra.mxu0 %v2707
        %2765 = vmatprep.subr.mxu0 %v2710
        %2766 = vmatpush1.msra.mxu0 %v2709
        %2767 = vmatprep.subr.mxu0 0.0
        %2768 = vmatpush1.msra.mxu0 0.0
        %2769 = vmatprep.subr.mxu0 0.0
        %2770 = vmatpush1.msra.mxu0 0.0
        %2771 = vmatprep.subr.mxu0 0.0
        %2772 = vmatpush1.msra.mxu0 0.0
        %2773 = vmatprep.subr.mxu0 0.0
        %2774 = vmatpush1.msra.mxu0 0.0
        %2775 = vmatprep.subr.mxu0 0.0
        %2776 = vmatpush1.msra.mxu0 0.0
        %2777 = vmatprep.subr.mxu0 0.0
        %2778 = vmatpush1.msra.mxu0 0.0
        %2779 = vmatprep.subr.mxu0 0.0
        %2780 = vmatpush1.msra.mxu0 0.0
        %2781 = vmatprep.subr.mxu0 0.0
        %2782 = vmatpush1.msra.mxu0 0.0
        %2783 = vmatprep.subr.mxu0 0.0
        %2784 = vmatpush1.msra.mxu0 0.0
        %2785 = vmatprep.subr.mxu0 0.0
        %2786 = vmatpush1.msra.mxu0 0.0
        %2787 = vmatprep.subr.mxu0 0.0
        %2788 = vmatpush1.msra.mxu0 0.0
        %2789 = vmatprep.subr.mxu0 0.0
        %2790 = vmatpush1.msra.mxu0 0.0
        %2791 = vmatprep.mubr.f32.mxu0 %v2725
        %2792 = vmatmul.mubr.f32.gmra.mrb[0].mxu0 %v2667
        %v2793 = vpop.f32.mrb[0].mxu0
        %v2794 = vadd.f32 %v2716, %v2793
        %v2795 = vpop.f32.mrb[0].mxu0
        %v2796 = vadd.f32 %v2720, %v2795
        %2797 = vdwg.mxu0
        %s2798 = scalar_lea.vmem [#allocation5], 320
        %v2799 = vld [vmem:[%s2798] sm:$0xff]
        %v2800 = vld [vmem:[%s2798 + $0x8] sm:$0xff]
        %v2801 = vld [vmem:[%s2798 + $0x10] sm:$0xff]
        %v2802 = vld [vmem:[%s2798 + $0x18] sm:$0xff]
        %v2803 = vld [vmem:[%s2798 + $0x20] sm:$0xff]
        %v2804 = vld [vmem:[%s2798 + $0x28] sm:$0xff]
        %v2805 = vld [vmem:[%s2798 + $0x30] sm:$0xff]
        %v2806 = vld [vmem:[%s2798 + $0x38] sm:$0xff]
        %v2807 = vld [vmem:[%s2798 + $0x40] sm:$0xff]
        %v2808 = vld [vmem:[%s2798 + $0x48] sm:$0xff]
        %v2809 = vld [vmem:[%s2798 + $0x50] sm:$0xff]
        %v2810 = vld [vmem:[%s2798 + $0x58] sm:$0xff]
        %v2811 = vld [vmem:[%s2798 + $0x60] sm:$0xff]
        %v2812 = vld [vmem:[%s2798 + $0x68] sm:$0xff]
        %v2813 = vld [vmem:[%s2798 + $0x70] sm:$0xff]
        %v2814 = vld [vmem:[%s2798 + $0x78] sm:$0xff]
        %v2815 = vld [vmem:[%s2798 + $0x80] sm:$0xff]
        %v2816 = vld [vmem:[%s2798 + $0x88] sm:$0xff]
        %v2817 = vld [vmem:[%s2798 + $0x90] sm:$0xff]
        %v2818 = vld [vmem:[%s2798 + $0x98] sm:$0xff]
        %v2819 = vld [vmem:[%s2798 + $0xa0] sm:$0xff]
        %v2820 = vld [vmem:[%s2798 + $0xa8] sm:$0xff]
        %v2821 = vld [vmem:[%s2798 + $0xb0] sm:$0xff]
        %v2822 = vld [vmem:[%s2798 + $0xb8] sm:$0xff]
        %v2823 = vld [vmem:[%s2798 + $0xc0] sm:$0xff]
        %v2824 = vld [vmem:[%s2798 + $0xc8] sm:$0xff]
        %v2825 = vld [vmem:[%s2798 + $0xd0] sm:$0xff]
        %v2826 = vld [vmem:[%s2798 + $0xd8] sm:$0xff]
        %v2827 = vld [vmem:[%s2798 + $0xe0] sm:$0xff]
        %v2828 = vld [vmem:[%s2798 + $0xe8] sm:$0xff]
        %v2829 = vld [vmem:[%s2798 + $0xf0] sm:$0xff]
        %v2830 = vld [vmem:[%s2798 + $0xf8] sm:$0xff]
        %v2831 = vld [vmem:[%s2798 + $0x100] sm:$0xff]
        %v2832 = vld [vmem:[%s2798 + $0x108] sm:$0xff]
        %v2833 = vld [vmem:[%s2798 + $0x110] sm:$0xff]
        %v2834 = vld [vmem:[%s2798 + $0x118] sm:$0xff]
        %v2835 = vld [vmem:[%s2798 + $0x120] sm:$0xff]
        %v2836 = vld [vmem:[%s2798 + $0x128] sm:$0xff]
        %v2837 = vld [vmem:[%s2798 + $0x130] sm:$0xff]
        %v2838 = vld [vmem:[%s2798 + $0x138] sm:$0xff]
        %v2842 = vrot.slane %v2667, 1
        %v2843 = vrot.slane %v2669, 1
        %v2844 = vsel %vm846, %v2842, %v2843
        %v2845 = vrot.slane %v2668, 1
        %v2846 = vrot.slane %v2670, 1
        %v2847 = vsel %vm846, %v2845, %v2846
        %v2849 = vsel %vm2723, %v2847, 0
        %2851 = vmatprep.subr.mxu0 %v2800
        %2852 = vmatpush1.msra.mxu0 %v2799
        %2853 = vmatprep.subr.mxu0 %v2802
        %2854 = vmatpush1.msra.mxu0 %v2801
        %2855 = vmatprep.subr.mxu0 %v2804
        %2856 = vmatpush1.msra.mxu0 %v2803
        %2857 = vmatprep.subr.mxu0 %v2806
        %2858 = vmatpush1.msra.mxu0 %v2805
        %2859 = vmatprep.subr.mxu0 %v2808
        %2860 = vmatpush1.msra.mxu0 %v2807
        %2861 = vmatprep.subr.mxu0 %v2810
        %2862 = vmatpush1.msra.mxu0 %v2809
        %2863 = vmatprep.subr.mxu0 %v2812
        %2864 = vmatpush1.msra.mxu0 %v2811
        %2865 = vmatprep.subr.mxu0 %v2814
        %2866 = vmatpush1.msra.mxu0 %v2813
        %2867 = vmatprep.subr.mxu0 %v2816
        %2868 = vmatpush1.msra.mxu0 %v2815
        %2869 = vmatprep.subr.mxu0 %v2818
        %2870 = vmatpush1.msra.mxu0 %v2817
        %2871 = vmatprep.subr.mxu0 %v2820
        %2872 = vmatpush1.msra.mxu0 %v2819
        %2873 = vmatprep.subr.mxu0 %v2822
        %2874 = vmatpush1.msra.mxu0 %v2821
        %2875 = vmatprep.subr.mxu0 %v2824
        %2876 = vmatpush1.msra.mxu0 %v2823
        %2877 = vmatprep.subr.mxu0 %v2826
        %2878 = vmatpush1.msra.mxu0 %v2825
        %2879 = vmatprep.subr.mxu0 %v2828
        %2880 = vmatpush1.msra.mxu0 %v2827
        %2881 = vmatprep.subr.mxu0 %v2830
        %2882 = vmatpush1.msra.mxu0 %v2829
        %2883 = vmatprep.subr.mxu0 %v2832
        %2884 = vmatpush1.msra.mxu0 %v2831
        %2885 = vmatprep.subr.mxu0 %v2834
        %2886 = vmatpush1.msra.mxu0 %v2833
        %2887 = vmatprep.subr.mxu0 %v2836
        %2888 = vmatpush1.msra.mxu0 %v2835
        %2889 = vmatprep.subr.mxu0 %v2838
        %2890 = vmatpush1.msra.mxu0 %v2837
        %2891 = vmatprep.subr.mxu0 0.0
        %2892 = vmatpush1.msra.mxu0 0.0
        %2893 = vmatprep.subr.mxu0 0.0
        %2894 = vmatpush1.msra.mxu0 0.0
        %2895 = vmatprep.subr.mxu0 0.0
        %2896 = vmatpush1.msra.mxu0 0.0
        %2897 = vmatprep.subr.mxu0 0.0
        %2898 = vmatpush1.msra.mxu0 0.0
        %2899 = vmatprep.subr.mxu0 0.0
        %2900 = vmatpush1.msra.mxu0 0.0
        %2901 = vmatprep.subr.mxu0 0.0
        %2902 = vmatpush1.msra.mxu0 0.0
        %2903 = vmatprep.subr.mxu0 0.0
        %2904 = vmatpush1.msra.mxu0 0.0
        %2905 = vmatprep.subr.mxu0 0.0
        %2906 = vmatpush1.msra.mxu0 0.0
        %2907 = vmatprep.subr.mxu0 0.0
        %2908 = vmatpush1.msra.mxu0 0.0
        %2909 = vmatprep.subr.mxu0 0.0
        %2910 = vmatpush1.msra.mxu0 0.0
        %2911 = vmatprep.subr.mxu0 0.0
        %2912 = vmatpush1.msra.mxu0 0.0
        %2913 = vmatprep.subr.mxu0 0.0
        %2914 = vmatpush1.msra.mxu0 0.0
        %2915 = vmatprep.mubr.f32.mxu0 %v2849
        %2916 = vmatmul.mubr.f32.gmra.mrb[0].mxu0 %v2844
        %v2917 = vpop.f32.mrb[0].mxu0
        %v2918 = vadd.f32 0.0, %v2917
        %v2919 = vpop.f32.mrb[0].mxu0
        %v2920 = vadd.f32 0.0, %v2919
        %2921 = vdwg.mxu0
        %v2922 = vadd.f32 %v2794, %v2918
        %v2923 = vadd.f32 %v2796, %v2920
        %s2924 = scalar_lea.vmem [#allocation5], 640
        %v2925 = vld [vmem:[%s2924] sm:$0xff]
        %v2926 = vld [vmem:[%s2924 + $0x8] sm:$0xff]
        %v2927 = vld [vmem:[%s2924 + $0x10] sm:$0xff]
        %v2928 = vld [vmem:[%s2924 + $0x18] sm:$0xff]
        %v2929 = vld [vmem:[%s2924 + $0x20] sm:$0xff]
        %v2930 = vld [vmem:[%s2924 + $0x28] sm:$0xff]
        %v2931 = vld [vmem:[%s2924 + $0x30] sm:$0xff]
        %v2932 = vld [vmem:[%s2924 + $0x38] sm:$0xff]
        %v2933 = vld [vmem:[%s2924 + $0x40] sm:$0xff]
        %v2934 = vld [vmem:[%s2924 + $0x48] sm:$0xff]
        %v2935 = vld [vmem:[%s2924 + $0x50] sm:$0xff]
        %v2936 = vld [vmem:[%s2924 + $0x58] sm:$0xff]
        %v2937 = vld [vmem:[%s2924 + $0x60] sm:$0xff]
        %v2938 = vld [vmem:[%s2924 + $0x68] sm:$0xff]
        %v2939 = vld [vmem:[%s2924 + $0x70] sm:$0xff]
        %v2940 = vld [vmem:[%s2924 + $0x78] sm:$0xff]
        %v2941 = vld [vmem:[%s2924 + $0x80] sm:$0xff]
        %v2942 = vld [vmem:[%s2924 + $0x88] sm:$0xff]
        %v2943 = vld [vmem:[%s2924 + $0x90] sm:$0xff]
        %v2944 = vld [vmem:[%s2924 + $0x98] sm:$0xff]
        %v2945 = vld [vmem:[%s2924 + $0xa0] sm:$0xff]
        %v2946 = vld [vmem:[%s2924 + $0xa8] sm:$0xff]
        %v2947 = vld [vmem:[%s2924 + $0xb0] sm:$0xff]
        %v2948 = vld [vmem:[%s2924 + $0xb8] sm:$0xff]
        %v2949 = vld [vmem:[%s2924 + $0xc0] sm:$0xff]
        %v2950 = vld [vmem:[%s2924 + $0xc8] sm:$0xff]
        %v2951 = vld [vmem:[%s2924 + $0xd0] sm:$0xff]
        %v2952 = vld [vmem:[%s2924 + $0xd8] sm:$0xff]
        %v2953 = vld [vmem:[%s2924 + $0xe0] sm:$0xff]
        %v2954 = vld [vmem:[%s2924 + $0xe8] sm:$0xff]
        %v2955 = vld [vmem:[%s2924 + $0xf0] sm:$0xff]
        %v2956 = vld [vmem:[%s2924 + $0xf8] sm:$0xff]
        %v2957 = vld [vmem:[%s2924 + $0x100] sm:$0xff]
        %v2958 = vld [vmem:[%s2924 + $0x108] sm:$0xff]
        %v2959 = vld [vmem:[%s2924 + $0x110] sm:$0xff]
        %v2960 = vld [vmem:[%s2924 + $0x118] sm:$0xff]
        %v2961 = vld [vmem:[%s2924 + $0x120] sm:$0xff]
        %v2962 = vld [vmem:[%s2924 + $0x128] sm:$0xff]
        %v2963 = vld [vmem:[%s2924 + $0x130] sm:$0xff]
        %v2964 = vld [vmem:[%s2924 + $0x138] sm:$0xff]
        %v2965 = vrot.slane %v2667, 2
        %v2966 = vrot.slane %v2669, 2
        %v2967 = vsel %vm970, %v2965, %v2966
        %v2968 = vrot.slane %v2668, 2
        %v2969 = vrot.slane %v2670, 2
        %v2970 = vsel %vm970, %v2968, %v2969
        %v2972 = vsel %vm2723, %v2970, 0
        %2974 = vmatprep.subr.mxu0 %v2926
        %2975 = vmatpush1.msra.mxu0 %v2925
        %2976 = vmatprep.subr.mxu0 %v2928
        %2977 = vmatpush1.msra.mxu0 %v2927
        %2978 = vmatprep.subr.mxu0 %v2930
        %2979 = vmatpush1.msra.mxu0 %v2929
        %2980 = vmatprep.subr.mxu0 %v2932
        %2981 = vmatpush1.msra.mxu0 %v2931
        %2982 = vmatprep.subr.mxu0 %v2934
        %2983 = vmatpush1.msra.mxu0 %v2933
        %2984 = vmatprep.subr.mxu0 %v2936
        %2985 = vmatpush1.msra.mxu0 %v2935
        %2986 = vmatprep.subr.mxu0 %v2938
        %2987 = vmatpush1.msra.mxu0 %v2937
        %2988 = vmatprep.subr.mxu0 %v2940
        %2989 = vmatpush1.msra.mxu0 %v2939
        %2990 = vmatprep.subr.mxu0 %v2942
        %2991 = vmatpush1.msra.mxu0 %v2941
        %2992 = vmatprep.subr.mxu0 %v2944
        %2993 = vmatpush1.msra.mxu0 %v2943
        %2994 = vmatprep.subr.mxu0 %v2946
        %2995 = vmatpush1.msra.mxu0 %v2945
        %2996 = vmatprep.subr.mxu0 %v2948
        %2997 = vmatpush1.msra.mxu0 %v2947
        %2998 = vmatprep.subr.mxu0 %v2950
        %2999 = vmatpush1.msra.mxu0 %v2949
        %3000 = vmatprep.subr.mxu0 %v2952
        %3001 = vmatpush1.msra.mxu0 %v2951
        %3002 = vmatprep.subr.mxu0 %v2954
        %3003 = vmatpush1.msra.mxu0 %v2953
        %3004 = vmatprep.subr.mxu0 %v2956
        %3005 = vmatpush1.msra.mxu0 %v2955
        %3006 = vmatprep.subr.mxu0 %v2958
        %3007 = vmatpush1.msra.mxu0 %v2957
        %3008 = vmatprep.subr.mxu0 %v2960
        %3009 = vmatpush1.msra.mxu0 %v2959
        %3010 = vmatprep.subr.mxu0 %v2962
        %3011 = vmatpush1.msra.mxu0 %v2961
        %3012 = vmatprep.subr.mxu0 %v2964
        %3013 = vmatpush1.msra.mxu0 %v2963
        %3014 = vmatprep.subr.mxu0 0.0
        %3015 = vmatpush1.msra.mxu0 0.0
        %3016 = vmatprep.subr.mxu0 0.0
        %3017 = vmatpush1.msra.mxu0 0.0
        %3018 = vmatprep.subr.mxu0 0.0
        %3019 = vmatpush1.msra.mxu0 0.0
        %3020 = vmatprep.subr.mxu0 0.0
        %3021 = vmatpush1.msra.mxu0 0.0
        %3022 = vmatprep.subr.mxu0 0.0
        %3023 = vmatpush1.msra.mxu0 0.0
        %3024 = vmatprep.subr.mxu0 0.0
        %3025 = vmatpush1.msra.mxu0 0.0
        %3026 = vmatprep.subr.mxu0 0.0
        %3027 = vmatpush1.msra.mxu0 0.0
        %3028 = vmatprep.subr.mxu0 0.0
        %3029 = vmatpush1.msra.mxu0 0.0
        %3030 = vmatprep.subr.mxu0 0.0
        %3031 = vmatpush1.msra.mxu0 0.0
        %3032 = vmatprep.subr.mxu0 0.0
        %3033 = vmatpush1.msra.mxu0 0.0
        %3034 = vmatprep.subr.mxu0 0.0
        %3035 = vmatpush1.msra.mxu0 0.0
        %3036 = vmatprep.subr.mxu0 0.0
        %3037 = vmatpush1.msra.mxu0 0.0
        %3038 = vmatprep.mubr.f32.mxu0 %v2972
        %3039 = vmatmul.mubr.f32.gmra.mrb[0].mxu0 %v2967
        %v3040 = vpop.f32.mrb[0].mxu0
        %v3041 = vadd.f32 0.0, %v3040
        %v3042 = vpop.f32.mrb[0].mxu0
        %v3043 = vadd.f32 0.0, %v3042
        %3044 = vdwg.mxu0
        %v3045 = vadd.f32 %v2922, %v3041
        %v3046 = vadd.f32 %v2923, %v3043
        %v3047 = vmax.f32 %v3045, 0.0
        %v3048 = vmax.f32 %v3046, 0.0
        %v3049 = vld [vmem:[%s13] sm:$0xff]
        %v3050 = vld [vmem:[%s13 + $0x8] sm:$0xff]
        %v3051 = vld [vmem:[%s13 + $0x10] sm:$0xff]
        %v3052 = vld [vmem:[%s13 + $0x18] sm:$0xff]
        %v3053 = vld [vmem:[%s13 + $0x20] sm:$0xff]
        %v3054 = vld [vmem:[%s13 + $0x28] sm:$0xff]
        %v3055 = vld [vmem:[%s13 + $0x30] sm:$0xff]
        %v3056 = vld [vmem:[%s13 + $0x38] sm:$0xff]
        %v3057 = vld [vmem:[%s13 + $0x40] sm:$0xff]
        %v3058 = vld [vmem:[%s13 + $0x48] sm:$0xff]
        %v3059 = vld [vmem:[%s13 + $0x50] sm:$0xff]
        %v3060 = vld [vmem:[%s13 + $0x58] sm:$0xff]
        %v3061 = vld [vmem:[%s13 + $0x60] sm:$0xff]
        %v3062 = vld [vmem:[%s13 + $0x68] sm:$0xff]
        %v3063 = vld [vmem:[%s13 + $0x70] sm:$0xff]
        %v3064 = vld [vmem:[%s13 + $0x78] sm:$0xff]
        %v3065 = vld [vmem:[%s13 + $0x80] sm:$0xff]
        %v3066 = vld [vmem:[%s13 + $0x88] sm:$0xff]
        %v3067 = vld [vmem:[%s13 + $0x90] sm:$0xff]
        %v3068 = vld [vmem:[%s13 + $0x98] sm:$0xff]
        %v3069 = vld [vmem:[%s13 + $0xa0] sm:$0xff]
        %v3070 = vld [vmem:[%s13 + $0xa8] sm:$0xff]
        %v3071 = vld [vmem:[%s13 + $0xb0] sm:$0xff]
        %v3072 = vld [vmem:[%s13 + $0xb8] sm:$0xff]
        %v3073 = vld [vmem:[%s13 + $0xc0] sm:$0xff]
        %v3074 = vld [vmem:[%s13 + $0xc8] sm:$0xff]
        %v3075 = vld [vmem:[%s13 + $0xd0] sm:$0xff]
        %v3076 = vld [vmem:[%s13 + $0xd8] sm:$0xff]
        %v3077 = vld [vmem:[%s13 + $0xe0] sm:$0xff]
        %v3078 = vld [vmem:[%s13 + $0xe8] sm:$0xff]
        %v3079 = vld [vmem:[%s13 + $0xf0] sm:$0xff]
        %v3080 = vld [vmem:[%s13 + $0xf8] sm:$0xff]
        %v3081 = vld [vmem:[%s13 + $0x100] sm:$0xff]
        %v3082 = vld [vmem:[%s13 + $0x108] sm:$0xff]
        %v3083 = vld [vmem:[%s13 + $0x110] sm:$0xff]
        %v3084 = vld [vmem:[%s13 + $0x118] sm:$0xff]
        %v3085 = vld [vmem:[%s13 + $0x120] sm:$0xff]
        %v3086 = vld [vmem:[%s13 + $0x128] sm:$0xff]
        %v3087 = vld [vmem:[%s13 + $0x130] sm:$0xff]
        %v3088 = vld [vmem:[%s13 + $0x138] sm:$0xff]
        %v3089 = vld [vmem:[%s13 + $0x140] sm:$0xff]
        %v3090 = vld [vmem:[%s13 + $0x148] sm:$0xff]
        %v3091 = vld [vmem:[%s13 + $0x150] sm:$0xff]
        %v3092 = vld [vmem:[%s13 + $0x158] sm:$0xff]
        %v3093 = vld [vmem:[%s13 + $0x160] sm:$0xff]
        %v3094 = vld [vmem:[%s13 + $0x168] sm:$0xff]
        %v3095 = vld [vmem:[%s13 + $0x170] sm:$0xff]
        %v3096 = vld [vmem:[%s13 + $0x178] sm:$0xff]
        %v3097 = vld [vmem:[%s13 + $0x180] sm:$0xff]
        %v3098 = vld [vmem:[%s13 + $0x188] sm:$0xff]
        %v3099 = vld [vmem:[%s13 + $0x190] sm:$0xff]
        %v3100 = vld [vmem:[%s13 + $0x198] sm:$0xff]
        %v3101 = vld [vmem:[%s13 + $0x1a0] sm:$0xff]
        %v3102 = vld [vmem:[%s13 + $0x1a8] sm:$0xff]
        %v3103 = vld [vmem:[%s13 + $0x1b0] sm:$0xff]
        %v3104 = vld [vmem:[%s13 + $0x1b8] sm:$0xff]
        %v3105 = vld [vmem:[%s13 + $0x1c0] sm:$0xff]
        %v3106 = vld [vmem:[%s13 + $0x1c8] sm:$0xff]
        %v3107 = vld [vmem:[%s13 + $0x1d0] sm:$0xff]
        %v3108 = vld [vmem:[%s13 + $0x1d8] sm:$0xff]
        %v3109 = vld [vmem:[%s13 + $0x1e0] sm:$0xff]
        %v3110 = vld [vmem:[%s13 + $0x1e8] sm:$0xff]
        %v3111 = vld [vmem:[%s13 + $0x1f0] sm:$0xff]
        %v3112 = vld [vmem:[%s13 + $0x1f8] sm:$0xff]
        %v3113 = vld [vmem:[%s13 + $0x200] sm:$0xff]
        %v3114 = vld [vmem:[%s13 + $0x208] sm:$0xff]
        %v3115 = vld [vmem:[%s13 + $0x210] sm:$0xff]
        %v3116 = vld [vmem:[%s13 + $0x218] sm:$0xff]
        %v3117 = vld [vmem:[%s13 + $0x220] sm:$0xff]
        %v3118 = vld [vmem:[%s13 + $0x228] sm:$0xff]
        %v3119 = vld [vmem:[%s13 + $0x230] sm:$0xff]
        %v3120 = vld [vmem:[%s13 + $0x238] sm:$0xff]
        %v3121 = vld [vmem:[%s13 + $0x240] sm:$0xff]
        %v3122 = vld [vmem:[%s13 + $0x248] sm:$0xff]
        %v3123 = vld [vmem:[%s13 + $0x250] sm:$0xff]
        %v3124 = vld [vmem:[%s13 + $0x258] sm:$0xff]
        %v3125 = vld [vmem:[%s13 + $0x260] sm:$0xff]
        %v3126 = vld [vmem:[%s13 + $0x268] sm:$0xff]
        %v3127 = vld [vmem:[%s13 + $0x270] sm:$0xff]
        %v3128 = vld [vmem:[%s13 + $0x278] sm:$0xff]
        %v3129 = vld [vmem:[%s13 + $0x280] sm:$0xff]
        %v3130 = vld [vmem:[%s13 + $0x288] sm:$0xff]
        %v3131 = vld [vmem:[%s13 + $0x290] sm:$0xff]
        %v3132 = vld [vmem:[%s13 + $0x298] sm:$0xff]
        %v3133 = vld [vmem:[%s13 + $0x2a0] sm:$0xff]
        %v3134 = vld [vmem:[%s13 + $0x2a8] sm:$0xff]
        %v3135 = vld [vmem:[%s13 + $0x2b0] sm:$0xff]
        %v3136 = vld [vmem:[%s13 + $0x2b8] sm:$0xff]
        %v3137 = vld [vmem:[%s13 + $0x2c0] sm:$0xff]
        %v3138 = vld [vmem:[%s13 + $0x2c8] sm:$0xff]
        %v3139 = vld [vmem:[%s13 + $0x2d0] sm:$0xff]
        %v3140 = vld [vmem:[%s13 + $0x2d8] sm:$0xff]
        %v3141 = vld [vmem:[%s13 + $0x2e0] sm:$0xff]
        %v3142 = vld [vmem:[%s13 + $0x2e8] sm:$0xff]
        %v3143 = vld [vmem:[%s13 + $0x2f0] sm:$0xff]
        %v3144 = vld [vmem:[%s13 + $0x2f8] sm:$0xff]
        %v3145 = vld [vmem:[%s14] sm:$0x7]
        %v3147 = vlaneseq
        %v3148 = vshrl.u32 %v3147, 7
        %v3149 = vsub.s32 0, %v3148
        %v3150 = vrot.slane %v3145, %v3149
        %v3151 = vlaneseq
        %v3152 = vshrl.u32 %v3151, 7
        %v3153 = vsub.s32 1, %v3152
        %v3154 = vrot.slane %v3145, %v3153
        %v3155 = vlaneseq
        %v3156 = vshrl.u32 %v3155, 7
        %v3157 = vsub.s32 2, %v3156
        %v3158 = vrot.slane %v3145, %v3157
        %3162 = vmatprep.subr.mxu0 %v3050
        %3163 = vmatpush1.msra.mxu0 %v3049
        %3164 = vmatprep.subr.mxu0 %v3053
        %3165 = vmatpush1.msra.mxu0 %v3052
        %3166 = vmatprep.subr.mxu0 %v3056
        %3167 = vmatpush1.msra.mxu0 %v3055
        %3168 = vmatprep.subr.mxu0 %v3059
        %3169 = vmatpush1.msra.mxu0 %v3058
        %3170 = vmatprep.subr.mxu0 %v3062
        %3171 = vmatpush1.msra.mxu0 %v3061
        %3172 = vmatprep.subr.mxu0 %v3065
        %3173 = vmatpush1.msra.mxu0 %v3064
        %3174 = vmatprep.subr.mxu0 %v3068
        %3175 = vmatpush1.msra.mxu0 %v3067
        %3176 = vmatprep.subr.mxu0 %v3071
        %3177 = vmatpush1.msra.mxu0 %v3070
        %3178 = vmatprep.subr.mxu0 %v3074
        %3179 = vmatpush1.msra.mxu0 %v3073
        %3180 = vmatprep.subr.mxu0 %v3077
        %3181 = vmatpush1.msra.mxu0 %v3076
        %3182 = vmatprep.subr.mxu0 %v3080
        %3183 = vmatpush1.msra.mxu0 %v3079
        %3184 = vmatprep.subr.mxu0 %v3083
        %3185 = vmatpush1.msra.mxu0 %v3082
        %3186 = vmatprep.subr.mxu0 %v3086
        %3187 = vmatpush1.msra.mxu0 %v3085
        %3188 = vmatprep.subr.mxu0 %v3089
        %3189 = vmatpush1.msra.mxu0 %v3088
        %3190 = vmatprep.subr.mxu0 %v3092
        %3191 = vmatpush1.msra.mxu0 %v3091
        %3192 = vmatprep.subr.mxu0 %v3095
        %3193 = vmatpush1.msra.mxu0 %v3094
        %3194 = vmatprep.subr.mxu0 %v3098
        %3195 = vmatpush1.msra.mxu0 %v3097
        %3196 = vmatprep.subr.mxu0 %v3101
        %3197 = vmatpush1.msra.mxu0 %v3100
        %3198 = vmatprep.subr.mxu0 %v3104
        %3199 = vmatpush1.msra.mxu0 %v3103
        %3200 = vmatprep.subr.mxu0 %v3107
        %3201 = vmatpush1.msra.mxu0 %v3106
        %3202 = vmatprep.subr.mxu0 %v3110
        %3203 = vmatpush1.msra.mxu0 %v3109
        %3204 = vmatprep.subr.mxu0 %v3113
        %3205 = vmatpush1.msra.mxu0 %v3112
        %3206 = vmatprep.subr.mxu0 %v3116
        %3207 = vmatpush1.msra.mxu0 %v3115
        %3208 = vmatprep.subr.mxu0 %v3119
        %3209 = vmatpush1.msra.mxu0 %v3118
        %3210 = vmatprep.subr.mxu0 %v3122
        %3211 = vmatpush1.msra.mxu0 %v3121
        %3212 = vmatprep.subr.mxu0 %v3125
        %3213 = vmatpush1.msra.mxu0 %v3124
        %3214 = vmatprep.subr.mxu0 %v3128
        %3215 = vmatpush1.msra.mxu0 %v3127
        %3216 = vmatprep.subr.mxu0 %v3131
        %3217 = vmatpush1.msra.mxu0 %v3130
        %3218 = vmatprep.subr.mxu0 %v3134
        %3219 = vmatpush1.msra.mxu0 %v3133
        %3220 = vmatprep.subr.mxu0 %v3137
        %3221 = vmatpush1.msra.mxu0 %v3136
        %3222 = vmatprep.subr.mxu0 %v3140
        %3223 = vmatpush1.msra.mxu0 %v3139
        %3224 = vmatprep.subr.mxu0 %v3143
        %3225 = vmatpush1.msra.mxu0 %v3142
        %3226 = vmatprep.mubr.f32.mxu0 %v3048
        %3227 = vmatmul.mubr.f32.gmra.mrb[0].mxu0 %v3047
        %v3228 = vpop.f32.mrb[0].mxu0
        %v3229 = vadd.f32 %v3150, %v3228
        %v3230 = vpop.f32.mrb[0].mxu0
        %v3231 = vadd.f32 %v3154, %v3230
        %3232 = vdwg.mxu0
        %3233 = vmatprep.subr.mxu0 0.0
        %3234 = vmatpush1.msra.mxu0 %v3051
        %3235 = vmatprep.subr.mxu0 0.0
        %3236 = vmatpush1.msra.mxu0 %v3054
        %3237 = vmatprep.subr.mxu0 0.0
        %3238 = vmatpush1.msra.mxu0 %v3057
        %3239 = vmatprep.subr.mxu0 0.0
        %3240 = vmatpush1.msra.mxu0 %v3060
        %3241 = vmatprep.subr.mxu0 0.0
        %3242 = vmatpush1.msra.mxu0 %v3063
        %3243 = vmatprep.subr.mxu0 0.0
        %3244 = vmatpush1.msra.mxu0 %v3066
        %3245 = vmatprep.subr.mxu0 0.0
        %3246 = vmatpush1.msra.mxu0 %v3069
        %3247 = vmatprep.subr.mxu0 0.0
        %3248 = vmatpush1.msra.mxu0 %v3072
        %3249 = vmatprep.subr.mxu0 0.0
        %3250 = vmatpush1.msra.mxu0 %v3075
        %3251 = vmatprep.subr.mxu0 0.0
        %3252 = vmatpush1.msra.mxu0 %v3078
        %3253 = vmatprep.subr.mxu0 0.0
        %3254 = vmatpush1.msra.mxu0 %v3081
        %3255 = vmatprep.subr.mxu0 0.0
        %3256 = vmatpush1.msra.mxu0 %v3084
        %3257 = vmatprep.subr.mxu0 0.0
        %3258 = vmatpush1.msra.mxu0 %v3087
        %3259 = vmatprep.subr.mxu0 0.0
        %3260 = vmatpush1.msra.mxu0 %v3090
        %3261 = vmatprep.subr.mxu0 0.0
        %3262 = vmatpush1.msra.mxu0 %v3093
        %3263 = vmatprep.subr.mxu0 0.0
        %3264 = vmatpush1.msra.mxu0 %v3096
        %3265 = vmatprep.subr.mxu0 0.0
        %3266 = vmatpush1.msra.mxu0 %v3099
        %3267 = vmatprep.subr.mxu0 0.0
        %3268 = vmatpush1.msra.mxu0 %v3102
        %3269 = vmatprep.subr.mxu0 0.0
        %3270 = vmatpush1.msra.mxu0 %v3105
        %3271 = vmatprep.subr.mxu0 0.0
        %3272 = vmatpush1.msra.mxu0 %v3108
        %3273 = vmatprep.subr.mxu0 0.0
        %3274 = vmatpush1.msra.mxu0 %v3111
        %3275 = vmatprep.subr.mxu0 0.0
        %3276 = vmatpush1.msra.mxu0 %v3114
        %3277 = vmatprep.subr.mxu0 0.0
        %3278 = vmatpush1.msra.mxu0 %v3117
        %3279 = vmatprep.subr.mxu0 0.0
        %3280 = vmatpush1.msra.mxu0 %v3120
        %3281 = vmatprep.subr.mxu0 0.0
        %3282 = vmatpush1.msra.mxu0 %v3123
        %3283 = vmatprep.subr.mxu0 0.0
        %3284 = vmatpush1.msra.mxu0 %v3126
        %3285 = vmatprep.subr.mxu0 0.0
        %3286 = vmatpush1.msra.mxu0 %v3129
        %3287 = vmatprep.subr.mxu0 0.0
        %3288 = vmatpush1.msra.mxu0 %v3132
        %3289 = vmatprep.subr.mxu0 0.0
        %3290 = vmatpush1.msra.mxu0 %v3135
        %3291 = vmatprep.subr.mxu0 0.0
        %3292 = vmatpush1.msra.mxu0 %v3138
        %3293 = vmatprep.subr.mxu0 0.0
        %3294 = vmatpush1.msra.mxu0 %v3141
        %3295 = vmatprep.subr.mxu0 0.0
        %3296 = vmatpush1.msra.mxu0 %v3144
        %3297 = vmatprep.mubr.f32.mxu0 %v3048
        %3298 = vmatmul.mubr.f32.gmra.mrb[0].mxu0 %v3047
        %v3299 = vpop.f32.mrb[0].mxu0
        %v3300 = vadd.f32 %v3158, %v3299
        %v3301 = vpop.f32.mrb[0].mxu0
        %3302 = vdwg.mxu0
        %s3303 = scalar_lea.vmem %s13, 768
        %v3304 = vld [vmem:[%s3303] sm:$0xff]
        %v3305 = vld [vmem:[%s3303 + $0x8] sm:$0xff]
        %v3306 = vld [vmem:[%s3303 + $0x10] sm:$0xff]
        %v3307 = vld [vmem:[%s3303 + $0x18] sm:$0xff]
        %v3308 = vld [vmem:[%s3303 + $0x20] sm:$0xff]
        %v3309 = vld [vmem:[%s3303 + $0x28] sm:$0xff]
        %v3310 = vld [vmem:[%s3303 + $0x30] sm:$0xff]
        %v3311 = vld [vmem:[%s3303 + $0x38] sm:$0xff]
        %v3312 = vld [vmem:[%s3303 + $0x40] sm:$0xff]
        %v3313 = vld [vmem:[%s3303 + $0x48] sm:$0xff]
        %v3314 = vld [vmem:[%s3303 + $0x50] sm:$0xff]
        %v3315 = vld [vmem:[%s3303 + $0x58] sm:$0xff]
        %v3316 = vld [vmem:[%s3303 + $0x60] sm:$0xff]
        %v3317 = vld [vmem:[%s3303 + $0x68] sm:$0xff]
        %v3318 = vld [vmem:[%s3303 + $0x70] sm:$0xff]
        %v3319 = vld [vmem:[%s3303 + $0x78] sm:$0xff]
        %v3320 = vld [vmem:[%s3303 + $0x80] sm:$0xff]
        %v3321 = vld [vmem:[%s3303 + $0x88] sm:$0xff]
        %v3322 = vld [vmem:[%s3303 + $0x90] sm:$0xff]
        %v3323 = vld [vmem:[%s3303 + $0x98] sm:$0xff]
        %v3324 = vld [vmem:[%s3303 + $0xa0] sm:$0xff]
        %v3325 = vld [vmem:[%s3303 + $0xa8] sm:$0xff]
        %v3326 = vld [vmem:[%s3303 + $0xb0] sm:$0xff]
        %v3327 = vld [vmem:[%s3303 + $0xb8] sm:$0xff]
        %v3328 = vld [vmem:[%s3303 + $0xc0] sm:$0xff]
        %v3329 = vld [vmem:[%s3303 + $0xc8] sm:$0xff]
        %v3330 = vld [vmem:[%s3303 + $0xd0] sm:$0xff]
        %v3331 = vld [vmem:[%s3303 + $0xd8] sm:$0xff]
        %v3332 = vld [vmem:[%s3303 + $0xe0] sm:$0xff]
        %v3333 = vld [vmem:[%s3303 + $0xe8] sm:$0xff]
        %v3334 = vld [vmem:[%s3303 + $0xf0] sm:$0xff]
        %v3335 = vld [vmem:[%s3303 + $0xf8] sm:$0xff]
        %v3336 = vld [vmem:[%s3303 + $0x100] sm:$0xff]
        %v3337 = vld [vmem:[%s3303 + $0x108] sm:$0xff]
        %v3338 = vld [vmem:[%s3303 + $0x110] sm:$0xff]
        %v3339 = vld [vmem:[%s3303 + $0x118] sm:$0xff]
        %v3340 = vld [vmem:[%s3303 + $0x120] sm:$0xff]
        %v3341 = vld [vmem:[%s3303 + $0x128] sm:$0xff]
        %v3342 = vld [vmem:[%s3303 + $0x130] sm:$0xff]
        %v3343 = vld [vmem:[%s3303 + $0x138] sm:$0xff]
        %v3344 = vld [vmem:[%s3303 + $0x140] sm:$0xff]
        %v3345 = vld [vmem:[%s3303 + $0x148] sm:$0xff]
        %v3346 = vld [vmem:[%s3303 + $0x150] sm:$0xff]
        %v3347 = vld [vmem:[%s3303 + $0x158] sm:$0xff]
        %v3348 = vld [vmem:[%s3303 + $0x160] sm:$0xff]
        %v3349 = vld [vmem:[%s3303 + $0x168] sm:$0xff]
        %v3350 = vld [vmem:[%s3303 + $0x170] sm:$0xff]
        %v3351 = vld [vmem:[%s3303 + $0x178] sm:$0xff]
        %v3352 = vld [vmem:[%s3303 + $0x180] sm:$0xff]
        %v3353 = vld [vmem:[%s3303 + $0x188] sm:$0xff]
        %v3354 = vld [vmem:[%s3303 + $0x190] sm:$0xff]
        %v3355 = vld [vmem:[%s3303 + $0x198] sm:$0xff]
        %v3356 = vld [vmem:[%s3303 + $0x1a0] sm:$0xff]
        %v3357 = vld [vmem:[%s3303 + $0x1a8] sm:$0xff]
        %v3358 = vld [vmem:[%s3303 + $0x1b0] sm:$0xff]
        %v3359 = vld [vmem:[%s3303 + $0x1b8] sm:$0xff]
        %v3360 = vld [vmem:[%s3303 + $0x1c0] sm:$0xff]
        %v3361 = vld [vmem:[%s3303 + $0x1c8] sm:$0xff]
        %v3362 = vld [vmem:[%s3303 + $0x1d0] sm:$0xff]
        %v3363 = vld [vmem:[%s3303 + $0x1d8] sm:$0xff]
        %v3364 = vld [vmem:[%s3303 + $0x1e0] sm:$0xff]
        %v3365 = vld [vmem:[%s3303 + $0x1e8] sm:$0xff]
        %v3366 = vld [vmem:[%s3303 + $0x1f0] sm:$0xff]
        %v3367 = vld [vmem:[%s3303 + $0x1f8] sm:$0xff]
        %v3368 = vld [vmem:[%s3303 + $0x200] sm:$0xff]
        %v3369 = vld [vmem:[%s3303 + $0x208] sm:$0xff]
        %v3370 = vld [vmem:[%s3303 + $0x210] sm:$0xff]
        %v3371 = vld [vmem:[%s3303 + $0x218] sm:$0xff]
        %v3372 = vld [vmem:[%s3303 + $0x220] sm:$0xff]
        %v3373 = vld [vmem:[%s3303 + $0x228] sm:$0xff]
        %v3374 = vld [vmem:[%s3303 + $0x230] sm:$0xff]
        %v3375 = vld [vmem:[%s3303 + $0x238] sm:$0xff]
        %v3376 = vld [vmem:[%s3303 + $0x240] sm:$0xff]
        %v3377 = vld [vmem:[%s3303 + $0x248] sm:$0xff]
        %v3378 = vld [vmem:[%s3303 + $0x250] sm:$0xff]
        %v3379 = vld [vmem:[%s3303 + $0x258] sm:$0xff]
        %v3380 = vld [vmem:[%s3303 + $0x260] sm:$0xff]
        %v3381 = vld [vmem:[%s3303 + $0x268] sm:$0xff]
        %v3382 = vld [vmem:[%s3303 + $0x270] sm:$0xff]
        %v3383 = vld [vmem:[%s3303 + $0x278] sm:$0xff]
        %v3384 = vld [vmem:[%s3303 + $0x280] sm:$0xff]
        %v3385 = vld [vmem:[%s3303 + $0x288] sm:$0xff]
        %v3386 = vld [vmem:[%s3303 + $0x290] sm:$0xff]
        %v3387 = vld [vmem:[%s3303 + $0x298] sm:$0xff]
        %v3388 = vld [vmem:[%s3303 + $0x2a0] sm:$0xff]
        %v3389 = vld [vmem:[%s3303 + $0x2a8] sm:$0xff]
        %v3390 = vld [vmem:[%s3303 + $0x2b0] sm:$0xff]
        %v3391 = vld [vmem:[%s3303 + $0x2b8] sm:$0xff]
        %v3392 = vld [vmem:[%s3303 + $0x2c0] sm:$0xff]
        %v3393 = vld [vmem:[%s3303 + $0x2c8] sm:$0xff]
        %v3394 = vld [vmem:[%s3303 + $0x2d0] sm:$0xff]
        %v3395 = vld [vmem:[%s3303 + $0x2d8] sm:$0xff]
        %v3396 = vld [vmem:[%s3303 + $0x2e0] sm:$0xff]
        %v3397 = vld [vmem:[%s3303 + $0x2e8] sm:$0xff]
        %v3398 = vld [vmem:[%s3303 + $0x2f0] sm:$0xff]
        %v3399 = vld [vmem:[%s3303 + $0x2f8] sm:$0xff]
        %v3402 = vrot.slane %v3047, 1
        %v3403 = vrot.slane %v3048, 1
        %3406 = vmatprep.subr.mxu0 %v3305
        %3407 = vmatpush1.msra.mxu0 %v3304
        %3408 = vmatprep.subr.mxu0 %v3308
        %3409 = vmatpush1.msra.mxu0 %v3307
        %3410 = vmatprep.subr.mxu0 %v3311
        %3411 = vmatpush1.msra.mxu0 %v3310
        %3412 = vmatprep.subr.mxu0 %v3314
        %3413 = vmatpush1.msra.mxu0 %v3313
        %3414 = vmatprep.subr.mxu0 %v3317
        %3415 = vmatpush1.msra.mxu0 %v3316
        %3416 = vmatprep.subr.mxu0 %v3320
        %3417 = vmatpush1.msra.mxu0 %v3319
        %3418 = vmatprep.subr.mxu0 %v3323
        %3419 = vmatpush1.msra.mxu0 %v3322
        %3420 = vmatprep.subr.mxu0 %v3326
        %3421 = vmatpush1.msra.mxu0 %v3325
        %3422 = vmatprep.subr.mxu0 %v3329
        %3423 = vmatpush1.msra.mxu0 %v3328
        %3424 = vmatprep.subr.mxu0 %v3332
        %3425 = vmatpush1.msra.mxu0 %v3331
        %3426 = vmatprep.subr.mxu0 %v3335
        %3427 = vmatpush1.msra.mxu0 %v3334
        %3428 = vmatprep.subr.mxu0 %v3338
        %3429 = vmatpush1.msra.mxu0 %v3337
        %3430 = vmatprep.subr.mxu0 %v3341
        %3431 = vmatpush1.msra.mxu0 %v3340
        %3432 = vmatprep.subr.mxu0 %v3344
        %3433 = vmatpush1.msra.mxu0 %v3343
        %3434 = vmatprep.subr.mxu0 %v3347
        %3435 = vmatpush1.msra.mxu0 %v3346
        %3436 = vmatprep.subr.mxu0 %v3350
        %3437 = vmatpush1.msra.mxu0 %v3349
        %3438 = vmatprep.subr.mxu0 %v3353
        %3439 = vmatpush1.msra.mxu0 %v3352
        %3440 = vmatprep.subr.mxu0 %v3356
        %3441 = vmatpush1.msra.mxu0 %v3355
        %3442 = vmatprep.subr.mxu0 %v3359
        %3443 = vmatpush1.msra.mxu0 %v3358
        %3444 = vmatprep.subr.mxu0 %v3362
        %3445 = vmatpush1.msra.mxu0 %v3361
        %3446 = vmatprep.subr.mxu0 %v3365
        %3447 = vmatpush1.msra.mxu0 %v3364
        %3448 = vmatprep.subr.mxu0 %v3368
        %3449 = vmatpush1.msra.mxu0 %v3367
        %3450 = vmatprep.subr.mxu0 %v3371
        %3451 = vmatpush1.msra.mxu0 %v3370
        %3452 = vmatprep.subr.mxu0 %v3374
        %3453 = vmatpush1.msra.mxu0 %v3373
        %3454 = vmatprep.subr.mxu0 %v3377
        %3455 = vmatpush1.msra.mxu0 %v3376
        %3456 = vmatprep.subr.mxu0 %v3380
        %3457 = vmatpush1.msra.mxu0 %v3379
        %3458 = vmatprep.subr.mxu0 %v3383
        %3459 = vmatpush1.msra.mxu0 %v3382
        %3460 = vmatprep.subr.mxu0 %v3386
        %3461 = vmatpush1.msra.mxu0 %v3385
        %3462 = vmatprep.subr.mxu0 %v3389
        %3463 = vmatpush1.msra.mxu0 %v3388
        %3464 = vmatprep.subr.mxu0 %v3392
        %3465 = vmatpush1.msra.mxu0 %v3391
        %3466 = vmatprep.subr.mxu0 %v3395
        %3467 = vmatpush1.msra.mxu0 %v3394
        %3468 = vmatprep.subr.mxu0 %v3398
        %3469 = vmatpush1.msra.mxu0 %v3397
        %3470 = vmatprep.mubr.f32.mxu0 %v3403
        %3471 = vmatmul.mubr.f32.gmra.mrb[0].mxu0 %v3402
        %v3472 = vpop.f32.mrb[0].mxu0
        %v3473 = vadd.f32 0.0, %v3472
        %v3474 = vpop.f32.mrb[0].mxu0
        %v3475 = vadd.f32 0.0, %v3474
        %3476 = vdwg.mxu0
        %3477 = vmatprep.subr.mxu0 0.0
        %3478 = vmatpush1.msra.mxu0 %v3306
        %3479 = vmatprep.subr.mxu0 0.0
        %3480 = vmatpush1.msra.mxu0 %v3309
        %3481 = vmatprep.subr.mxu0 0.0
        %3482 = vmatpush1.msra.mxu0 %v3312
        %3483 = vmatprep.subr.mxu0 0.0
        %3484 = vmatpush1.msra.mxu0 %v3315
        %3485 = vmatprep.subr.mxu0 0.0
        %3486 = vmatpush1.msra.mxu0 %v3318
        %3487 = vmatprep.subr.mxu0 0.0
        %3488 = vmatpush1.msra.mxu0 %v3321
        %3489 = vmatprep.subr.mxu0 0.0
        %3490 = vmatpush1.msra.mxu0 %v3324
        %3491 = vmatprep.subr.mxu0 0.0
        %3492 = vmatpush1.msra.mxu0 %v3327
        %3493 = vmatprep.subr.mxu0 0.0
        %3494 = vmatpush1.msra.mxu0 %v3330
        %3495 = vmatprep.subr.mxu0 0.0
        %3496 = vmatpush1.msra.mxu0 %v3333
        %3497 = vmatprep.subr.mxu0 0.0
        %3498 = vmatpush1.msra.mxu0 %v3336
        %3499 = vmatprep.subr.mxu0 0.0
        %3500 = vmatpush1.msra.mxu0 %v3339
        %3501 = vmatprep.subr.mxu0 0.0
        %3502 = vmatpush1.msra.mxu0 %v3342
        %3503 = vmatprep.subr.mxu0 0.0
        %3504 = vmatpush1.msra.mxu0 %v3345
        %3505 = vmatprep.subr.mxu0 0.0
        %3506 = vmatpush1.msra.mxu0 %v3348
        %3507 = vmatprep.subr.mxu0 0.0
        %3508 = vmatpush1.msra.mxu0 %v3351
        %3509 = vmatprep.subr.mxu0 0.0
        %3510 = vmatpush1.msra.mxu0 %v3354
        %3511 = vmatprep.subr.mxu0 0.0
        %3512 = vmatpush1.msra.mxu0 %v3357
        %3513 = vmatprep.subr.mxu0 0.0
        %3514 = vmatpush1.msra.mxu0 %v3360
        %3515 = vmatprep.subr.mxu0 0.0
        %3516 = vmatpush1.msra.mxu0 %v3363
        %3517 = vmatprep.subr.mxu0 0.0
        %3518 = vmatpush1.msra.mxu0 %v3366
        %3519 = vmatprep.subr.mxu0 0.0
        %3520 = vmatpush1.msra.mxu0 %v3369
        %3521 = vmatprep.subr.mxu0 0.0
        %3522 = vmatpush1.msra.mxu0 %v3372
        %3523 = vmatprep.subr.mxu0 0.0
        %3524 = vmatpush1.msra.mxu0 %v3375
        %3525 = vmatprep.subr.mxu0 0.0
        %3526 = vmatpush1.msra.mxu0 %v3378
        %3527 = vmatprep.subr.mxu0 0.0
        %3528 = vmatpush1.msra.mxu0 %v3381
        %3529 = vmatprep.subr.mxu0 0.0
        %3530 = vmatpush1.msra.mxu0 %v3384
        %3531 = vmatprep.subr.mxu0 0.0
        %3532 = vmatpush1.msra.mxu0 %v3387
        %3533 = vmatprep.subr.mxu0 0.0
        %3534 = vmatpush1.msra.mxu0 %v3390
        %3535 = vmatprep.subr.mxu0 0.0
        %3536 = vmatpush1.msra.mxu0 %v3393
        %3537 = vmatprep.subr.mxu0 0.0
        %3538 = vmatpush1.msra.mxu0 %v3396
        %3539 = vmatprep.subr.mxu0 0.0
        %3540 = vmatpush1.msra.mxu0 %v3399
        %3541 = vmatprep.mubr.f32.mxu0 %v3403
        %3542 = vmatmul.mubr.f32.gmra.mrb[0].mxu0 %v3402
        %v3543 = vpop.f32.mrb[0].mxu0
        %v3544 = vadd.f32 0.0, %v3543
        %v3545 = vpop.f32.mrb[0].mxu0
        %3546 = vdwg.mxu0
        %v3547 = vadd.f32 %v3229, %v3473
        %v3548 = vadd.f32 %v3231, %v3475
        %v3549 = vadd.f32 %v3300, %v3544
        %s3550 = scalar_lea.vmem %s13, 1536
        %v3551 = vld [vmem:[%s3550] sm:$0xff]
        %v3552 = vld [vmem:[%s3550 + $0x8] sm:$0xff]
        %v3553 = vld [vmem:[%s3550 + $0x10] sm:$0xff]
        %v3554 = vld [vmem:[%s3550 + $0x18] sm:$0xff]
        %v3555 = vld [vmem:[%s3550 + $0x20] sm:$0xff]
        %v3556 = vld [vmem:[%s3550 + $0x28] sm:$0xff]
        %v3557 = vld [vmem:[%s3550 + $0x30] sm:$0xff]
        %v3558 = vld [vmem:[%s3550 + $0x38] sm:$0xff]
        %v3559 = vld [vmem:[%s3550 + $0x40] sm:$0xff]
        %v3560 = vld [vmem:[%s3550 + $0x48] sm:$0xff]
        %v3561 = vld [vmem:[%s3550 + $0x50] sm:$0xff]
        %v3562 = vld [vmem:[%s3550 + $0x58] sm:$0xff]
        %v3563 = vld [vmem:[%s3550 + $0x60] sm:$0xff]
        %v3564 = vld [vmem:[%s3550 + $0x68] sm:$0xff]
        %v3565 = vld [vmem:[%s3550 + $0x70] sm:$0xff]
        %v3566 = vld [vmem:[%s3550 + $0x78] sm:$0xff]
        %v3567 = vld [vmem:[%s3550 + $0x80] sm:$0xff]
        %v3568 = vld [vmem:[%s3550 + $0x88] sm:$0xff]
        %v3569 = vld [vmem:[%s3550 + $0x90] sm:$0xff]
        %v3570 = vld [vmem:[%s3550 + $0x98] sm:$0xff]
        %v3571 = vld [vmem:[%s3550 + $0xa0] sm:$0xff]
        %v3572 = vld [vmem:[%s3550 + $0xa8] sm:$0xff]
        %v3573 = vld [vmem:[%s3550 + $0xb0] sm:$0xff]
        %v3574 = vld [vmem:[%s3550 + $0xb8] sm:$0xff]
        %v3575 = vld [vmem:[%s3550 + $0xc0] sm:$0xff]
        %v3576 = vld [vmem:[%s3550 + $0xc8] sm:$0xff]
        %v3577 = vld [vmem:[%s3550 + $0xd0] sm:$0xff]
        %v3578 = vld [vmem:[%s3550 + $0xd8] sm:$0xff]
        %v3579 = vld [vmem:[%s3550 + $0xe0] sm:$0xff]
        %v3580 = vld [vmem:[%s3550 + $0xe8] sm:$0xff]
        %v3581 = vld [vmem:[%s3550 + $0xf0] sm:$0xff]
        %v3582 = vld [vmem:[%s3550 + $0xf8] sm:$0xff]
        %v3583 = vld [vmem:[%s3550 + $0x100] sm:$0xff]
        %v3584 = vld [vmem:[%s3550 + $0x108] sm:$0xff]
        %v3585 = vld [vmem:[%s3550 + $0x110] sm:$0xff]
        %v3586 = vld [vmem:[%s3550 + $0x118] sm:$0xff]
        %v3587 = vld [vmem:[%s3550 + $0x120] sm:$0xff]
        %v3588 = vld [vmem:[%s3550 + $0x128] sm:$0xff]
        %v3589 = vld [vmem:[%s3550 + $0x130] sm:$0xff]
        %v3590 = vld [vmem:[%s3550 + $0x138] sm:$0xff]
        %v3591 = vld [vmem:[%s3550 + $0x140] sm:$0xff]
        %v3592 = vld [vmem:[%s3550 + $0x148] sm:$0xff]
        %v3593 = vld [vmem:[%s3550 + $0x150] sm:$0xff]
        %v3594 = vld [vmem:[%s3550 + $0x158] sm:$0xff]
        %v3595 = vld [vmem:[%s3550 + $0x160] sm:$0xff]
        %v3596 = vld [vmem:[%s3550 + $0x168] sm:$0xff]
        %v3597 = vld [vmem:[%s3550 + $0x170] sm:$0xff]
        %v3598 = vld [vmem:[%s3550 + $0x178] sm:$0xff]
        %v3599 = vld [vmem:[%s3550 + $0x180] sm:$0xff]
        %v3600 = vld [vmem:[%s3550 + $0x188] sm:$0xff]
        %v3601 = vld [vmem:[%s3550 + $0x190] sm:$0xff]
        %v3602 = vld [vmem:[%s3550 + $0x198] sm:$0xff]
        %v3603 = vld [vmem:[%s3550 + $0x1a0] sm:$0xff]
        %v3604 = vld [vmem:[%s3550 + $0x1a8] sm:$0xff]
        %v3605 = vld [vmem:[%s3550 + $0x1b0] sm:$0xff]
        %v3606 = vld [vmem:[%s3550 + $0x1b8] sm:$0xff]
        %v3607 = vld [vmem:[%s3550 + $0x1c0] sm:$0xff]
        %v3608 = vld [vmem:[%s3550 + $0x1c8] sm:$0xff]
        %v3609 = vld [vmem:[%s3550 + $0x1d0] sm:$0xff]
        %v3610 = vld [vmem:[%s3550 + $0x1d8] sm:$0xff]
        %v3611 = vld [vmem:[%s3550 + $0x1e0] sm:$0xff]
        %v3612 = vld [vmem:[%s3550 + $0x1e8] sm:$0xff]
        %v3613 = vld [vmem:[%s3550 + $0x1f0] sm:$0xff]
        %v3614 = vld [vmem:[%s3550 + $0x1f8] sm:$0xff]
        %v3615 = vld [vmem:[%s3550 + $0x200] sm:$0xff]
        %v3616 = vld [vmem:[%s3550 + $0x208] sm:$0xff]
        %v3617 = vld [vmem:[%s3550 + $0x210] sm:$0xff]
        %v3618 = vld [vmem:[%s3550 + $0x218] sm:$0xff]
        %v3619 = vld [vmem:[%s3550 + $0x220] sm:$0xff]
        %v3620 = vld [vmem:[%s3550 + $0x228] sm:$0xff]
        %v3621 = vld [vmem:[%s3550 + $0x230] sm:$0xff]
        %v3622 = vld [vmem:[%s3550 + $0x238] sm:$0xff]
        %v3623 = vld [vmem:[%s3550 + $0x240] sm:$0xff]
        %v3624 = vld [vmem:[%s3550 + $0x248] sm:$0xff]
        %v3625 = vld [vmem:[%s3550 + $0x250] sm:$0xff]
        %v3626 = vld [vmem:[%s3550 + $0x258] sm:$0xff]
        %v3627 = vld [vmem:[%s3550 + $0x260] sm:$0xff]
        %v3628 = vld [vmem:[%s3550 + $0x268] sm:$0xff]
        %v3629 = vld [vmem:[%s3550 + $0x270] sm:$0xff]
        %v3630 = vld [vmem:[%s3550 + $0x278] sm:$0xff]
        %v3631 = vld [vmem:[%s3550 + $0x280] sm:$0xff]
        %v3632 = vld [vmem:[%s3550 + $0x288] sm:$0xff]
        %v3633 = vld [vmem:[%s3550 + $0x290] sm:$0xff]
        %v3634 = vld [vmem:[%s3550 + $0x298] sm:$0xff]
        %v3635 = vld [vmem:[%s3550 + $0x2a0] sm:$0xff]
        %v3636 = vld [vmem:[%s3550 + $0x2a8] sm:$0xff]
        %v3637 = vld [vmem:[%s3550 + $0x2b0] sm:$0xff]
        %v3638 = vld [vmem:[%s3550 + $0x2b8] sm:$0xff]
        %v3639 = vld [vmem:[%s3550 + $0x2c0] sm:$0xff]
        %v3640 = vld [vmem:[%s3550 + $0x2c8] sm:$0xff]
        %v3641 = vld [vmem:[%s3550 + $0x2d0] sm:$0xff]
        %v3642 = vld [vmem:[%s3550 + $0x2d8] sm:$0xff]
        %v3643 = vld [vmem:[%s3550 + $0x2e0] sm:$0xff]
        %v3644 = vld [vmem:[%s3550 + $0x2e8] sm:$0xff]
        %v3645 = vld [vmem:[%s3550 + $0x2f0] sm:$0xff]
        %v3646 = vld [vmem:[%s3550 + $0x2f8] sm:$0xff]
        %v3647 = vrot.slane %v3047, 2
        %v3648 = vrot.slane %v3048, 2
        %3651 = vmatprep.subr.mxu0 %v3552
        %3652 = vmatpush1.msra.mxu0 %v3551
        %3653 = vmatprep.subr.mxu0 %v3555
        %3654 = vmatpush1.msra.mxu0 %v3554
        %3655 = vmatprep.subr.mxu0 %v3558
        %3656 = vmatpush1.msra.mxu0 %v3557
        %3657 = vmatprep.subr.mxu0 %v3561
        %3658 = vmatpush1.msra.mxu0 %v3560
        %3659 = vmatprep.subr.mxu0 %v3564
        %3660 = vmatpush1.msra.mxu0 %v3563
        %3661 = vmatprep.subr.mxu0 %v3567
        %3662 = vmatpush1.msra.mxu0 %v3566
        %3663 = vmatprep.subr.mxu0 %v3570
        %3664 = vmatpush1.msra.mxu0 %v3569
        %3665 = vmatprep.subr.mxu0 %v3573
        %3666 = vmatpush1.msra.mxu0 %v3572
        %3667 = vmatprep.subr.mxu0 %v3576
        %3668 = vmatpush1.msra.mxu0 %v3575
        %3669 = vmatprep.subr.mxu0 %v3579
        %3670 = vmatpush1.msra.mxu0 %v3578
        %3671 = vmatprep.subr.mxu0 %v3582
        %3672 = vmatpush1.msra.mxu0 %v3581
        %3673 = vmatprep.subr.mxu0 %v3585
        %3674 = vmatpush1.msra.mxu0 %v3584
        %3675 = vmatprep.subr.mxu0 %v3588
        %3676 = vmatpush1.msra.mxu0 %v3587
        %3677 = vmatprep.subr.mxu0 %v3591
        %3678 = vmatpush1.msra.mxu0 %v3590
        %3679 = vmatprep.subr.mxu0 %v3594
        %3680 = vmatpush1.msra.mxu0 %v3593
        %3681 = vmatprep.subr.mxu0 %v3597
        %3682 = vmatpush1.msra.mxu0 %v3596
        %3683 = vmatprep.subr.mxu0 %v3600
        %3684 = vmatpush1.msra.mxu0 %v3599
        %3685 = vmatprep.subr.mxu0 %v3603
        %3686 = vmatpush1.msra.mxu0 %v3602
        %3687 = vmatprep.subr.mxu0 %v3606
        %3688 = vmatpush1.msra.mxu0 %v3605
        %3689 = vmatprep.subr.mxu0 %v3609
        %3690 = vmatpush1.msra.mxu0 %v3608
        %3691 = vmatprep.subr.mxu0 %v3612
        %3692 = vmatpush1.msra.mxu0 %v3611
        %3693 = vmatprep.subr.mxu0 %v3615
        %3694 = vmatpush1.msra.mxu0 %v3614
        %3695 = vmatprep.subr.mxu0 %v3618
        %3696 = vmatpush1.msra.mxu0 %v3617
        %3697 = vmatprep.subr.mxu0 %v3621
        %3698 = vmatpush1.msra.mxu0 %v3620
        %3699 = vmatprep.subr.mxu0 %v3624
        %3700 = vmatpush1.msra.mxu0 %v3623
        %3701 = vmatprep.subr.mxu0 %v3627
        %3702 = vmatpush1.msra.mxu0 %v3626
        %3703 = vmatprep.subr.mxu0 %v3630
        %3704 = vmatpush1.msra.mxu0 %v3629
        %3705 = vmatprep.subr.mxu0 %v3633
        %3706 = vmatpush1.msra.mxu0 %v3632
        %3707 = vmatprep.subr.mxu0 %v3636
        %3708 = vmatpush1.msra.mxu0 %v3635
        %3709 = vmatprep.subr.mxu0 %v3639
        %3710 = vmatpush1.msra.mxu0 %v3638
        %3711 = vmatprep.subr.mxu0 %v3642
        %3712 = vmatpush1.msra.mxu0 %v3641
        %3713 = vmatprep.subr.mxu0 %v3645
        %3714 = vmatpush1.msra.mxu0 %v3644
        %3715 = vmatprep.mubr.f32.mxu0 %v3648
        %3716 = vmatmul.mubr.f32.gmra.mrb[0].mxu0 %v3647
        %v3717 = vpop.f32.mrb[0].mxu0
        %v3718 = vadd.f32 0.0, %v3717
        %v3719 = vpop.f32.mrb[0].mxu0
        %v3720 = vadd.f32 0.0, %v3719
        %3721 = vdwg.mxu0
        %3722 = vmatprep.subr.mxu0 0.0
        %3723 = vmatpush1.msra.mxu0 %v3553
        %3724 = vmatprep.subr.mxu0 0.0
        %3725 = vmatpush1.msra.mxu0 %v3556
        %3726 = vmatprep.subr.mxu0 0.0
        %3727 = vmatpush1.msra.mxu0 %v3559
        %3728 = vmatprep.subr.mxu0 0.0
        %3729 = vmatpush1.msra.mxu0 %v3562
        %3730 = vmatprep.subr.mxu0 0.0
        %3731 = vmatpush1.msra.mxu0 %v3565
        %3732 = vmatprep.subr.mxu0 0.0
        %3733 = vmatpush1.msra.mxu0 %v3568
        %3734 = vmatprep.subr.mxu0 0.0
        %3735 = vmatpush1.msra.mxu0 %v3571
        %3736 = vmatprep.subr.mxu0 0.0
        %3737 = vmatpush1.msra.mxu0 %v3574
        %3738 = vmatprep.subr.mxu0 0.0
        %3739 = vmatpush1.msra.mxu0 %v3577
        %3740 = vmatprep.subr.mxu0 0.0
        %3741 = vmatpush1.msra.mxu0 %v3580
        %3742 = vmatprep.subr.mxu0 0.0
        %3743 = vmatpush1.msra.mxu0 %v3583
        %3744 = vmatprep.subr.mxu0 0.0
        %3745 = vmatpush1.msra.mxu0 %v3586
        %3746 = vmatprep.subr.mxu0 0.0
        %3747 = vmatpush1.msra.mxu0 %v3589
        %3748 = vmatprep.subr.mxu0 0.0
        %3749 = vmatpush1.msra.mxu0 %v3592
        %3750 = vmatprep.subr.mxu0 0.0
        %3751 = vmatpush1.msra.mxu0 %v3595
        %3752 = vmatprep.subr.mxu0 0.0
        %3753 = vmatpush1.msra.mxu0 %v3598
        %3754 = vmatprep.subr.mxu0 0.0
        %3755 = vmatpush1.msra.mxu0 %v3601
        %3756 = vmatprep.subr.mxu0 0.0
        %3757 = vmatpush1.msra.mxu0 %v3604
        %3758 = vmatprep.subr.mxu0 0.0
        %3759 = vmatpush1.msra.mxu0 %v3607
        %3760 = vmatprep.subr.mxu0 0.0
        %3761 = vmatpush1.msra.mxu0 %v3610
        %3762 = vmatprep.subr.mxu0 0.0
        %3763 = vmatpush1.msra.mxu0 %v3613
        %3764 = vmatprep.subr.mxu0 0.0
        %3765 = vmatpush1.msra.mxu0 %v3616
        %3766 = vmatprep.subr.mxu0 0.0
        %3767 = vmatpush1.msra.mxu0 %v3619
        %3768 = vmatprep.subr.mxu0 0.0
        %3769 = vmatpush1.msra.mxu0 %v3622
        %3770 = vmatprep.subr.mxu0 0.0
        %3771 = vmatpush1.msra.mxu0 %v3625
        %3772 = vmatprep.subr.mxu0 0.0
        %3773 = vmatpush1.msra.mxu0 %v3628
        %3774 = vmatprep.subr.mxu0 0.0
        %3775 = vmatpush1.msra.mxu0 %v3631
        %3776 = vmatprep.subr.mxu0 0.0
        %3777 = vmatpush1.msra.mxu0 %v3634
        %3778 = vmatprep.subr.mxu0 0.0
        %3779 = vmatpush1.msra.mxu0 %v3637
        %3780 = vmatprep.subr.mxu0 0.0
        %3781 = vmatpush1.msra.mxu0 %v3640
        %3782 = vmatprep.subr.mxu0 0.0
        %3783 = vmatpush1.msra.mxu0 %v3643
        %3784 = vmatprep.subr.mxu0 0.0
        %3785 = vmatpush1.msra.mxu0 %v3646
        %3786 = vmatprep.mubr.f32.mxu0 %v3648
        %3787 = vmatmul.mubr.f32.gmra.mrb[0].mxu0 %v3647
        %v3788 = vpop.f32.mrb[0].mxu0
        %v3789 = vadd.f32 0.0, %v3788
        %v3790 = vpop.f32.mrb[0].mxu0
        %3791 = vdwg.mxu0
        %v3792 = vadd.f32 %v3547, %v3718
        %v3793 = vadd.f32 %v3548, %v3720
        %v3794 = vadd.f32 %v3549, %v3789
        %v3795 = vmax.f32 %v3792, 0.0
        %v3796 = vmax.f32 %v3793, 0.0
        %v3797 = vmax.f32 %v3794, 0.0
        %v3798 = vld [vmem:[%s15] sm:$0xff]
        %v3799 = vld [vmem:[%s15 + $0x8] sm:$0xff]
        %v3800 = vld [vmem:[%s15 + $0x10] sm:$0xff]
        %v3801 = vld [vmem:[%s15 + $0x18] sm:$0xff]
        %v3802 = vld [vmem:[%s15 + $0x20] sm:$0xff]
        %v3803 = vld [vmem:[%s15 + $0x28] sm:$0xff]
        %v3804 = vld [vmem:[%s15 + $0x30] sm:$0xff]
        %v3805 = vld [vmem:[%s15 + $0x38] sm:$0xff]
        %v3806 = vld [vmem:[%s15 + $0x40] sm:$0xff]
        %v3807 = vld [vmem:[%s15 + $0x48] sm:$0xff]
        %v3808 = vld [vmem:[%s15 + $0x50] sm:$0xff]
        %v3809 = vld [vmem:[%s15 + $0x58] sm:$0xff]
        %v3810 = vld [vmem:[%s15 + $0x60] sm:$0xff]
        %v3811 = vld [vmem:[%s15 + $0x68] sm:$0xff]
        %v3812 = vld [vmem:[%s15 + $0x70] sm:$0xff]
        %v3813 = vld [vmem:[%s15 + $0x78] sm:$0xff]
        %v3814 = vld [vmem:[%s15 + $0x80] sm:$0xff]
        %v3815 = vld [vmem:[%s15 + $0x88] sm:$0xff]
        %v3816 = vld [vmem:[%s15 + $0x90] sm:$0xff]
        %v3817 = vld [vmem:[%s15 + $0x98] sm:$0xff]
        %v3818 = vld [vmem:[%s15 + $0xa0] sm:$0xff]
        %v3819 = vld [vmem:[%s15 + $0xa8] sm:$0xff]
        %v3820 = vld [vmem:[%s15 + $0xb0] sm:$0xff]
        %v3821 = vld [vmem:[%s15 + $0xb8] sm:$0xff]
        %v3822 = vld [vmem:[%s15 + $0xc0] sm:$0xff]
        %v3823 = vld [vmem:[%s15 + $0xc8] sm:$0xff]
        %v3824 = vld [vmem:[%s15 + $0xd0] sm:$0xff]
        %v3825 = vld [vmem:[%s15 + $0xd8] sm:$0xff]
        %v3826 = vld [vmem:[%s15 + $0xe0] sm:$0xff]
        %v3827 = vld [vmem:[%s15 + $0xe8] sm:$0xff]
        %v3828 = vld [vmem:[%s15 + $0xf0] sm:$0xff]
        %v3829 = vld [vmem:[%s15 + $0xf8] sm:$0xff]
        %v3830 = vld [vmem:[%s15 + $0x100] sm:$0xff]
        %v3831 = vld [vmem:[%s15 + $0x108] sm:$0xff]
        %v3832 = vld [vmem:[%s15 + $0x110] sm:$0xff]
        %v3833 = vld [vmem:[%s15 + $0x118] sm:$0xff]
        %v3834 = vld [vmem:[%s15 + $0x120] sm:$0xff]
        %v3835 = vld [vmem:[%s15 + $0x128] sm:$0xff]
        %v3836 = vld [vmem:[%s15 + $0x130] sm:$0xff]
        %v3837 = vld [vmem:[%s15 + $0x138] sm:$0xff]
        %v3838 = vld [vmem:[%s15 + $0x140] sm:$0xff]
        %v3839 = vld [vmem:[%s15 + $0x148] sm:$0xff]
        %v3840 = vld [vmem:[%s15 + $0x150] sm:$0xff]
        %v3841 = vld [vmem:[%s15 + $0x158] sm:$0xff]
        %v3842 = vld [vmem:[%s15 + $0x160] sm:$0xff]
        %v3843 = vld [vmem:[%s15 + $0x168] sm:$0xff]
        %v3844 = vld [vmem:[%s15 + $0x170] sm:$0xff]
        %v3845 = vld [vmem:[%s15 + $0x178] sm:$0xff]
        %v3846 = vld [vmem:[%s15 + $0x180] sm:$0xff]
        %v3847 = vld [vmem:[%s15 + $0x188] sm:$0xff]
        %v3848 = vld [vmem:[%s15 + $0x190] sm:$0xff]
        %v3849 = vld [vmem:[%s15 + $0x198] sm:$0xff]
        %v3850 = vld [vmem:[%s15 + $0x1a0] sm:$0xff]
        %v3851 = vld [vmem:[%s15 + $0x1a8] sm:$0xff]
        %v3852 = vld [vmem:[%s15 + $0x1b0] sm:$0xff]
        %v3853 = vld [vmem:[%s15 + $0x1b8] sm:$0xff]
        %v3854 = vld [vmem:[%s15 + $0x1c0] sm:$0xff]
        %v3855 = vld [vmem:[%s15 + $0x1c8] sm:$0xff]
        %v3856 = vld [vmem:[%s15 + $0x1d0] sm:$0xff]
        %v3857 = vld [vmem:[%s15 + $0x1d8] sm:$0xff]
        %v3858 = vld [vmem:[%s15 + $0x1e0] sm:$0xff]
        %v3859 = vld [vmem:[%s15 + $0x1e8] sm:$0xff]
        %v3860 = vld [vmem:[%s15 + $0x1f0] sm:$0xff]
        %v3861 = vld [vmem:[%s15 + $0x1f8] sm:$0xff]
        %v3862 = vld [vmem:[%s15 + $0x200] sm:$0xff]
        %v3863 = vld [vmem:[%s15 + $0x208] sm:$0xff]
        %v3864 = vld [vmem:[%s15 + $0x210] sm:$0xff]
        %v3865 = vld [vmem:[%s15 + $0x218] sm:$0xff]
        %v3866 = vld [vmem:[%s15 + $0x220] sm:$0xff]
        %v3867 = vld [vmem:[%s15 + $0x228] sm:$0xff]
        %v3868 = vld [vmem:[%s15 + $0x230] sm:$0xff]
        %v3869 = vld [vmem:[%s15 + $0x238] sm:$0xff]
        %v3870 = vld [vmem:[%s15 + $0x240] sm:$0xff]
        %v3871 = vld [vmem:[%s15 + $0x248] sm:$0xff]
        %v3872 = vld [vmem:[%s15 + $0x250] sm:$0xff]
        %v3873 = vld [vmem:[%s15 + $0x258] sm:$0xff]
        %v3874 = vld [vmem:[%s15 + $0x260] sm:$0xff]
        %v3875 = vld [vmem:[%s15 + $0x268] sm:$0xff]
        %v3876 = vld [vmem:[%s15 + $0x270] sm:$0xff]
        %v3877 = vld [vmem:[%s15 + $0x278] sm:$0xff]
        %v3878 = vld [vmem:[%s15 + $0x280] sm:$0xff]
        %v3879 = vld [vmem:[%s15 + $0x288] sm:$0xff]
        %v3880 = vld [vmem:[%s15 + $0x290] sm:$0xff]
        %v3881 = vld [vmem:[%s15 + $0x298] sm:$0xff]
        %v3882 = vld [vmem:[%s15 + $0x2a0] sm:$0xff]
        %v3883 = vld [vmem:[%s15 + $0x2a8] sm:$0xff]
        %v3884 = vld [vmem:[%s15 + $0x2b0] sm:$0xff]
        %v3885 = vld [vmem:[%s15 + $0x2b8] sm:$0xff]
        %v3886 = vld [vmem:[%s15 + $0x2c0] sm:$0xff]
        %v3887 = vld [vmem:[%s15 + $0x2c8] sm:$0xff]
        %v3888 = vld [vmem:[%s15 + $0x2d0] sm:$0xff]
        %v3889 = vld [vmem:[%s15 + $0x2d8] sm:$0xff]
        %v3890 = vld [vmem:[%s15 + $0x2e0] sm:$0xff]
        %v3891 = vld [vmem:[%s15 + $0x2e8] sm:$0xff]
        %v3892 = vld [vmem:[%s15 + $0x2f0] sm:$0xff]
        %v3893 = vld [vmem:[%s15 + $0x2f8] sm:$0xff]
        %v3894 = vld [vmem:[%s16] sm:$0x3]
        %v3896 = vlaneseq
        %v3897 = vshrl.u32 %v3896, 7
        %v3898 = vsub.s32 0, %v3897
        %v3899 = vrot.slane %v3894, %v3898
        %v3900 = vlaneseq
        %v3901 = vshrl.u32 %v3900, 7
        %v3902 = vsub.s32 1, %v3901
        %v3903 = vrot.slane %v3894, %v3902
        %3906 = vmatprep.subr.mxu0 %v3799
        %3907 = vmatpush1.msra.mxu0 %v3798
        %3908 = vmatprep.subr.mxu0 %v3801
        %3909 = vmatpush1.msra.mxu0 %v3800
        %3910 = vmatprep.subr.mxu0 %v3803
        %3911 = vmatpush1.msra.mxu0 %v3802
        %3912 = vmatprep.subr.mxu0 %v3805
        %3913 = vmatpush1.msra.mxu0 %v3804
        %3914 = vmatprep.subr.mxu0 %v3807
        %3915 = vmatpush1.msra.mxu0 %v3806
        %3916 = vmatprep.subr.mxu0 %v3809
        %3917 = vmatpush1.msra.mxu0 %v3808
        %3918 = vmatprep.subr.mxu0 %v3811
        %3919 = vmatpush1.msra.mxu0 %v3810
        %3920 = vmatprep.subr.mxu0 %v3813
        %3921 = vmatpush1.msra.mxu0 %v3812
        %3922 = vmatprep.subr.mxu0 %v3815
        %3923 = vmatpush1.msra.mxu0 %v3814
        %3924 = vmatprep.subr.mxu0 %v3817
        %3925 = vmatpush1.msra.mxu0 %v3816
        %3926 = vmatprep.subr.mxu0 %v3819
        %3927 = vmatpush1.msra.mxu0 %v3818
        %3928 = vmatprep.subr.mxu0 %v3821
        %3929 = vmatpush1.msra.mxu0 %v3820
        %3930 = vmatprep.subr.mxu0 %v3823
        %3931 = vmatpush1.msra.mxu0 %v3822
        %3932 = vmatprep.subr.mxu0 %v3825
        %3933 = vmatpush1.msra.mxu0 %v3824
        %3934 = vmatprep.subr.mxu0 %v3827
        %3935 = vmatpush1.msra.mxu0 %v3826
        %3936 = vmatprep.subr.mxu0 %v3829
        %3937 = vmatpush1.msra.mxu0 %v3828
        %3938 = vmatprep.subr.mxu0 %v3831
        %3939 = vmatpush1.msra.mxu0 %v3830
        %3940 = vmatprep.subr.mxu0 %v3833
        %3941 = vmatpush1.msra.mxu0 %v3832
        %3942 = vmatprep.subr.mxu0 %v3835
        %3943 = vmatpush1.msra.mxu0 %v3834
        %3944 = vmatprep.subr.mxu0 %v3837
        %3945 = vmatpush1.msra.mxu0 %v3836
        %3946 = vmatprep.subr.mxu0 %v3839
        %3947 = vmatpush1.msra.mxu0 %v3838
        %3948 = vmatprep.subr.mxu0 %v3841
        %3949 = vmatpush1.msra.mxu0 %v3840
        %3950 = vmatprep.subr.mxu0 %v3843
        %3951 = vmatpush1.msra.mxu0 %v3842
        %3952 = vmatprep.subr.mxu0 %v3845
        %3953 = vmatpush1.msra.mxu0 %v3844
        %3954 = vmatprep.subr.mxu0 %v3847
        %3955 = vmatpush1.msra.mxu0 %v3846
        %3956 = vmatprep.subr.mxu0 %v3849
        %3957 = vmatpush1.msra.mxu0 %v3848
        %3958 = vmatprep.subr.mxu0 %v3851
        %3959 = vmatpush1.msra.mxu0 %v3850
        %3960 = vmatprep.subr.mxu0 %v3853
        %3961 = vmatpush1.msra.mxu0 %v3852
        %3962 = vmatprep.subr.mxu0 %v3855
        %3963 = vmatpush1.msra.mxu0 %v3854
        %3964 = vmatprep.subr.mxu0 %v3857
        %3965 = vmatpush1.msra.mxu0 %v3856
        %3966 = vmatprep.subr.mxu0 %v3859
        %3967 = vmatpush1.msra.mxu0 %v3858
        %3968 = vmatprep.subr.mxu0 %v3861
        %3969 = vmatpush1.msra.mxu0 %v3860
        %3970 = vmatprep.mubr.f32.mxu0 %v3796
        %3971 = vmatmul.mubr.f32.gmra.mrb[0].mxu0 %v3795
        %v3972 = vpop.f32.mrb[0].mxu0
        %v3973 = vadd.f32 %v3899, %v3972
        %v3974 = vpop.f32.mrb[0].mxu0
        %v3975 = vadd.f32 %v3903, %v3974
        %3976 = vdwg.mxu0
        %3977 = vmatprep.subr.mxu0 %v3863
        %3978 = vmatpush1.msra.mxu0 %v3862
        %3979 = vmatprep.subr.mxu0 %v3865
        %3980 = vmatpush1.msra.mxu0 %v3864
        %3981 = vmatprep.subr.mxu0 %v3867
        %3982 = vmatpush1.msra.mxu0 %v3866
        %3983 = vmatprep.subr.mxu0 %v3869
        %3984 = vmatpush1.msra.mxu0 %v3868
        %3985 = vmatprep.subr.mxu0 %v3871
        %3986 = vmatpush1.msra.mxu0 %v3870
        %3987 = vmatprep.subr.mxu0 %v3873
        %3988 = vmatpush1.msra.mxu0 %v3872
        %3989 = vmatprep.subr.mxu0 %v3875
        %3990 = vmatpush1.msra.mxu0 %v3874
        %3991 = vmatprep.subr.mxu0 %v3877
        %3992 = vmatpush1.msra.mxu0 %v3876
        %3993 = vmatprep.subr.mxu0 %v3879
        %3994 = vmatpush1.msra.mxu0 %v3878
        %3995 = vmatprep.subr.mxu0 %v3881
        %3996 = vmatpush1.msra.mxu0 %v3880
        %3997 = vmatprep.subr.mxu0 %v3883
        %3998 = vmatpush1.msra.mxu0 %v3882
        %3999 = vmatprep.subr.mxu0 %v3885
        %4000 = vmatpush1.msra.mxu0 %v3884
        %4001 = vmatprep.subr.mxu0 %v3887
        %4002 = vmatpush1.msra.mxu0 %v3886
        %4003 = vmatprep.subr.mxu0 %v3889
        %4004 = vmatpush1.msra.mxu0 %v3888
        %4005 = vmatprep.subr.mxu0 %v3891
        %4006 = vmatpush1.msra.mxu0 %v3890
        %4007 = vmatprep.subr.mxu0 %v3893
        %4008 = vmatpush1.msra.mxu0 %v3892
        %4009 = vmatprep.subr.mxu0 0.0
        %4010 = vmatpush1.msra.mxu0 0.0
        %4011 = vmatprep.subr.mxu0 0.0
        %4012 = vmatpush1.msra.mxu0 0.0
        %4013 = vmatprep.subr.mxu0 0.0
        %4014 = vmatpush1.msra.mxu0 0.0
        %4015 = vmatprep.subr.mxu0 0.0
        %4016 = vmatpush1.msra.mxu0 0.0
        %4017 = vmatprep.subr.mxu0 0.0
        %4018 = vmatpush1.msra.mxu0 0.0
        %4019 = vmatprep.subr.mxu0 0.0
        %4020 = vmatpush1.msra.mxu0 0.0
        %4021 = vmatprep.subr.mxu0 0.0
        %4022 = vmatpush1.msra.mxu0 0.0
        %4023 = vmatprep.subr.mxu0 0.0
        %4024 = vmatpush1.msra.mxu0 0.0
        %4025 = vmatprep.subr.mxu0 0.0
        %4026 = vmatpush1.msra.mxu0 0.0
        %4027 = vmatprep.subr.mxu0 0.0
        %4028 = vmatpush1.msra.mxu0 0.0
        %4029 = vmatprep.subr.mxu0 0.0
        %4030 = vmatpush1.msra.mxu0 0.0
        %4031 = vmatprep.subr.mxu0 0.0
        %4032 = vmatpush1.msra.mxu0 0.0
        %4033 = vmatprep.subr.mxu0 0.0
        %4034 = vmatpush1.msra.mxu0 0.0
        %4035 = vmatprep.subr.mxu0 0.0
        %4036 = vmatpush1.msra.mxu0 0.0
        %4037 = vmatprep.subr.mxu0 0.0
        %4038 = vmatpush1.msra.mxu0 0.0
        %4039 = vmatprep.subr.mxu0 0.0
        %4040 = vmatpush1.msra.mxu0 0.0
        %4041 = vmatprep.mubr.f32.mxu0 0.0
        %4042 = vmatmul.mubr.f32.gmra.mrb[0].mxu0 %v3797
        %v4043 = vpop.f32.mrb[0].mxu0
        %v4044 = vadd.f32 %v3973, %v4043
        %v4045 = vpop.f32.mrb[0].mxu0
        %v4046 = vadd.f32 %v3975, %v4045
        %4047 = vdwg.mxu0
        %s4048 = scalar_lea.vmem %s15, 768
        %v4049 = vld [vmem:[%s4048] sm:$0xff]
        %v4050 = vld [vmem:[%s4048 + $0x8] sm:$0xff]
        %v4051 = vld [vmem:[%s4048 + $0x10] sm:$0xff]
        %v4052 = vld [vmem:[%s4048 + $0x18] sm:$0xff]
        %v4053 = vld [vmem:[%s4048 + $0x20] sm:$0xff]
        %v4054 = vld [vmem:[%s4048 + $0x28] sm:$0xff]
        %v4055 = vld [vmem:[%s4048 + $0x30] sm:$0xff]
        %v4056 = vld [vmem:[%s4048 + $0x38] sm:$0xff]
        %v4057 = vld [vmem:[%s4048 + $0x40] sm:$0xff]
        %v4058 = vld [vmem:[%s4048 + $0x48] sm:$0xff]
        %v4059 = vld [vmem:[%s4048 + $0x50] sm:$0xff]
        %v4060 = vld [vmem:[%s4048 + $0x58] sm:$0xff]
        %v4061 = vld [vmem:[%s4048 + $0x60] sm:$0xff]
        %v4062 = vld [vmem:[%s4048 + $0x68] sm:$0xff]
        %v4063 = vld [vmem:[%s4048 + $0x70] sm:$0xff]
        %v4064 = vld [vmem:[%s4048 + $0x78] sm:$0xff]
        %v4065 = vld [vmem:[%s4048 + $0x80] sm:$0xff]
        %v4066 = vld [vmem:[%s4048 + $0x88] sm:$0xff]
        %v4067 = vld [vmem:[%s4048 + $0x90] sm:$0xff]
        %v4068 = vld [vmem:[%s4048 + $0x98] sm:$0xff]
        %v4069 = vld [vmem:[%s4048 + $0xa0] sm:$0xff]
        %v4070 = vld [vmem:[%s4048 + $0xa8] sm:$0xff]
        %v4071 = vld [vmem:[%s4048 + $0xb0] sm:$0xff]
        %v4072 = vld [vmem:[%s4048 + $0xb8] sm:$0xff]
        %v4073 = vld [vmem:[%s4048 + $0xc0] sm:$0xff]
        %v4074 = vld [vmem:[%s4048 + $0xc8] sm:$0xff]
        %v4075 = vld [vmem:[%s4048 + $0xd0] sm:$0xff]
        %v4076 = vld [vmem:[%s4048 + $0xd8] sm:$0xff]
        %v4077 = vld [vmem:[%s4048 + $0xe0] sm:$0xff]
        %v4078 = vld [vmem:[%s4048 + $0xe8] sm:$0xff]
        %v4079 = vld [vmem:[%s4048 + $0xf0] sm:$0xff]
        %v4080 = vld [vmem:[%s4048 + $0xf8] sm:$0xff]
        %v4081 = vld [vmem:[%s4048 + $0x100] sm:$0xff]
        %v4082 = vld [vmem:[%s4048 + $0x108] sm:$0xff]
        %v4083 = vld [vmem:[%s4048 + $0x110] sm:$0xff]
        %v4084 = vld [vmem:[%s4048 + $0x118] sm:$0xff]
        %v4085 = vld [vmem:[%s4048 + $0x120] sm:$0xff]
        %v4086 = vld [vmem:[%s4048 + $0x128] sm:$0xff]
        %v4087 = vld [vmem:[%s4048 + $0x130] sm:$0xff]
        %v4088 = vld [vmem:[%s4048 + $0x138] sm:$0xff]
        %v4089 = vld [vmem:[%s4048 + $0x140] sm:$0xff]
        %v4090 = vld [vmem:[%s4048 + $0x148] sm:$0xff]
        %v4091 = vld [vmem:[%s4048 + $0x150] sm:$0xff]
        %v4092 = vld [vmem:[%s4048 + $0x158] sm:$0xff]
        %v4093 = vld [vmem:[%s4048 + $0x160] sm:$0xff]
        %v4094 = vld [vmem:[%s4048 + $0x168] sm:$0xff]
        %v4095 = vld [vmem:[%s4048 + $0x170] sm:$0xff]
        %v4096 = vld [vmem:[%s4048 + $0x178] sm:$0xff]
        %v4097 = vld [vmem:[%s4048 + $0x180] sm:$0xff]
        %v4098 = vld [vmem:[%s4048 + $0x188] sm:$0xff]
        %v4099 = vld [vmem:[%s4048 + $0x190] sm:$0xff]
        %v4100 = vld [vmem:[%s4048 + $0x198] sm:$0xff]
        %v4101 = vld [vmem:[%s4048 + $0x1a0] sm:$0xff]
        %v4102 = vld [vmem:[%s4048 + $0x1a8] sm:$0xff]
        %v4103 = vld [vmem:[%s4048 + $0x1b0] sm:$0xff]
        %v4104 = vld [vmem:[%s4048 + $0x1b8] sm:$0xff]
        %v4105 = vld [vmem:[%s4048 + $0x1c0] sm:$0xff]
        %v4106 = vld [vmem:[%s4048 + $0x1c8] sm:$0xff]
        %v4107 = vld [vmem:[%s4048 + $0x1d0] sm:$0xff]
        %v4108 = vld [vmem:[%s4048 + $0x1d8] sm:$0xff]
        %v4109 = vld [vmem:[%s4048 + $0x1e0] sm:$0xff]
        %v4110 = vld [vmem:[%s4048 + $0x1e8] sm:$0xff]
        %v4111 = vld [vmem:[%s4048 + $0x1f0] sm:$0xff]
        %v4112 = vld [vmem:[%s4048 + $0x1f8] sm:$0xff]
        %v4113 = vld [vmem:[%s4048 + $0x200] sm:$0xff]
        %v4114 = vld [vmem:[%s4048 + $0x208] sm:$0xff]
        %v4115 = vld [vmem:[%s4048 + $0x210] sm:$0xff]
        %v4116 = vld [vmem:[%s4048 + $0x218] sm:$0xff]
        %v4117 = vld [vmem:[%s4048 + $0x220] sm:$0xff]
        %v4118 = vld [vmem:[%s4048 + $0x228] sm:$0xff]
        %v4119 = vld [vmem:[%s4048 + $0x230] sm:$0xff]
        %v4120 = vld [vmem:[%s4048 + $0x238] sm:$0xff]
        %v4121 = vld [vmem:[%s4048 + $0x240] sm:$0xff]
        %v4122 = vld [vmem:[%s4048 + $0x248] sm:$0xff]
        %v4123 = vld [vmem:[%s4048 + $0x250] sm:$0xff]
        %v4124 = vld [vmem:[%s4048 + $0x258] sm:$0xff]
        %v4125 = vld [vmem:[%s4048 + $0x260] sm:$0xff]
        %v4126 = vld [vmem:[%s4048 + $0x268] sm:$0xff]
        %v4127 = vld [vmem:[%s4048 + $0x270] sm:$0xff]
        %v4128 = vld [vmem:[%s4048 + $0x278] sm:$0xff]
        %v4129 = vld [vmem:[%s4048 + $0x280] sm:$0xff]
        %v4130 = vld [vmem:[%s4048 + $0x288] sm:$0xff]
        %v4131 = vld [vmem:[%s4048 + $0x290] sm:$0xff]
        %v4132 = vld [vmem:[%s4048 + $0x298] sm:$0xff]
        %v4133 = vld [vmem:[%s4048 + $0x2a0] sm:$0xff]
        %v4134 = vld [vmem:[%s4048 + $0x2a8] sm:$0xff]
        %v4135 = vld [vmem:[%s4048 + $0x2b0] sm:$0xff]
        %v4136 = vld [vmem:[%s4048 + $0x2b8] sm:$0xff]
        %v4137 = vld [vmem:[%s4048 + $0x2c0] sm:$0xff]
        %v4138 = vld [vmem:[%s4048 + $0x2c8] sm:$0xff]
        %v4139 = vld [vmem:[%s4048 + $0x2d0] sm:$0xff]
        %v4140 = vld [vmem:[%s4048 + $0x2d8] sm:$0xff]
        %v4141 = vld [vmem:[%s4048 + $0x2e0] sm:$0xff]
        %v4142 = vld [vmem:[%s4048 + $0x2e8] sm:$0xff]
        %v4143 = vld [vmem:[%s4048 + $0x2f0] sm:$0xff]
        %v4144 = vld [vmem:[%s4048 + $0x2f8] sm:$0xff]
        %v4148 = vrot.slane %v3795, 1
        %v4149 = vrot.slane %v3796, 1
        %v4150 = vrot.slane %v3797, 1
        %4154 = vmatprep.subr.mxu0 %v4050
        %4155 = vmatpush1.msra.mxu0 %v4049
        %4156 = vmatprep.subr.mxu0 %v4052
        %4157 = vmatpush1.msra.mxu0 %v4051
        %4158 = vmatprep.subr.mxu0 %v4054
        %4159 = vmatpush1.msra.mxu0 %v4053
        %4160 = vmatprep.subr.mxu0 %v4056
        %4161 = vmatpush1.msra.mxu0 %v4055
        %4162 = vmatprep.subr.mxu0 %v4058
        %4163 = vmatpush1.msra.mxu0 %v4057
        %4164 = vmatprep.subr.mxu0 %v4060
        %4165 = vmatpush1.msra.mxu0 %v4059
        %4166 = vmatprep.subr.mxu0 %v4062
        %4167 = vmatpush1.msra.mxu0 %v4061
        %4168 = vmatprep.subr.mxu0 %v4064
        %4169 = vmatpush1.msra.mxu0 %v4063
        %4170 = vmatprep.subr.mxu0 %v4066
        %4171 = vmatpush1.msra.mxu0 %v4065
        %4172 = vmatprep.subr.mxu0 %v4068
        %4173 = vmatpush1.msra.mxu0 %v4067
        %4174 = vmatprep.subr.mxu0 %v4070
        %4175 = vmatpush1.msra.mxu0 %v4069
        %4176 = vmatprep.subr.mxu0 %v4072
        %4177 = vmatpush1.msra.mxu0 %v4071
        %4178 = vmatprep.subr.mxu0 %v4074
        %4179 = vmatpush1.msra.mxu0 %v4073
        %4180 = vmatprep.subr.mxu0 %v4076
        %4181 = vmatpush1.msra.mxu0 %v4075
        %4182 = vmatprep.subr.mxu0 %v4078
        %4183 = vmatpush1.msra.mxu0 %v4077
        %4184 = vmatprep.subr.mxu0 %v4080
        %4185 = vmatpush1.msra.mxu0 %v4079
        %4186 = vmatprep.subr.mxu0 %v4082
        %4187 = vmatpush1.msra.mxu0 %v4081
        %4188 = vmatprep.subr.mxu0 %v4084
        %4189 = vmatpush1.msra.mxu0 %v4083
        %4190 = vmatprep.subr.mxu0 %v4086
        %4191 = vmatpush1.msra.mxu0 %v4085
        %4192 = vmatprep.subr.mxu0 %v4088
        %4193 = vmatpush1.msra.mxu0 %v4087
        %4194 = vmatprep.subr.mxu0 %v4090
        %4195 = vmatpush1.msra.mxu0 %v4089
        %4196 = vmatprep.subr.mxu0 %v4092
        %4197 = vmatpush1.msra.mxu0 %v4091
        %4198 = vmatprep.subr.mxu0 %v4094
        %4199 = vmatpush1.msra.mxu0 %v4093
        %4200 = vmatprep.subr.mxu0 %v4096
        %4201 = vmatpush1.msra.mxu0 %v4095
        %4202 = vmatprep.subr.mxu0 %v4098
        %4203 = vmatpush1.msra.mxu0 %v4097
        %4204 = vmatprep.subr.mxu0 %v4100
        %4205 = vmatpush1.msra.mxu0 %v4099
        %4206 = vmatprep.subr.mxu0 %v4102
        %4207 = vmatpush1.msra.mxu0 %v4101
        %4208 = vmatprep.subr.mxu0 %v4104
        %4209 = vmatpush1.msra.mxu0 %v4103
        %4210 = vmatprep.subr.mxu0 %v4106
        %4211 = vmatpush1.msra.mxu0 %v4105
        %4212 = vmatprep.subr.mxu0 %v4108
        %4213 = vmatpush1.msra.mxu0 %v4107
        %4214 = vmatprep.subr.mxu0 %v4110
        %4215 = vmatpush1.msra.mxu0 %v4109
        %4216 = vmatprep.subr.mxu0 %v4112
        %4217 = vmatpush1.msra.mxu0 %v4111
        %4218 = vmatprep.mubr.f32.mxu0 %v4149
        %4219 = vmatmul.mubr.f32.gmra.mrb[0].mxu0 %v4148
        %v4220 = vpop.f32.mrb[0].mxu0
        %v4221 = vadd.f32 0.0, %v4220
        %v4222 = vpop.f32.mrb[0].mxu0
        %v4223 = vadd.f32 0.0, %v4222
        %4224 = vdwg.mxu0
        %4225 = vmatprep.subr.mxu0 %v4114
        %4226 = vmatpush1.msra.mxu0 %v4113
        %4227 = vmatprep.subr.mxu0 %v4116
        %4228 = vmatpush1.msra.mxu0 %v4115
        %4229 = vmatprep.subr.mxu0 %v4118
        %4230 = vmatpush1.msra.mxu0 %v4117
        %4231 = vmatprep.subr.mxu0 %v4120
        %4232 = vmatpush1.msra.mxu0 %v4119
        %4233 = vmatprep.subr.mxu0 %v4122
        %4234 = vmatpush1.msra.mxu0 %v4121
        %4235 = vmatprep.subr.mxu0 %v4124
        %4236 = vmatpush1.msra.mxu0 %v4123
        %4237 = vmatprep.subr.mxu0 %v4126
        %4238 = vmatpush1.msra.mxu0 %v4125
        %4239 = vmatprep.subr.mxu0 %v4128
        %4240 = vmatpush1.msra.mxu0 %v4127
        %4241 = vmatprep.subr.mxu0 %v4130
        %4242 = vmatpush1.msra.mxu0 %v4129
        %4243 = vmatprep.subr.mxu0 %v4132
        %4244 = vmatpush1.msra.mxu0 %v4131
        %4245 = vmatprep.subr.mxu0 %v4134
        %4246 = vmatpush1.msra.mxu0 %v4133
        %4247 = vmatprep.subr.mxu0 %v4136
        %4248 = vmatpush1.msra.mxu0 %v4135
        %4249 = vmatprep.subr.mxu0 %v4138
        %4250 = vmatpush1.msra.mxu0 %v4137
        %4251 = vmatprep.subr.mxu0 %v4140
        %4252 = vmatpush1.msra.mxu0 %v4139
        %4253 = vmatprep.subr.mxu0 %v4142
        %4254 = vmatpush1.msra.mxu0 %v4141
        %4255 = vmatprep.subr.mxu0 %v4144
        %4256 = vmatpush1.msra.mxu0 %v4143
        %4257 = vmatprep.subr.mxu0 0.0
        %4258 = vmatpush1.msra.mxu0 0.0
        %4259 = vmatprep.subr.mxu0 0.0
        %4260 = vmatpush1.msra.mxu0 0.0
        %4261 = vmatprep.subr.mxu0 0.0
        %4262 = vmatpush1.msra.mxu0 0.0
        %4263 = vmatprep.subr.mxu0 0.0
        %4264 = vmatpush1.msra.mxu0 0.0
        %4265 = vmatprep.subr.mxu0 0.0
        %4266 = vmatpush1.msra.mxu0 0.0
        %4267 = vmatprep.subr.mxu0 0.0
        %4268 = vmatpush1.msra.mxu0 0.0
        %4269 = vmatprep.subr.mxu0 0.0
        %4270 = vmatpush1.msra.mxu0 0.0
        %4271 = vmatprep.subr.mxu0 0.0
        %4272 = vmatpush1.msra.mxu0 0.0
        %4273 = vmatprep.subr.mxu0 0.0
        %4274 = vmatpush1.msra.mxu0 0.0
        %4275 = vmatprep.subr.mxu0 0.0
        %4276 = vmatpush1.msra.mxu0 0.0
        %4277 = vmatprep.subr.mxu0 0.0
        %4278 = vmatpush1.msra.mxu0 0.0
        %4279 = vmatprep.subr.mxu0 0.0
        %4280 = vmatpush1.msra.mxu0 0.0
        %4281 = vmatprep.subr.mxu0 0.0
        %4282 = vmatpush1.msra.mxu0 0.0
        %4283 = vmatprep.subr.mxu0 0.0
        %4284 = vmatpush1.msra.mxu0 0.0
        %4285 = vmatprep.subr.mxu0 0.0
        %4286 = vmatpush1.msra.mxu0 0.0
        %4287 = vmatprep.subr.mxu0 0.0
        %4288 = vmatpush1.msra.mxu0 0.0
        %4289 = vmatprep.mubr.f32.mxu0 0.0
        %4290 = vmatmul.mubr.f32.gmra.mrb[0].mxu0 %v4150
        %v4291 = vpop.f32.mrb[0].mxu0
        %v4292 = vadd.f32 %v4221, %v4291
        %v4293 = vpop.f32.mrb[0].mxu0
        %v4294 = vadd.f32 %v4223, %v4293
        %4295 = vdwg.mxu0
        %v4296 = vadd.f32 %v4044, %v4292
        %v4297 = vadd.f32 %v4046, %v4294
        %s4298 = scalar_lea.vmem %s15, 1536
        %v4299 = vld [vmem:[%s4298] sm:$0xff]
        %v4300 = vld [vmem:[%s4298 + $0x8] sm:$0xff]
        %v4301 = vld [vmem:[%s4298 + $0x10] sm:$0xff]
        %v4302 = vld [vmem:[%s4298 + $0x18] sm:$0xff]
        %v4303 = vld [vmem:[%s4298 + $0x20] sm:$0xff]
        %v4304 = vld [vmem:[%s4298 + $0x28] sm:$0xff]
        %v4305 = vld [vmem:[%s4298 + $0x30] sm:$0xff]
        %v4306 = vld [vmem:[%s4298 + $0x38] sm:$0xff]
        %v4307 = vld [vmem:[%s4298 + $0x40] sm:$0xff]
        %v4308 = vld [vmem:[%s4298 + $0x48] sm:$0xff]
        %v4309 = vld [vmem:[%s4298 + $0x50] sm:$0xff]
        %v4310 = vld [vmem:[%s4298 + $0x58] sm:$0xff]
        %v4311 = vld [vmem:[%s4298 + $0x60] sm:$0xff]
        %v4312 = vld [vmem:[%s4298 + $0x68] sm:$0xff]
        %v4313 = vld [vmem:[%s4298 + $0x70] sm:$0xff]
        %v4314 = vld [vmem:[%s4298 + $0x78] sm:$0xff]
        %v4315 = vld [vmem:[%s4298 + $0x80] sm:$0xff]
        %v4316 = vld [vmem:[%s4298 + $0x88] sm:$0xff]
        %v4317 = vld [vmem:[%s4298 + $0x90] sm:$0xff]
        %v4318 = vld [vmem:[%s4298 + $0x98] sm:$0xff]
        %v4319 = vld [vmem:[%s4298 + $0xa0] sm:$0xff]
        %v4320 = vld [vmem:[%s4298 + $0xa8] sm:$0xff]
        %v4321 = vld [vmem:[%s4298 + $0xb0] sm:$0xff]
        %v4322 = vld [vmem:[%s4298 + $0xb8] sm:$0xff]
        %v4323 = vld [vmem:[%s4298 + $0xc0] sm:$0xff]
        %v4324 = vld [vmem:[%s4298 + $0xc8] sm:$0xff]
        %v4325 = vld [vmem:[%s4298 + $0xd0] sm:$0xff]
        %v4326 = vld [vmem:[%s4298 + $0xd8] sm:$0xff]
        %v4327 = vld [vmem:[%s4298 + $0xe0] sm:$0xff]
        %v4328 = vld [vmem:[%s4298 + $0xe8] sm:$0xff]
        %v4329 = vld [vmem:[%s4298 + $0xf0] sm:$0xff]
        %v4330 = vld [vmem:[%s4298 + $0xf8] sm:$0xff]
        %v4331 = vld [vmem:[%s4298 + $0x100] sm:$0xff]
        %v4332 = vld [vmem:[%s4298 + $0x108] sm:$0xff]
        %v4333 = vld [vmem:[%s4298 + $0x110] sm:$0xff]
        %v4334 = vld [vmem:[%s4298 + $0x118] sm:$0xff]
        %v4335 = vld [vmem:[%s4298 + $0x120] sm:$0xff]
        %v4336 = vld [vmem:[%s4298 + $0x128] sm:$0xff]
        %v4337 = vld [vmem:[%s4298 + $0x130] sm:$0xff]
        %v4338 = vld [vmem:[%s4298 + $0x138] sm:$0xff]
        %v4339 = vld [vmem:[%s4298 + $0x140] sm:$0xff]
        %v4340 = vld [vmem:[%s4298 + $0x148] sm:$0xff]
        %v4341 = vld [vmem:[%s4298 + $0x150] sm:$0xff]
        %v4342 = vld [vmem:[%s4298 + $0x158] sm:$0xff]
        %v4343 = vld [vmem:[%s4298 + $0x160] sm:$0xff]
        %v4344 = vld [vmem:[%s4298 + $0x168] sm:$0xff]
        %v4345 = vld [vmem:[%s4298 + $0x170] sm:$0xff]
        %v4346 = vld [vmem:[%s4298 + $0x178] sm:$0xff]
        %v4347 = vld [vmem:[%s4298 + $0x180] sm:$0xff]
        %v4348 = vld [vmem:[%s4298 + $0x188] sm:$0xff]
        %v4349 = vld [vmem:[%s4298 + $0x190] sm:$0xff]
        %v4350 = vld [vmem:[%s4298 + $0x198] sm:$0xff]
        %v4351 = vld [vmem:[%s4298 + $0x1a0] sm:$0xff]
        %v4352 = vld [vmem:[%s4298 + $0x1a8] sm:$0xff]
        %v4353 = vld [vmem:[%s4298 + $0x1b0] sm:$0xff]
        %v4354 = vld [vmem:[%s4298 + $0x1b8] sm:$0xff]
        %v4355 = vld [vmem:[%s4298 + $0x1c0] sm:$0xff]
        %v4356 = vld [vmem:[%s4298 + $0x1c8] sm:$0xff]
        %v4357 = vld [vmem:[%s4298 + $0x1d0] sm:$0xff]
        %v4358 = vld [vmem:[%s4298 + $0x1d8] sm:$0xff]
        %v4359 = vld [vmem:[%s4298 + $0x1e0] sm:$0xff]
        %v4360 = vld [vmem:[%s4298 + $0x1e8] sm:$0xff]
        %v4361 = vld [vmem:[%s4298 + $0x1f0] sm:$0xff]
        %v4362 = vld [vmem:[%s4298 + $0x1f8] sm:$0xff]
        %v4363 = vld [vmem:[%s4298 + $0x200] sm:$0xff]
        %v4364 = vld [vmem:[%s4298 + $0x208] sm:$0xff]
        %v4365 = vld [vmem:[%s4298 + $0x210] sm:$0xff]
        %v4366 = vld [vmem:[%s4298 + $0x218] sm:$0xff]
        %v4367 = vld [vmem:[%s4298 + $0x220] sm:$0xff]
        %v4368 = vld [vmem:[%s4298 + $0x228] sm:$0xff]
        %v4369 = vld [vmem:[%s4298 + $0x230] sm:$0xff]
        %v4370 = vld [vmem:[%s4298 + $0x238] sm:$0xff]
        %v4371 = vld [vmem:[%s4298 + $0x240] sm:$0xff]
        %v4372 = vld [vmem:[%s4298 + $0x248] sm:$0xff]
        %v4373 = vld [vmem:[%s4298 + $0x250] sm:$0xff]
        %v4374 = vld [vmem:[%s4298 + $0x258] sm:$0xff]
        %v4375 = vld [vmem:[%s4298 + $0x260] sm:$0xff]
        %v4376 = vld [vmem:[%s4298 + $0x268] sm:$0xff]
        %v4377 = vld [vmem:[%s4298 + $0x270] sm:$0xff]
        %v4378 = vld [vmem:[%s4298 + $0x278] sm:$0xff]
        %v4379 = vld [vmem:[%s4298 + $0x280] sm:$0xff]
        %v4380 = vld [vmem:[%s4298 + $0x288] sm:$0xff]
        %v4381 = vld [vmem:[%s4298 + $0x290] sm:$0xff]
        %v4382 = vld [vmem:[%s4298 + $0x298] sm:$0xff]
        %v4383 = vld [vmem:[%s4298 + $0x2a0] sm:$0xff]
        %v4384 = vld [vmem:[%s4298 + $0x2a8] sm:$0xff]
        %v4385 = vld [vmem:[%s4298 + $0x2b0] sm:$0xff]
        %v4386 = vld [vmem:[%s4298 + $0x2b8] sm:$0xff]
        %v4387 = vld [vmem:[%s4298 + $0x2c0] sm:$0xff]
        %v4388 = vld [vmem:[%s4298 + $0x2c8] sm:$0xff]
        %v4389 = vld [vmem:[%s4298 + $0x2d0] sm:$0xff]
        %v4390 = vld [vmem:[%s4298 + $0x2d8] sm:$0xff]
        %v4391 = vld [vmem:[%s4298 + $0x2e0] sm:$0xff]
        %v4392 = vld [vmem:[%s4298 + $0x2e8] sm:$0xff]
        %v4393 = vld [vmem:[%s4298 + $0x2f0] sm:$0xff]
        %v4394 = vld [vmem:[%s4298 + $0x2f8] sm:$0xff]
        %v4395 = vrot.slane %v3795, 2
        %v4396 = vrot.slane %v3796, 2
        %v4397 = vrot.slane %v3797, 2
        %4401 = vmatprep.subr.mxu0 %v4300
        %4402 = vmatpush1.msra.mxu0 %v4299
        %4403 = vmatprep.subr.mxu0 %v4302
        %4404 = vmatpush1.msra.mxu0 %v4301
        %4405 = vmatprep.subr.mxu0 %v4304
        %4406 = vmatpush1.msra.mxu0 %v4303
        %4407 = vmatprep.subr.mxu0 %v4306
        %4408 = vmatpush1.msra.mxu0 %v4305
        %4409 = vmatprep.subr.mxu0 %v4308
        %4410 = vmatpush1.msra.mxu0 %v4307
        %4411 = vmatprep.subr.mxu0 %v4310
        %4412 = vmatpush1.msra.mxu0 %v4309
        %4413 = vmatprep.subr.mxu0 %v4312
        %4414 = vmatpush1.msra.mxu0 %v4311
        %4415 = vmatprep.subr.mxu0 %v4314
        %4416 = vmatpush1.msra.mxu0 %v4313
        %4417 = vmatprep.subr.mxu0 %v4316
        %4418 = vmatpush1.msra.mxu0 %v4315
        %4419 = vmatprep.subr.mxu0 %v4318
        %4420 = vmatpush1.msra.mxu0 %v4317
        %4421 = vmatprep.subr.mxu0 %v4320
        %4422 = vmatpush1.msra.mxu0 %v4319
        %4423 = vmatprep.subr.mxu0 %v4322
        %4424 = vmatpush1.msra.mxu0 %v4321
        %4425 = vmatprep.subr.mxu0 %v4324
        %4426 = vmatpush1.msra.mxu0 %v4323
        %4427 = vmatprep.subr.mxu0 %v4326
        %4428 = vmatpush1.msra.mxu0 %v4325
        %4429 = vmatprep.subr.mxu0 %v4328
        %4430 = vmatpush1.msra.mxu0 %v4327
        %4431 = vmatprep.subr.mxu0 %v4330
        %4432 = vmatpush1.msra.mxu0 %v4329
        %4433 = vmatprep.subr.mxu0 %v4332
        %4434 = vmatpush1.msra.mxu0 %v4331
        %4435 = vmatprep.subr.mxu0 %v4334
        %4436 = vmatpush1.msra.mxu0 %v4333
        %4437 = vmatprep.subr.mxu0 %v4336
        %4438 = vmatpush1.msra.mxu0 %v4335
        %4439 = vmatprep.subr.mxu0 %v4338
        %4440 = vmatpush1.msra.mxu0 %v4337
        %4441 = vmatprep.subr.mxu0 %v4340
        %4442 = vmatpush1.msra.mxu0 %v4339
        %4443 = vmatprep.subr.mxu0 %v4342
        %4444 = vmatpush1.msra.mxu0 %v4341
        %4445 = vmatprep.subr.mxu0 %v4344
        %4446 = vmatpush1.msra.mxu0 %v4343
        %4447 = vmatprep.subr.mxu0 %v4346
        %4448 = vmatpush1.msra.mxu0 %v4345
        %4449 = vmatprep.subr.mxu0 %v4348
        %4450 = vmatpush1.msra.mxu0 %v4347
        %4451 = vmatprep.subr.mxu0 %v4350
        %4452 = vmatpush1.msra.mxu0 %v4349
        %4453 = vmatprep.subr.mxu0 %v4352
        %4454 = vmatpush1.msra.mxu0 %v4351
        %4455 = vmatprep.subr.mxu0 %v4354
        %4456 = vmatpush1.msra.mxu0 %v4353
        %4457 = vmatprep.subr.mxu0 %v4356
        %4458 = vmatpush1.msra.mxu0 %v4355
        %4459 = vmatprep.subr.mxu0 %v4358
        %4460 = vmatpush1.msra.mxu0 %v4357
        %4461 = vmatprep.subr.mxu0 %v4360
        %4462 = vmatpush1.msra.mxu0 %v4359
        %4463 = vmatprep.subr.mxu0 %v4362
        %4464 = vmatpush1.msra.mxu0 %v4361
        %4465 = vmatprep.mubr.f32.mxu0 %v4396
        %4466 = vmatmul.mubr.f32.gmra.mrb[0].mxu0 %v4395
        %v4467 = vpop.f32.mrb[0].mxu0
        %v4468 = vadd.f32 0.0, %v4467
        %v4469 = vpop.f32.mrb[0].mxu0
        %v4470 = vadd.f32 0.0, %v4469
        %4471 = vdwg.mxu0
        %4472 = vmatprep.subr.mxu0 %v4364
        %4473 = vmatpush1.msra.mxu0 %v4363
        %4474 = vmatprep.subr.mxu0 %v4366
        %4475 = vmatpush1.msra.mxu0 %v4365
        %4476 = vmatprep.subr.mxu0 %v4368
        %4477 = vmatpush1.msra.mxu0 %v4367
        %4478 = vmatprep.subr.mxu0 %v4370
        %4479 = vmatpush1.msra.mxu0 %v4369
        %4480 = vmatprep.subr.mxu0 %v4372
        %4481 = vmatpush1.msra.mxu0 %v4371
        %4482 = vmatprep.subr.mxu0 %v4374
        %4483 = vmatpush1.msra.mxu0 %v4373
        %4484 = vmatprep.subr.mxu0 %v4376
        %4485 = vmatpush1.msra.mxu0 %v4375
        %4486 = vmatprep.subr.mxu0 %v4378
        %4487 = vmatpush1.msra.mxu0 %v4377
        %4488 = vmatprep.subr.mxu0 %v4380
        %4489 = vmatpush1.msra.mxu0 %v4379
        %4490 = vmatprep.subr.mxu0 %v4382
        %4491 = vmatpush1.msra.mxu0 %v4381
        %4492 = vmatprep.subr.mxu0 %v4384
        %4493 = vmatpush1.msra.mxu0 %v4383
        %4494 = vmatprep.subr.mxu0 %v4386
        %4495 = vmatpush1.msra.mxu0 %v4385
        %4496 = vmatprep.subr.mxu0 %v4388
        %4497 = vmatpush1.msra.mxu0 %v4387
        %4498 = vmatprep.subr.mxu0 %v4390
        %4499 = vmatpush1.msra.mxu0 %v4389
        %4500 = vmatprep.subr.mxu0 %v4392
        %4501 = vmatpush1.msra.mxu0 %v4391
        %4502 = vmatprep.subr.mxu0 %v4394
        %4503 = vmatpush1.msra.mxu0 %v4393
        %4504 = vmatprep.subr.mxu0 0.0
        %4505 = vmatpush1.msra.mxu0 0.0
        %4506 = vmatprep.subr.mxu0 0.0
        %4507 = vmatpush1.msra.mxu0 0.0
        %4508 = vmatprep.subr.mxu0 0.0
        %4509 = vmatpush1.msra.mxu0 0.0
        %4510 = vmatprep.subr.mxu0 0.0
        %4511 = vmatpush1.msra.mxu0 0.0
        %4512 = vmatprep.subr.mxu0 0.0
        %4513 = vmatpush1.msra.mxu0 0.0
        %4514 = vmatprep.subr.mxu0 0.0
        %4515 = vmatpush1.msra.mxu0 0.0
        %4516 = vmatprep.subr.mxu0 0.0
        %4517 = vmatpush1.msra.mxu0 0.0
        %4518 = vmatprep.subr.mxu0 0.0
        %4519 = vmatpush1.msra.mxu0 0.0
        %4520 = vmatprep.subr.mxu0 0.0
        %4521 = vmatpush1.msra.mxu0 0.0
        %4522 = vmatprep.subr.mxu0 0.0
        %4523 = vmatpush1.msra.mxu0 0.0
        %4524 = vmatprep.subr.mxu0 0.0
        %4525 = vmatpush1.msra.mxu0 0.0
        %4526 = vmatprep.subr.mxu0 0.0
        %4527 = vmatpush1.msra.mxu0 0.0
        %4528 = vmatprep.subr.mxu0 0.0
        %4529 = vmatpush1.msra.mxu0 0.0
        %4530 = vmatprep.subr.mxu0 0.0
        %4531 = vmatpush1.msra.mxu0 0.0
        %4532 = vmatprep.subr.mxu0 0.0
        %4533 = vmatpush1.msra.mxu0 0.0
        %4534 = vmatprep.subr.mxu0 0.0
        %4535 = vmatpush1.msra.mxu0 0.0
        %4536 = vmatprep.mubr.f32.mxu0 0.0
        %4537 = vmatmul.mubr.f32.gmra.mrb[0].mxu0 %v4397
        %v4538 = vpop.f32.mrb[0].mxu0
        %v4539 = vadd.f32 %v4468, %v4538
        %v4540 = vpop.f32.mrb[0].mxu0
        %v4541 = vadd.f32 %v4470, %v4540
        %4542 = vdwg.mxu0
        %v4543 = vadd.f32 %v4296, %v4539
        %v4544 = vadd.f32 %v4297, %v4541
        %v4545 = vmax.f32 %v4543, 0.0
        %v4546 = vmax.f32 %v4544, 0.0
        %v4547 = vld [vmem:[#allocation7] sm:$0xff]
        %v4548 = vld [vmem:[#allocation7 + $0x8] sm:$0xff]
        %v4549 = vld [vmem:[#allocation7 + $0x10] sm:$0xff]
        %v4550 = vld [vmem:[#allocation7 + $0x18] sm:$0xff]
        %v4551 = vld [vmem:[#allocation7 + $0x20] sm:$0xff]
        %v4552 = vld [vmem:[#allocation7 + $0x28] sm:$0xff]
        %v4553 = vld [vmem:[#allocation7 + $0x30] sm:$0xff]
        %v4554 = vld [vmem:[#allocation7 + $0x38] sm:$0xff]
        %v4555 = vld [vmem:[#allocation7 + $0x40] sm:$0xff]
        %v4556 = vld [vmem:[#allocation7 + $0x48] sm:$0xff]
        %v4557 = vld [vmem:[#allocation7 + $0x50] sm:$0xff]
        %v4558 = vld [vmem:[#allocation7 + $0x58] sm:$0xff]
        %v4559 = vld [vmem:[#allocation7 + $0x60] sm:$0xff]
        %v4560 = vld [vmem:[#allocation7 + $0x68] sm:$0xff]
        %v4561 = vld [vmem:[#allocation7 + $0x70] sm:$0xff]
        %v4562 = vld [vmem:[#allocation7 + $0x78] sm:$0xff]
        %v4563 = vld [vmem:[#allocation7 + $0x80] sm:$0xff]
        %v4564 = vld [vmem:[#allocation7 + $0x88] sm:$0xff]
        %v4565 = vld [vmem:[#allocation7 + $0x90] sm:$0xff]
        %v4566 = vld [vmem:[#allocation7 + $0x98] sm:$0xff]
        %v4567 = vld [vmem:[#allocation7 + $0xa0] sm:$0xff]
        %v4568 = vld [vmem:[#allocation7 + $0xa8] sm:$0xff]
        %v4569 = vld [vmem:[#allocation7 + $0xb0] sm:$0xff]
        %v4570 = vld [vmem:[#allocation7 + $0xb8] sm:$0xff]
        %v4571 = vld [vmem:[#allocation7 + $0xc0] sm:$0xff]
        %v4572 = vld [vmem:[#allocation7 + $0xc8] sm:$0xff]
        %v4573 = vld [vmem:[#allocation7 + $0xd0] sm:$0xff]
        %v4574 = vld [vmem:[#allocation7 + $0xd8] sm:$0xff]
        %v4575 = vld [vmem:[#allocation7 + $0xe0] sm:$0xff]
        %v4576 = vld [vmem:[#allocation7 + $0xe8] sm:$0xff]
        %v4577 = vld [vmem:[#allocation7 + $0xf0] sm:$0xff]
        %v4578 = vld [vmem:[#allocation7 + $0xf8] sm:$0xff]
        %v4579 = vld [vmem:[%s18] sm:$0x1]
        %v4581 = vlaneseq
        %v4582 = vshrl.u32 %v4581, 7
        %v4583 = vsub.s32 0, %v4582
        %v4584 = vrot.slane %v4579, %v4583
        %4586 = vmatprep.subr.mxu0 0.0
        %4587 = vmatpush1.msra.mxu0 %v4547
        %4588 = vmatprep.subr.mxu0 0.0
        %4589 = vmatpush1.msra.mxu0 %v4548
        %4590 = vmatprep.subr.mxu0 0.0
        %4591 = vmatpush1.msra.mxu0 %v4549
        %4592 = vmatprep.subr.mxu0 0.0
        %4593 = vmatpush1.msra.mxu0 %v4550
        %4594 = vmatprep.subr.mxu0 0.0
        %4595 = vmatpush1.msra.mxu0 %v4551
        %4596 = vmatprep.subr.mxu0 0.0
        %4597 = vmatpush1.msra.mxu0 %v4552
        %4598 = vmatprep.subr.mxu0 0.0
        %4599 = vmatpush1.msra.mxu0 %v4553
        %4600 = vmatprep.subr.mxu0 0.0
        %4601 = vmatpush1.msra.mxu0 %v4554
        %4602 = vmatprep.subr.mxu0 0.0
        %4603 = vmatpush1.msra.mxu0 %v4555
        %4604 = vmatprep.subr.mxu0 0.0
        %4605 = vmatpush1.msra.mxu0 %v4556
        %4606 = vmatprep.subr.mxu0 0.0
        %4607 = vmatpush1.msra.mxu0 %v4557
        %4608 = vmatprep.subr.mxu0 0.0
        %4609 = vmatpush1.msra.mxu0 %v4558
        %4610 = vmatprep.subr.mxu0 0.0
        %4611 = vmatpush1.msra.mxu0 %v4559
        %4612 = vmatprep.subr.mxu0 0.0
        %4613 = vmatpush1.msra.mxu0 %v4560
        %4614 = vmatprep.subr.mxu0 0.0
        %4615 = vmatpush1.msra.mxu0 %v4561
        %4616 = vmatprep.subr.mxu0 0.0
        %4617 = vmatpush1.msra.mxu0 %v4562
        %4618 = vmatprep.subr.mxu0 0.0
        %4619 = vmatpush1.msra.mxu0 %v4563
        %4620 = vmatprep.subr.mxu0 0.0
        %4621 = vmatpush1.msra.mxu0 %v4564
        %4622 = vmatprep.subr.mxu0 0.0
        %4623 = vmatpush1.msra.mxu0 %v4565
        %4624 = vmatprep.subr.mxu0 0.0
        %4625 = vmatpush1.msra.mxu0 %v4566
        %4626 = vmatprep.subr.mxu0 0.0
        %4627 = vmatpush1.msra.mxu0 %v4567
        %4628 = vmatprep.subr.mxu0 0.0
        %4629 = vmatpush1.msra.mxu0 %v4568
        %4630 = vmatprep.subr.mxu0 0.0
        %4631 = vmatpush1.msra.mxu0 %v4569
        %4632 = vmatprep.subr.mxu0 0.0
        %4633 = vmatpush1.msra.mxu0 %v4570
        %4634 = vmatprep.subr.mxu0 0.0
        %4635 = vmatpush1.msra.mxu0 %v4571
        %4636 = vmatprep.subr.mxu0 0.0
        %4637 = vmatpush1.msra.mxu0 %v4572
        %4638 = vmatprep.subr.mxu0 0.0
        %4639 = vmatpush1.msra.mxu0 %v4573
        %4640 = vmatprep.subr.mxu0 0.0
        %4641 = vmatpush1.msra.mxu0 %v4574
        %4642 = vmatprep.subr.mxu0 0.0
        %4643 = vmatpush1.msra.mxu0 %v4575
        %4644 = vmatprep.subr.mxu0 0.0
        %4645 = vmatpush1.msra.mxu0 %v4576
        %4646 = vmatprep.subr.mxu0 0.0
        %4647 = vmatpush1.msra.mxu0 %v4577
        %4648 = vmatprep.subr.mxu0 0.0
        %4649 = vmatpush1.msra.mxu0 %v4578
        %4650 = vmatprep.mubr.f32.mxu0 %v4546
        %4651 = vmatmul.mubr.f32.gmra.mrb[0].mxu0 %v4545
        %v4652 = vpop.f32.mrb[0].mxu0
        %v4653 = vadd.f32 %v4584, %v4652
        %v4654 = vpop.f32.mrb[0].mxu0
        %4655 = vdwg.mxu0
        %s4656 = scalar_lea.vmem [#allocation7], 256
        %v4657 = vld [vmem:[%s4656] sm:$0xff]
        %v4658 = vld [vmem:[%s4656 + $0x8] sm:$0xff]
        %v4659 = vld [vmem:[%s4656 + $0x10] sm:$0xff]
        %v4660 = vld [vmem:[%s4656 + $0x18] sm:$0xff]
        %v4661 = vld [vmem:[%s4656 + $0x20] sm:$0xff]
        %v4662 = vld [vmem:[%s4656 + $0x28] sm:$0xff]
        %v4663 = vld [vmem:[%s4656 + $0x30] sm:$0xff]
        %v4664 = vld [vmem:[%s4656 + $0x38] sm:$0xff]
        %v4665 = vld [vmem:[%s4656 + $0x40] sm:$0xff]
        %v4666 = vld [vmem:[%s4656 + $0x48] sm:$0xff]
        %v4667 = vld [vmem:[%s4656 + $0x50] sm:$0xff]
        %v4668 = vld [vmem:[%s4656 + $0x58] sm:$0xff]
        %v4669 = vld [vmem:[%s4656 + $0x60] sm:$0xff]
        %v4670 = vld [vmem:[%s4656 + $0x68] sm:$0xff]
        %v4671 = vld [vmem:[%s4656 + $0x70] sm:$0xff]
        %v4672 = vld [vmem:[%s4656 + $0x78] sm:$0xff]
        %v4673 = vld [vmem:[%s4656 + $0x80] sm:$0xff]
        %v4674 = vld [vmem:[%s4656 + $0x88] sm:$0xff]
        %v4675 = vld [vmem:[%s4656 + $0x90] sm:$0xff]
        %v4676 = vld [vmem:[%s4656 + $0x98] sm:$0xff]
        %v4677 = vld [vmem:[%s4656 + $0xa0] sm:$0xff]
        %v4678 = vld [vmem:[%s4656 + $0xa8] sm:$0xff]
        %v4679 = vld [vmem:[%s4656 + $0xb0] sm:$0xff]
        %v4680 = vld [vmem:[%s4656 + $0xb8] sm:$0xff]
        %v4681 = vld [vmem:[%s4656 + $0xc0] sm:$0xff]
        %v4682 = vld [vmem:[%s4656 + $0xc8] sm:$0xff]
        %v4683 = vld [vmem:[%s4656 + $0xd0] sm:$0xff]
        %v4684 = vld [vmem:[%s4656 + $0xd8] sm:$0xff]
        %v4685 = vld [vmem:[%s4656 + $0xe0] sm:$0xff]
        %v4686 = vld [vmem:[%s4656 + $0xe8] sm:$0xff]
        %v4687 = vld [vmem:[%s4656 + $0xf0] sm:$0xff]
        %v4688 = vld [vmem:[%s4656 + $0xf8] sm:$0xff]
        %v4691 = vrot.slane %v4545, 1
        %v4692 = vrot.slane %v4546, 1
        %4695 = vmatprep.subr.mxu0 0.0
        %4696 = vmatpush1.msra.mxu0 %v4657
        %4697 = vmatprep.subr.mxu0 0.0
        %4698 = vmatpush1.msra.mxu0 %v4658
        %4699 = vmatprep.subr.mxu0 0.0
        %4700 = vmatpush1.msra.mxu0 %v4659
        %4701 = vmatprep.subr.mxu0 0.0
        %4702 = vmatpush1.msra.mxu0 %v4660
        %4703 = vmatprep.subr.mxu0 0.0
        %4704 = vmatpush1.msra.mxu0 %v4661
        %4705 = vmatprep.subr.mxu0 0.0
        %4706 = vmatpush1.msra.mxu0 %v4662
        %4707 = vmatprep.subr.mxu0 0.0
        %4708 = vmatpush1.msra.mxu0 %v4663
        %4709 = vmatprep.subr.mxu0 0.0
        %4710 = vmatpush1.msra.mxu0 %v4664
        %4711 = vmatprep.subr.mxu0 0.0
        %4712 = vmatpush1.msra.mxu0 %v4665
        %4713 = vmatprep.subr.mxu0 0.0
        %4714 = vmatpush1.msra.mxu0 %v4666
        %4715 = vmatprep.subr.mxu0 0.0
        %4716 = vmatpush1.msra.mxu0 %v4667
        %4717 = vmatprep.subr.mxu0 0.0
        %4718 = vmatpush1.msra.mxu0 %v4668
        %4719 = vmatprep.subr.mxu0 0.0
        %4720 = vmatpush1.msra.mxu0 %v4669
        %4721 = vmatprep.subr.mxu0 0.0
        %4722 = vmatpush1.msra.mxu0 %v4670
        %4723 = vmatprep.subr.mxu0 0.0
        %4724 = vmatpush1.msra.mxu0 %v4671
        %4725 = vmatprep.subr.mxu0 0.0
        %4726 = vmatpush1.msra.mxu0 %v4672
        %4727 = vmatprep.subr.mxu0 0.0
        %4728 = vmatpush1.msra.mxu0 %v4673
        %4729 = vmatprep.subr.mxu0 0.0
        %4730 = vmatpush1.msra.mxu0 %v4674
        %4731 = vmatprep.subr.mxu0 0.0
        %4732 = vmatpush1.msra.mxu0 %v4675
        %4733 = vmatprep.subr.mxu0 0.0
        %4734 = vmatpush1.msra.mxu0 %v4676
        %4735 = vmatprep.subr.mxu0 0.0
        %4736 = vmatpush1.msra.mxu0 %v4677
        %4737 = vmatprep.subr.mxu0 0.0
        %4738 = vmatpush1.msra.mxu0 %v4678
        %4739 = vmatprep.subr.mxu0 0.0
        %4740 = vmatpush1.msra.mxu0 %v4679
        %4741 = vmatprep.subr.mxu0 0.0
        %4742 = vmatpush1.msra.mxu0 %v4680
        %4743 = vmatprep.subr.mxu0 0.0
        %4744 = vmatpush1.msra.mxu0 %v4681
        %4745 = vmatprep.subr.mxu0 0.0
        %4746 = vmatpush1.msra.mxu0 %v4682
        %4747 = vmatprep.subr.mxu0 0.0
        %4748 = vmatpush1.msra.mxu0 %v4683
        %4749 = vmatprep.subr.mxu0 0.0
        %4750 = vmatpush1.msra.mxu0 %v4684
        %4751 = vmatprep.subr.mxu0 0.0
        %4752 = vmatpush1.msra.mxu0 %v4685
        %4753 = vmatprep.subr.mxu0 0.0
        %4754 = vmatpush1.msra.mxu0 %v4686
        %4755 = vmatprep.subr.mxu0 0.0
        %4756 = vmatpush1.msra.mxu0 %v4687
        %4757 = vmatprep.subr.mxu0 0.0
        %4758 = vmatpush1.msra.mxu0 %v4688
        %4759 = vmatprep.mubr.f32.mxu0 %v4692
        %4760 = vmatmul.mubr.f32.gmra.mrb[0].mxu0 %v4691
        %v4761 = vpop.f32.mrb[0].mxu0
        %v4762 = vadd.f32 0.0, %v4761
        %v4763 = vpop.f32.mrb[0].mxu0
        %4764 = vdwg.mxu0
        %v4765 = vadd.f32 %v4653, %v4762
        %s4766 = scalar_lea.vmem [#allocation7], 512
        %v4767 = vld [vmem:[%s4766] sm:$0xff]
        %v4768 = vld [vmem:[%s4766 + $0x8] sm:$0xff]
        %v4769 = vld [vmem:[%s4766 + $0x10] sm:$0xff]
        %v4770 = vld [vmem:[%s4766 + $0x18] sm:$0xff]
        %v4771 = vld [vmem:[%s4766 + $0x20] sm:$0xff]
        %v4772 = vld [vmem:[%s4766 + $0x28] sm:$0xff]
        %v4773 = vld [vmem:[%s4766 + $0x30] sm:$0xff]
        %v4774 = vld [vmem:[%s4766 + $0x38] sm:$0xff]
        %v4775 = vld [vmem:[%s4766 + $0x40] sm:$0xff]
        %v4776 = vld [vmem:[%s4766 + $0x48] sm:$0xff]
        %v4777 = vld [vmem:[%s4766 + $0x50] sm:$0xff]
        %v4778 = vld [vmem:[%s4766 + $0x58] sm:$0xff]
        %v4779 = vld [vmem:[%s4766 + $0x60] sm:$0xff]
        %v4780 = vld [vmem:[%s4766 + $0x68] sm:$0xff]
        %v4781 = vld [vmem:[%s4766 + $0x70] sm:$0xff]
        %v4782 = vld [vmem:[%s4766 + $0x78] sm:$0xff]
        %v4783 = vld [vmem:[%s4766 + $0x80] sm:$0xff]
        %v4784 = vld [vmem:[%s4766 + $0x88] sm:$0xff]
        %v4785 = vld [vmem:[%s4766 + $0x90] sm:$0xff]
        %v4786 = vld [vmem:[%s4766 + $0x98] sm:$0xff]
        %v4787 = vld [vmem:[%s4766 + $0xa0] sm:$0xff]
        %v4788 = vld [vmem:[%s4766 + $0xa8] sm:$0xff]
        %v4789 = vld [vmem:[%s4766 + $0xb0] sm:$0xff]
        %v4790 = vld [vmem:[%s4766 + $0xb8] sm:$0xff]
        %v4791 = vld [vmem:[%s4766 + $0xc0] sm:$0xff]
        %v4792 = vld [vmem:[%s4766 + $0xc8] sm:$0xff]
        %v4793 = vld [vmem:[%s4766 + $0xd0] sm:$0xff]
        %v4794 = vld [vmem:[%s4766 + $0xd8] sm:$0xff]
        %v4795 = vld [vmem:[%s4766 + $0xe0] sm:$0xff]
        %v4796 = vld [vmem:[%s4766 + $0xe8] sm:$0xff]
        %v4797 = vld [vmem:[%s4766 + $0xf0] sm:$0xff]
        %v4798 = vld [vmem:[%s4766 + $0xf8] sm:$0xff]
        %v4799 = vrot.slane %v4545, 2
        %v4800 = vrot.slane %v4546, 2
        %4803 = vmatprep.subr.mxu0 0.0
        %4804 = vmatpush1.msra.mxu0 %v4767
        %4805 = vmatprep.subr.mxu0 0.0
        %4806 = vmatpush1.msra.mxu0 %v4768
        %4807 = vmatprep.subr.mxu0 0.0
        %4808 = vmatpush1.msra.mxu0 %v4769
        %4809 = vmatprep.subr.mxu0 0.0
        %4810 = vmatpush1.msra.mxu0 %v4770
        %4811 = vmatprep.subr.mxu0 0.0
        %4812 = vmatpush1.msra.mxu0 %v4771
        %4813 = vmatprep.subr.mxu0 0.0
        %4814 = vmatpush1.msra.mxu0 %v4772
        %4815 = vmatprep.subr.mxu0 0.0
        %4816 = vmatpush1.msra.mxu0 %v4773
        %4817 = vmatprep.subr.mxu0 0.0
        %4818 = vmatpush1.msra.mxu0 %v4774
        %4819 = vmatprep.subr.mxu0 0.0
        %4820 = vmatpush1.msra.mxu0 %v4775
        %4821 = vmatprep.subr.mxu0 0.0
        %4822 = vmatpush1.msra.mxu0 %v4776
        %4823 = vmatprep.subr.mxu0 0.0
        %4824 = vmatpush1.msra.mxu0 %v4777
        %4825 = vmatprep.subr.mxu0 0.0
        %4826 = vmatpush1.msra.mxu0 %v4778
        %4827 = vmatprep.subr.mxu0 0.0
        %4828 = vmatpush1.msra.mxu0 %v4779
        %4829 = vmatprep.subr.mxu0 0.0
        %4830 = vmatpush1.msra.mxu0 %v4780
        %4831 = vmatprep.subr.mxu0 0.0
        %4832 = vmatpush1.msra.mxu0 %v4781
        %4833 = vmatprep.subr.mxu0 0.0
        %4834 = vmatpush1.msra.mxu0 %v4782
        %4835 = vmatprep.subr.mxu0 0.0
        %4836 = vmatpush1.msra.mxu0 %v4783
        %4837 = vmatprep.subr.mxu0 0.0
        %4838 = vmatpush1.msra.mxu0 %v4784
        %4839 = vmatprep.subr.mxu0 0.0
        %4840 = vmatpush1.msra.mxu0 %v4785
        %4841 = vmatprep.subr.mxu0 0.0
        %4842 = vmatpush1.msra.mxu0 %v4786
        %4843 = vmatprep.subr.mxu0 0.0
        %4844 = vmatpush1.msra.mxu0 %v4787
        %4845 = vmatprep.subr.mxu0 0.0
        %4846 = vmatpush1.msra.mxu0 %v4788
        %4847 = vmatprep.subr.mxu0 0.0
        %4848 = vmatpush1.msra.mxu0 %v4789
        %4849 = vmatprep.subr.mxu0 0.0
        %4850 = vmatpush1.msra.mxu0 %v4790
        %4851 = vmatprep.subr.mxu0 0.0
        %4852 = vmatpush1.msra.mxu0 %v4791
        %4853 = vmatprep.subr.mxu0 0.0
        %4854 = vmatpush1.msra.mxu0 %v4792
        %4855 = vmatprep.subr.mxu0 0.0
        %4856 = vmatpush1.msra.mxu0 %v4793
        %4857 = vmatprep.subr.mxu0 0.0
        %4858 = vmatpush1.msra.mxu0 %v4794
        %4859 = vmatprep.subr.mxu0 0.0
        %4860 = vmatpush1.msra.mxu0 %v4795
        %4861 = vmatprep.subr.mxu0 0.0
        %4862 = vmatpush1.msra.mxu0 %v4796
        %4863 = vmatprep.subr.mxu0 0.0
        %4864 = vmatpush1.msra.mxu0 %v4797
        %4865 = vmatprep.subr.mxu0 0.0
        %4866 = vmatpush1.msra.mxu0 %v4798
        %4867 = vmatprep.mubr.f32.mxu0 %v4800
        %4868 = vmatmul.mubr.f32.gmra.mrb[0].mxu0 %v4799
        %v4869 = vpop.f32.mrb[0].mxu0
        %v4870 = vadd.f32 0.0, %v4869
        %v4871 = vpop.f32.mrb[0].mxu0
        %4872 = vdwg.mxu0
        %v4873 = vadd.f32 %v4765, %v4870
        %v4874 = vmax.f32 %v4873, 0.0
        %v4875 = vld [vmem:[%s19] sm:$0xff]
        %v4876 = vld [vmem:[%s19 + $0x8] sm:$0xff]
        %v4877 = vld [vmem:[%s19 + $0x10] sm:$0xff]
        %v4878 = vld [vmem:[%s19 + $0x18] sm:$0xff]
        %v4879 = vld [vmem:[%s19 + $0x20] sm:$0xff]
        %v4880 = vld [vmem:[%s19 + $0x28] sm:$0xff]
        %v4881 = vld [vmem:[%s19 + $0x30] sm:$0xff]
        %v4882 = vld [vmem:[%s19 + $0x38] sm:$0xff]
        %v4883 = vld [vmem:[%s19 + $0x40] sm:$0xff]
        %v4884 = vld [vmem:[%s19 + $0x48] sm:$0xff]
        %v4885 = vld [vmem:[%s19 + $0x50] sm:$0xff]
        %v4886 = vld [vmem:[%s19 + $0x58] sm:$0xff]
        %v4887 = vld [vmem:[%s19 + $0x60] sm:$0xff]
        %v4888 = vld [vmem:[%s19 + $0x68] sm:$0xff]
        %v4889 = vld [vmem:[%s19 + $0x70] sm:$0xff]
        %v4890 = vld [vmem:[%s19 + $0x78] sm:$0xff]
        %v4891 = vld [vmem:[%s20] sm:$0x1]
        %4892 = vmatprep.subr.mxu0 0.0
        %4893 = vmatpush1.msra.mxu0 %v4875
        %4894 = vmatprep.subr.mxu0 0.0
        %4895 = vmatpush1.msra.mxu0 %v4876
        %4896 = vmatprep.subr.mxu0 0.0
        %4897 = vmatpush1.msra.mxu0 %v4877
        %4898 = vmatprep.subr.mxu0 0.0
        %4899 = vmatpush1.msra.mxu0 %v4878
        %4900 = vmatprep.subr.mxu0 0.0
        %4901 = vmatpush1.msra.mxu0 %v4879
        %4902 = vmatprep.subr.mxu0 0.0
        %4903 = vmatpush1.msra.mxu0 %v4880
        %4904 = vmatprep.subr.mxu0 0.0
        %4905 = vmatpush1.msra.mxu0 %v4881
        %4906 = vmatprep.subr.mxu0 0.0
        %4907 = vmatpush1.msra.mxu0 %v4882
        %4908 = vmatprep.subr.mxu0 0.0
        %4909 = vmatpush1.msra.mxu0 %v4883
        %4910 = vmatprep.subr.mxu0 0.0
        %4911 = vmatpush1.msra.mxu0 %v4884
        %4912 = vmatprep.subr.mxu0 0.0
        %4913 = vmatpush1.msra.mxu0 %v4885
        %4914 = vmatprep.subr.mxu0 0.0
        %4915 = vmatpush1.msra.mxu0 %v4886
        %4916 = vmatprep.subr.mxu0 0.0
        %4917 = vmatpush1.msra.mxu0 %v4887
        %4918 = vmatprep.subr.mxu0 0.0
        %4919 = vmatpush1.msra.mxu0 %v4888
        %4920 = vmatprep.subr.mxu0 0.0
        %4921 = vmatpush1.msra.mxu0 %v4889
        %4922 = vmatprep.subr.mxu0 0.0
        %4923 = vmatpush1.msra.mxu0 %v4890
        %4924 = vmatprep.subr.mxu0 0.0
        %4925 = vmatpush1.msra.mxu0 0.0
        %4926 = vmatprep.subr.mxu0 0.0
        %4927 = vmatpush1.msra.mxu0 0.0
        %4928 = vmatprep.subr.mxu0 0.0
        %4929 = vmatpush1.msra.mxu0 0.0
        %4930 = vmatprep.subr.mxu0 0.0
        %4931 = vmatpush1.msra.mxu0 0.0
        %4932 = vmatprep.subr.mxu0 0.0
        %4933 = vmatpush1.msra.mxu0 0.0
        %4934 = vmatprep.subr.mxu0 0.0
        %4935 = vmatpush1.msra.mxu0 0.0
        %4936 = vmatprep.subr.mxu0 0.0
        %4937 = vmatpush1.msra.mxu0 0.0
        %4938 = vmatprep.subr.mxu0 0.0
        %4939 = vmatpush1.msra.mxu0 0.0
        %4940 = vmatprep.subr.mxu0 0.0
        %4941 = vmatpush1.msra.mxu0 0.0
        %4942 = vmatprep.subr.mxu0 0.0
        %4943 = vmatpush1.msra.mxu0 0.0
        %4944 = vmatprep.subr.mxu0 0.0
        %4945 = vmatpush1.msra.mxu0 0.0
        %4946 = vmatprep.subr.mxu0 0.0
        %4947 = vmatpush1.msra.mxu0 0.0
        %4948 = vmatprep.subr.mxu0 0.0
        %4949 = vmatpush1.msra.mxu0 0.0
        %4950 = vmatprep.subr.mxu0 0.0
        %4951 = vmatpush1.msra.mxu0 0.0
        %4952 = vmatprep.subr.mxu0 0.0
        %4953 = vmatpush1.msra.mxu0 0.0
        %4954 = vmatprep.subr.mxu0 0.0
        %4955 = vmatpush1.msra.mxu0 0.0
        %4956 = vmatprep.mubr.f32.mxu0 0.0
        %4957 = vmatmul.mubr.f32.gmra.mrb[0].mxu0 %v4874
        %v4958 = vpop.f32.mrb[0].mxu0
        %v4959 = vadd.f32 %v4891, %v4958
        %v4960 = vpop.f32.mrb[0].mxu0
        %4961 = vdwg.mxu0
        %s4962 = scalar_lea.vmem %s19, 128
        %v4963 = vld [vmem:[%s4962] sm:$0xff]
        %v4964 = vld [vmem:[%s4962 + $0x8] sm:$0xff]
        %v4965 = vld [vmem:[%s4962 + $0x10] sm:$0xff]
        %v4966 = vld [vmem:[%s4962 + $0x18] sm:$0xff]
        %v4967 = vld [vmem:[%s4962 + $0x20] sm:$0xff]
        %v4968 = vld [vmem:[%s4962 + $0x28] sm:$0xff]
        %v4969 = vld [vmem:[%s4962 + $0x30] sm:$0xff]
        %v4970 = vld [vmem:[%s4962 + $0x38] sm:$0xff]
        %v4971 = vld [vmem:[%s4962 + $0x40] sm:$0xff]
        %v4972 = vld [vmem:[%s4962 + $0x48] sm:$0xff]
        %v4973 = vld [vmem:[%s4962 + $0x50] sm:$0xff]
        %v4974 = vld [vmem:[%s4962 + $0x58] sm:$0xff]
        %v4975 = vld [vmem:[%s4962 + $0x60] sm:$0xff]
        %v4976 = vld [vmem:[%s4962 + $0x68] sm:$0xff]
        %v4977 = vld [vmem:[%s4962 + $0x70] sm:$0xff]
        %v4978 = vld [vmem:[%s4962 + $0x78] sm:$0xff]
        %v4980 = vrot.slane %v4874, 1
        %4982 = vmatprep.subr.mxu0 0.0
        %4983 = vmatpush1.msra.mxu0 %v4963
        %4984 = vmatprep.subr.mxu0 0.0
        %4985 = vmatpush1.msra.mxu0 %v4964
        %4986 = vmatprep.subr.mxu0 0.0
        %4987 = vmatpush1.msra.mxu0 %v4965
        %4988 = vmatprep.subr.mxu0 0.0
        %4989 = vmatpush1.msra.mxu0 %v4966
        %4990 = vmatprep.subr.mxu0 0.0
        %4991 = vmatpush1.msra.mxu0 %v4967
        %4992 = vmatprep.subr.mxu0 0.0
        %4993 = vmatpush1.msra.mxu0 %v4968
        %4994 = vmatprep.subr.mxu0 0.0
        %4995 = vmatpush1.msra.mxu0 %v4969
        %4996 = vmatprep.subr.mxu0 0.0
        %4997 = vmatpush1.msra.mxu0 %v4970
        %4998 = vmatprep.subr.mxu0 0.0
        %4999 = vmatpush1.msra.mxu0 %v4971
        %5000 = vmatprep.subr.mxu0 0.0
        %5001 = vmatpush1.msra.mxu0 %v4972
        %5002 = vmatprep.subr.mxu0 0.0
        %5003 = vmatpush1.msra.mxu0 %v4973
        %5004 = vmatprep.subr.mxu0 0.0
        %5005 = vmatpush1.msra.mxu0 %v4974
        %5006 = vmatprep.subr.mxu0 0.0
        %5007 = vmatpush1.msra.mxu0 %v4975
        %5008 = vmatprep.subr.mxu0 0.0
        %5009 = vmatpush1.msra.mxu0 %v4976
        %5010 = vmatprep.subr.mxu0 0.0
        %5011 = vmatpush1.msra.mxu0 %v4977
        %5012 = vmatprep.subr.mxu0 0.0
        %5013 = vmatpush1.msra.mxu0 %v4978
        %5014 = vmatprep.subr.mxu0 0.0
        %5015 = vmatpush1.msra.mxu0 0.0
        %5016 = vmatprep.subr.mxu0 0.0
        %5017 = vmatpush1.msra.mxu0 0.0
        %5018 = vmatprep.subr.mxu0 0.0
        %5019 = vmatpush1.msra.mxu0 0.0
        %5020 = vmatprep.subr.mxu0 0.0
        %5021 = vmatpush1.msra.mxu0 0.0
        %5022 = vmatprep.subr.mxu0 0.0
        %5023 = vmatpush1.msra.mxu0 0.0
        %5024 = vmatprep.subr.mxu0 0.0
        %5025 = vmatpush1.msra.mxu0 0.0
        %5026 = vmatprep.subr.mxu0 0.0
        %5027 = vmatpush1.msra.mxu0 0.0
        %5028 = vmatprep.subr.mxu0 0.0
        %5029 = vmatpush1.msra.mxu0 0.0
        %5030 = vmatprep.subr.mxu0 0.0
        %5031 = vmatpush1.msra.mxu0 0.0
        %5032 = vmatprep.subr.mxu0 0.0
        %5033 = vmatpush1.msra.mxu0 0.0
        %5034 = vmatprep.subr.mxu0 0.0
        %5035 = vmatpush1.msra.mxu0 0.0
        %5036 = vmatprep.subr.mxu0 0.0
        %5037 = vmatpush1.msra.mxu0 0.0
        %5038 = vmatprep.subr.mxu0 0.0
        %5039 = vmatpush1.msra.mxu0 0.0
        %5040 = vmatprep.subr.mxu0 0.0
        %5041 = vmatpush1.msra.mxu0 0.0
        %5042 = vmatprep.subr.mxu0 0.0
        %5043 = vmatpush1.msra.mxu0 0.0
        %5044 = vmatprep.subr.mxu0 0.0
        %5045 = vmatpush1.msra.mxu0 0.0
        %5046 = vmatprep.mubr.f32.mxu0 0.0
        %5047 = vmatmul.mubr.f32.gmra.mrb[0].mxu0 %v4980
        %v5048 = vpop.f32.mrb[0].mxu0
        %v5049 = vadd.f32 0.0, %v5048
        %v5050 = vpop.f32.mrb[0].mxu0
        %5051 = vdwg.mxu0
        %v5052 = vadd.f32 %v4959, %v5049
        %vm5053 = vcmask 253952
        %5054 = vst.msk [vmem:[%s692] sm:$0x1] %vm5053, %v5052
        %s5055 = sand.u32 %s491, 1
        %s5056 = scalar_lea.sflag [#allocation4], %s5055
        %s5057 = sand.u32 %s491, 1
        %s5058 = scalar_lea.vmem [#allocation8], %s5057
        // Predicated region
        $region117: #{tpu_custom_call.1} parent=103 // pred_check
          %p5059 = pneg %p501
        $region118: #{tpu_custom_call.1} parent=103 // pred_check_branch
          %5061 = sbr.rel (%p5059) target = $region120
        $region119: #{tpu_custom_call.1} parent=103 // pred_region
          %s5063 = ssub.s32 16, 16
          %5064 = vsyncadd %s5056, %s5063
          %s5065 = smul.addr %s37, 16
          %s5066 = scalar_lea.hbm %s21, %s5065
          %s5068 = sshll.u32 %s5058, 4
          %s5069 = int_to_ptr.vmem [resolvable:$true] %s5068
          %5071 = dma.vmem_to_hbm [thread:$0]  %s5069, 16, %s5066, %s5056
        $region120: #{tpu_custom_call.1} parent=103 // pred_fallthru
          _
      $region104: #{tpu_custom_call.1} parent=5 // pred_fallthru
        _
      %p5072 = scmp.le.s32.totalorder 2, %s32
      // Predicated region
      $region121: #{tpu_custom_call.1} parent=5 // pred_check
        %p5073 = pneg %p5072
      $region122: #{tpu_custom_call.1} parent=5 // pred_check_branch
        %5075 = sbr.rel (%p5073) target = $region124
      $region123: #{tpu_custom_call.1} parent=5 // pred_region
        %s5076 = ssub.s32 %s32, 2
        // Predicated region
        $region125: #{tpu_custom_call.1} parent=123 // pred_check
          %p5077 = pneg %p507
        $region126: #{tpu_custom_call.1} parent=123 // pred_check_branch
          %5079 = sbr.rel (%p5077) target = $region128
        $region127: #{tpu_custom_call.1} parent=123 // pred_region
          %s5080 = sand.u32 %s492, 1
          %s5081 = scalar_lea.sflag [#allocation4], %s5080
          %s5082 = sand.u32 %s492, 1
          %s5083 = scalar_lea.vmem [#allocation8], %s5082
          %5084 = dma.done %s5081, 16
        $region128: #{tpu_custom_call.1} parent=123 // pred_fallthru
          _
      $region124: #{tpu_custom_call.1} parent=5 // pred_fallthru
        _
    $region6: #{tpu_custom_call.1} parent=1 // loop_footer
      %s36 = sadd.s32 1, %s32
    $region7: #{tpu_custom_call.1} parent=1 // loop_footer_branch
      %31 = sbr.rel target = $region3
    $region8: #{tpu_custom_call.1} parent=1 // loop_exit
      _
    %5085 = vsyncpa [#allocation3], 1
    %s5086 = scalar_lea.sflag [#allocation3], 1
    %5087 = vsyncpa %s5086, 1
    %5088 = vsyncpa [#allocation6], 1
    %5089 = vsyncpa [#allocation4], 1
    %s5090 = scalar_lea.sflag [#allocation4], 1
    %5091 = vsyncpa %s5090, 1

</llo_original>
